<compile_context>
chip_gen: v5e
topology: v5e:2x2
jax: 0.10.0
libtpu: 0.0.40
codegen_flags: <defaults>
</compile_context>

<pallas_src>
import functools

import jax
import jax.numpy as jnp
from jax.experimental import pallas as pl
from jax.experimental.pallas import tpu as pltpu

# ----------------------------- model constants -----------------------------
WORD_LEN         = 100
EMBED_SIZE       = 32
POS_LEN          = 16
POS_EMB_SIZE     = 8
ENT_LEN          = 8
ENT_EMB_SIZE     = 8
DIST_LEN         = 16
DIST_EMB_SIZE    = 8
MAX_TITLE_LENGTH = 8
HIDDEN_SIZE      = 32
TRG_VOCAB_SIZE   = 64

SENT_FEAT = EMBED_SIZE + POS_EMB_SIZE + ENT_EMB_SIZE          # 48
DEC_IN    = EMBED_SIZE + DIST_EMB_SIZE                        # 40


# -------------------- fully fused forward Pallas kernel ---------------------
def lemon_fused_kernel(tw_ref, tp_ref, te_ref, title_ref,
                       word_emb_ref, pos_emb_ref, ent_emb_ref, dist_emb_ref,
                       w_enc_w_ref, w_enc_p_ref, w_enc_e_ref, b_enc_ref,
                       w_xh_w_ref, w_xh_d_ref, w_hh_ref, b_h_ref,
                       w_out_ref, b_out_ref,
                       out_ref, hseq_ref, *, T, B_pad, SL):
    f32 = jnp.float32
    dot = functools.partial(jnp.dot, precision=jax.lax.Precision.HIGHEST,
                            preferred_element_type=f32)

    word_len = word_emb_ref.shape[0]
    pos_len  = pos_emb_ref.shape[0]
    ent_len  = ent_emb_ref.shape[0]
    dist_len = dist_emb_ref.shape[0]

    # ---- text embedding gathers + mean pooling (sent2vec stub), fused in-kernel ----
    # mean_p embed[id_p] == (counts @ embed) / SL, counts built with SL cheap VPU
    # compare+adds against a lane iota (2-D ops only, off the serial path).
    tw = tw_ref[...]
    tp = tp_ref[...]
    te = te_ref[...]
    iw = jax.lax.broadcasted_iota(jnp.int32, (B_pad, word_len), 1)
    ip = jax.lax.broadcasted_iota(jnp.int32, (B_pad, pos_len), 1)
    ie = jax.lax.broadcasted_iota(jnp.int32, (B_pad, ent_len), 1)
    cw = jnp.zeros((B_pad, word_len), f32)
    cp = jnp.zeros((B_pad, pos_len), f32)
    ce = jnp.zeros((B_pad, ent_len), f32)
    for p in range(SL):                       # small, fully unrolled
        cw = cw + (tw[:, p:p + 1] == iw).astype(f32)
        cp = cp + (tp[:, p:p + 1] == ip).astype(f32)
        ce = ce + (te[:, p:p + 1] == ie).astype(f32)
    inv = 1.0 / SL
    sv_w = dot(cw, word_emb_ref[...]) * inv                        # (B_pad, E)
    sv_p = dot(cp, pos_emb_ref[...]) * inv                         # (B_pad, Ep)
    sv_e = dot(ce, ent_emb_ref[...]) * inv                         # (B_pad, Ee)

    # ---- Encoder_: linear -> tanh (weights pre-split by feature group, so no
    #      lane-offset concat; mathematically == concat(sv) @ W_enc) ----
    h = jnp.tanh(dot(sv_w, w_enc_w_ref[...]) + dot(sv_p, w_enc_p_ref[...])
                 + dot(sv_e, w_enc_e_ref[...]) + b_enc_ref[...])   # state_x_ = encode_h

    # ---- decoder inputs for all T steps: title-word + distance embeddings ----
    N = T * B_pad
    t_ids = title_ref[...]                                         # (N, 1) int32, time-major
    oh_title = (t_ids == jax.lax.broadcasted_iota(jnp.int32, (N, word_len), 1)).astype(f32)
    title_emb = dot(oh_title, word_emb_ref[...])                   # (N, E)

    # dist id of row r is (T - 1 - r // B_pad); build the one-hot without integer
    # division: oh[r, d] = 1  <=>  (T-1-d)*B_pad <= r < (T-d)*B_pad
    r_iota = jax.lax.broadcasted_iota(jnp.int32, (N, dist_len), 0)
    d_iota = jax.lax.broadcasted_iota(jnp.int32, (N, dist_len), 1)
    lo = (T - 1 - d_iota) * B_pad
    oh_dist = ((r_iota >= lo) & (r_iota < lo + B_pad)).astype(f32)
    dist_emb = dot(oh_dist, dist_emb_ref[...])                     # (N, Ed)

    # hoisted input projection for all steps (split W_xh avoids a lane concat):
    xw_all = (dot(title_emb, w_xh_w_ref[...]) + dot(dist_emb, w_xh_d_ref[...])
              + b_h_ref[...])                                      # (N, H), time-major

    # ---- recurrence: only h @ W_hh on the serial path; B_pad = 8 rows per step
    #      so every slice / scratch store is a whole sublane-tile view ----
    w_hh = w_hh_ref[...]
    for t in range(T):                         # T = MAX_TITLE_LENGTH, fully unrolled
        h = jnp.tanh(xw_all[t * B_pad:(t + 1) * B_pad, :] + dot(h, w_hh))
        hseq_ref[t * B_pad:(t + 1) * B_pad, :] = h                 # aligned store

    # ---- single batched output projection, stored in its natural layout ----
    out_ref[...] = dot(hseq_ref[...], w_out_ref[...]) + b_out_ref[...]   # (N, V)


def run_lemon_fused(tw, tp, te, ti, params, *, T, B_pad, SL):
    V = params["w_out"].shape[1]
    H = params["w_hh"].shape[0]
    kernel = functools.partial(lemon_fused_kernel, T=T, B_pad=B_pad, SL=SL)
    # Single invocation (no grid): every operand is a whole-array VMEM block, so the
    # (8,128) tiling rule is satisfied by the "full array dims" case.  Total operand
    # + scratch footprint is tens of KiB — far under VMEM on v5e/v6e/v7x.
    return pl.pallas_call(
        kernel,
        out_shape=jax.ShapeDtypeStruct((T * B_pad, V), jnp.float32),
        scratch_shapes=[pltpu.VMEM((T * B_pad, H), jnp.float32)],
    )(
        tw, tp, te, ti,
        params["word_embed"], params["pos_embed"], params["ent_embed"], params["dist_embed"],
        params["w_enc_w"], params["w_enc_p"], params["w_enc_e"], params["b_enc"],
        params["w_xh_word"], params["w_xh_dist"], params["w_hh"], params["b_h"],
        params["w_out"], params["b_out"],
    )


# ------------------------------- parameters ---------------------------------
def init_params(key):
    ks = jax.random.split(key, 11)
    p = {}
    p["word_embed"] = jax.random.normal(ks[0], (WORD_LEN, EMBED_SIZE), jnp.float32) * 0.1
    p["pos_embed"]  = jax.random.normal(ks[1], (POS_LEN, POS_EMB_SIZE), jnp.float32) * 0.1
    p["ent_embed"]  = jax.random.normal(ks[2], (ENT_LEN, ENT_EMB_SIZE), jnp.float32) * 0.1
    p["dist_embed"] = jax.random.normal(ks[3], (DIST_LEN, DIST_EMB_SIZE), jnp.float32) * 0.1
    # Encoder_ linear weight, stored pre-split per feature group
    # (equivalent to one (SENT_FEAT, H) matrix applied to concat features).
    p["w_enc_w"] = jax.random.normal(ks[4], (EMBED_SIZE, HIDDEN_SIZE), jnp.float32) * 0.1
    p["w_enc_p"] = jax.random.normal(ks[5], (POS_EMB_SIZE, HIDDEN_SIZE), jnp.float32) * 0.1
    p["w_enc_e"] = jax.random.normal(ks[6], (ENT_EMB_SIZE, HIDDEN_SIZE), jnp.float32) * 0.1
    p["b_enc"]   = jnp.zeros((1, HIDDEN_SIZE), jnp.float32)
    # Decoder_ (tanh RNN cell); input weight pre-split into word / dist parts
    # (equivalent to one (DEC_IN, H) matrix applied to concat(input_embed)).
    p["w_xh_word"] = jax.random.normal(ks[7], (EMBED_SIZE, HIDDEN_SIZE), jnp.float32) * 0.1
    p["w_xh_dist"] = jax.random.normal(ks[8], (DIST_EMB_SIZE, HIDDEN_SIZE), jnp.float32) * 0.1
    p["w_hh"]  = jax.random.normal(ks[9], (HIDDEN_SIZE, HIDDEN_SIZE), jnp.float32) * 0.1
    p["b_h"]   = jnp.zeros((1, HIDDEN_SIZE), jnp.float32)
    p["w_out"] = jax.random.normal(ks[10], (HIDDEN_SIZE, TRG_VOCAB_SIZE), jnp.float32) * 0.1
    p["b_out"] = jnp.zeros((1, TRG_VOCAB_SIZE), jnp.float32)
    return p


# ------------------------------- forward pass -------------------------------
def lemon_forward(params, text_word, text_pos, text_ent, title_word):
    """
    text_word/text_pos/text_ent : (B, S, L) int32 ids
    title_word                  : (T, B)    int32 ids (time-major)
    returns                     : (B, T * TRG_VOCAB_SIZE) — decode()'s
                                  torch.cat along dim 1 of per-step outputs.
    """
    B, S, L = text_word.shape
    T = title_word.shape[0]
    assert T == MAX_TITLE_LENGTH, "decode() runs exactly MAX_TITLE_LENGTH steps"
    SL = S * L
    B_pad = max(8, ((B + 7) // 8) * 8)        # pad batch to a full sublane tile

    def pad_b(a):                             # (B, X) -> (B_pad, X), zero id padding
        return jnp.pad(a, ((0, B_pad - B), (0, 0)))

    tw = pad_b(text_word.reshape(B, SL).astype(jnp.int32))
    tp = pad_b(text_pos.reshape(B, SL).astype(jnp.int32))
    te = pad_b(text_ent.reshape(B, SL).astype(jnp.int32))
    # title ids, time-major flat: row t*B_pad + b
    ti = jnp.pad(title_word.astype(jnp.int32),
                 ((0, 0), (0, B_pad - B))).reshape(T * B_pad, 1)

    # TODO(synk): original forward calls interactive `input(encode_h.size())`; skipped.
    V = params["w_out"].shape[1]
    out_flat = run_lemon_fused(tw, tp, te, ti, params, T=T, B_pad=B_pad, SL=SL)  # (T*B_pad, V)

    # torch.cat(per-step outputs, dim=1): out[b, t*V + v] == output_t[b, v]
    out = out_flat.reshape(T, B_pad, V)[:, :B, :]
    return jnp.transpose(out, (1, 0, 2)).reshape(B, T * V)


lemon_forward_jit = jax.jit(lemon_forward)


# --------------------------- pure-JAX reference ------------------------------
def lemon_reference(params, text_word, text_pos, text_ent, title_word):
    dot = functools.partial(jnp.dot, precision=jax.lax.Precision.HIGHEST,
                            preferred_element_type=jnp.float32)
    we = jnp.take(params["word_embed"], text_word, axis=0)          # (B,S,L,Ew)
    pe = jnp.take(params["pos_embed"],  text_pos,  axis=0)
    ee = jnp.take(params["ent_embed"],  text_ent,  axis=0)
    sv = jnp.concatenate([we.mean((1, 2)), pe.mean((1, 2)), ee.mean((1, 2))], axis=-1)
    w_enc = jnp.concatenate([params["w_enc_w"], params["w_enc_p"], params["w_enc_e"]], axis=0)
    h = jnp.tanh(dot(sv, w_enc) + params["b_enc"])                  # encode_h

    T, B = title_word.shape
    title_emb = jnp.take(params["word_embed"], title_word, axis=0)  # (T,B,E)
    w_xh = jnp.concatenate([params["w_xh_word"], params["w_xh_dist"]], axis=0)
    outs = []
    for t in range(T):
        dist = params["dist_embed"][MAX_TITLE_LENGTH - (t + 1)]     # (Ed,)
        x = jnp.concatenate([title_emb[t],
                             jnp.broadcast_to(dist, (B, dist.shape[0]))], axis=-1)
        h = jnp.tanh(dot(x, w_xh) + dot(h, params["w_hh"]) + params["b_h"])
        outs.append(dot(h, params["w_out"]) + params["b_out"])
    return jnp.concatenate(outs, axis=1)                            # (B, T*V)


# ----------------------------------- main ------------------------------------
if __name__ == "__main__":
    B, S, L = 2, 3, 5
    key = jax.random.PRNGKey(0)
    k1, k2, k3, k4 = jax.random.split(key, 4)

    text_word  = jax.random.randint(k1, (B, S, L), 0, WORD_LEN, dtype=jnp.int32)
    text_pos   = jax.random.randint(k2, (B, S, L), 0, POS_LEN,  dtype=jnp.int32)
    text_ent   = jax.random.randint(k3, (B, S, L), 0, ENT_LEN,  dtype=jnp.int32)
    title_word = jax.random.randint(k4, (MAX_TITLE_LENGTH, B), 0, WORD_LEN, dtype=jnp.int32)

    params = init_params(jax.random.PRNGKey(42))

    out = lemon_forward_jit(params, text_word, text_pos, text_ent, title_word)
    out = jax.block_until_ready(out)
    assert out.shape == (B, MAX_TITLE_LENGTH * TRG_VOCAB_SIZE)
    assert bool(jnp.all(jnp.isfinite(out)))

    ref = lemon_reference(params, text_word, text_pos, text_ent, title_word)
    max_err = float(jnp.max(jnp.abs(out - ref)))
    assert max_err < 2e-3, f"kernel/reference mismatch: max abs err {max_err}"

    print("KERNEL_OK")
</pallas_src>

<mosaic_0001>
module attributes {stable_mosaic.version = 11 : i64} {
  func.func @lemon_fused_kernel(%arg0: memref<8x15xi32, #tpu.memory_space<vmem>>, %arg1: memref<8x15xi32, #tpu.memory_space<vmem>>, %arg2: memref<8x15xi32, #tpu.memory_space<vmem>>, %arg3: memref<64x1xi32, #tpu.memory_space<vmem>>, %arg4: memref<100x32xf32, #tpu.memory_space<vmem>>, %arg5: memref<16x8xf32, #tpu.memory_space<vmem>>, %arg6: memref<8x8xf32, #tpu.memory_space<vmem>>, %arg7: memref<16x8xf32, #tpu.memory_space<vmem>>, %arg8: memref<32x32xf32, #tpu.memory_space<vmem>>, %arg9: memref<8x32xf32, #tpu.memory_space<vmem>>, %arg10: memref<8x32xf32, #tpu.memory_space<vmem>>, %arg11: memref<1x32xf32, #tpu.memory_space<vmem>>, %arg12: memref<32x32xf32, #tpu.memory_space<vmem>>, %arg13: memref<8x32xf32, #tpu.memory_space<vmem>>, %arg14: memref<32x32xf32, #tpu.memory_space<vmem>>, %arg15: memref<1x32xf32, #tpu.memory_space<vmem>>, %arg16: memref<32x64xf32, #tpu.memory_space<vmem>>, %arg17: memref<1x64xf32, #tpu.memory_space<vmem>>, %arg18: memref<64x64xf32, #tpu.memory_space<vmem>>, %arg19: memref<64x32xf32, #tpu.memory_space<vmem>>) attributes {dimension_semantics = [], scalar_prefetch = 0 : i64, scratch_operands = 1 : i64, tpu.core_type = #tpu.core_type<tc>} {
    %c0 = arith.constant 0 : index
    %c0_0 = arith.constant 0 : index
    %0 = vector.load %arg0[%c0, %c0_0] : memref<8x15xi32, #tpu.memory_space<vmem>>, vector<8x15xi32>
    %c0_1 = arith.constant 0 : index
    %c0_2 = arith.constant 0 : index
    %1 = vector.load %arg1[%c0_1, %c0_2] : memref<8x15xi32, #tpu.memory_space<vmem>>, vector<8x15xi32>
    %c0_3 = arith.constant 0 : index
    %c0_4 = arith.constant 0 : index
    %2 = vector.load %arg2[%c0_3, %c0_4] : memref<8x15xi32, #tpu.memory_space<vmem>>, vector<8x15xi32>
    %3 = tpu.iota {dimensions = array<i32: 1>} : vector<8x100xi32>
    %4 = tpu.iota {dimensions = array<i32: 1>} : vector<8x16xi32>
    %5 = tpu.iota {dimensions = array<i32: 1>} : vector<8x8xi32>
    %cst = arith.constant 0.000000e+00 : f32
    %6 = vector.broadcast %cst : f32 to vector<8x100xf32>
    %cst_5 = arith.constant 0.000000e+00 : f32
    %7 = vector.broadcast %cst_5 : f32 to vector<8x16xf32>
    %cst_6 = arith.constant 0.000000e+00 : f32
    %8 = vector.broadcast %cst_6 : f32 to vector<8x8xf32>
    %9 = vector.extract_strided_slice %0 {offsets = [0, 0], sizes = [8, 1], strides = [1, 1]} : vector<8x15xi32> to vector<8x1xi32>
    %10 = vector.broadcast %9 : vector<8x1xi32> to vector<8x100xi32>
    %11 = arith.cmpi eq, %10, %3 : vector<8x100xi32>
    %12 = arith.extui %11 : vector<8x100xi1> to vector<8x100xi32>
    %13 = arith.sitofp %12 : vector<8x100xi32> to vector<8x100xf32>
    %14 = arith.addf %6, %13 : vector<8x100xf32>
    %15 = vector.extract_strided_slice %1 {offsets = [0, 0], sizes = [8, 1], strides = [1, 1]} : vector<8x15xi32> to vector<8x1xi32>
    %16 = vector.broadcast %15 : vector<8x1xi32> to vector<8x16xi32>
    %17 = arith.cmpi eq, %16, %4 : vector<8x16xi32>
    %18 = arith.extui %17 : vector<8x16xi1> to vector<8x16xi32>
    %19 = arith.sitofp %18 : vector<8x16xi32> to vector<8x16xf32>
    %20 = arith.addf %7, %19 : vector<8x16xf32>
    %21 = vector.extract_strided_slice %2 {offsets = [0, 0], sizes = [8, 1], strides = [1, 1]} : vector<8x15xi32> to vector<8x1xi32>
    %22 = vector.broadcast %21 : vector<8x1xi32> to vector<8x8xi32>
    %23 = arith.cmpi eq, %22, %5 : vector<8x8xi32>
    %24 = arith.extui %23 : vector<8x8xi1> to vector<8x8xi32>
    %25 = arith.sitofp %24 : vector<8x8xi32> to vector<8x8xf32>
    %26 = arith.addf %8, %25 : vector<8x8xf32>
    %27 = vector.extract_strided_slice %0 {offsets = [0, 1], sizes = [8, 1], strides = [1, 1]} : vector<8x15xi32> to vector<8x1xi32>
    %28 = vector.broadcast %27 : vector<8x1xi32> to vector<8x100xi32>
    %29 = arith.cmpi eq, %28, %3 : vector<8x100xi32>
    %30 = arith.extui %29 : vector<8x100xi1> to vector<8x100xi32>
    %31 = arith.sitofp %30 : vector<8x100xi32> to vector<8x100xf32>
    %32 = arith.addf %14, %31 : vector<8x100xf32>
    %33 = vector.extract_strided_slice %1 {offsets = [0, 1], sizes = [8, 1], strides = [1, 1]} : vector<8x15xi32> to vector<8x1xi32>
    %34 = vector.broadcast %33 : vector<8x1xi32> to vector<8x16xi32>
    %35 = arith.cmpi eq, %34, %4 : vector<8x16xi32>
    %36 = arith.extui %35 : vector<8x16xi1> to vector<8x16xi32>
    %37 = arith.sitofp %36 : vector<8x16xi32> to vector<8x16xf32>
    %38 = arith.addf %20, %37 : vector<8x16xf32>
    %39 = vector.extract_strided_slice %2 {offsets = [0, 1], sizes = [8, 1], strides = [1, 1]} : vector<8x15xi32> to vector<8x1xi32>
    %40 = vector.broadcast %39 : vector<8x1xi32> to vector<8x8xi32>
    %41 = arith.cmpi eq, %40, %5 : vector<8x8xi32>
    %42 = arith.extui %41 : vector<8x8xi1> to vector<8x8xi32>
    %43 = arith.sitofp %42 : vector<8x8xi32> to vector<8x8xf32>
    %44 = arith.addf %26, %43 : vector<8x8xf32>
    %45 = vector.extract_strided_slice %0 {offsets = [0, 2], sizes = [8, 1], strides = [1, 1]} : vector<8x15xi32> to vector<8x1xi32>
    %46 = vector.broadcast %45 : vector<8x1xi32> to vector<8x100xi32>
    %47 = arith.cmpi eq, %46, %3 : vector<8x100xi32>
    %48 = arith.extui %47 : vector<8x100xi1> to vector<8x100xi32>
    %49 = arith.sitofp %48 : vector<8x100xi32> to vector<8x100xf32>
    %50 = arith.addf %32, %49 : vector<8x100xf32>
    %51 = vector.extract_strided_slice %1 {offsets = [0, 2], sizes = [8, 1], strides = [1, 1]} : vector<8x15xi32> to vector<8x1xi32>
    %52 = vector.broadcast %51 : vector<8x1xi32> to vector<8x16xi32>
    %53 = arith.cmpi eq, %52, %4 : vector<8x16xi32>
    %54 = arith.extui %53 : vector<8x16xi1> to vector<8x16xi32>
    %55 = arith.sitofp %54 : vector<8x16xi32> to vector<8x16xf32>
    %56 = arith.addf %38, %55 : vector<8x16xf32>
    %57 = vector.extract_strided_slice %2 {offsets = [0, 2], sizes = [8, 1], strides = [1, 1]} : vector<8x15xi32> to vector<8x1xi32>
    %58 = vector.broadcast %57 : vector<8x1xi32> to vector<8x8xi32>
    %59 = arith.cmpi eq, %58, %5 : vector<8x8xi32>
    %60 = arith.extui %59 : vector<8x8xi1> to vector<8x8xi32>
    %61 = arith.sitofp %60 : vector<8x8xi32> to vector<8x8xf32>
    %62 = arith.addf %44, %61 : vector<8x8xf32>
    %63 = vector.extract_strided_slice %0 {offsets = [0, 3], sizes = [8, 1], strides = [1, 1]} : vector<8x15xi32> to vector<8x1xi32>
    %64 = vector.broadcast %63 : vector<8x1xi32> to vector<8x100xi32>
    %65 = arith.cmpi eq, %64, %3 : vector<8x100xi32>
    %66 = arith.extui %65 : vector<8x100xi1> to vector<8x100xi32>
    %67 = arith.sitofp %66 : vector<8x100xi32> to vector<8x100xf32>
    %68 = arith.addf %50, %67 : vector<8x100xf32>
    %69 = vector.extract_strided_slice %1 {offsets = [0, 3], sizes = [8, 1], strides = [1, 1]} : vector<8x15xi32> to vector<8x1xi32>
    %70 = vector.broadcast %69 : vector<8x1xi32> to vector<8x16xi32>
    %71 = arith.cmpi eq, %70, %4 : vector<8x16xi32>
    %72 = arith.extui %71 : vector<8x16xi1> to vector<8x16xi32>
    %73 = arith.sitofp %72 : vector<8x16xi32> to vector<8x16xf32>
    %74 = arith.addf %56, %73 : vector<8x16xf32>
    %75 = vector.extract_strided_slice %2 {offsets = [0, 3], sizes = [8, 1], strides = [1, 1]} : vector<8x15xi32> to vector<8x1xi32>
    %76 = vector.broadcast %75 : vector<8x1xi32> to vector<8x8xi32>
    %77 = arith.cmpi eq, %76, %5 : vector<8x8xi32>
    %78 = arith.extui %77 : vector<8x8xi1> to vector<8x8xi32>
    %79 = arith.sitofp %78 : vector<8x8xi32> to vector<8x8xf32>
    %80 = arith.addf %62, %79 : vector<8x8xf32>
    %81 = vector.extract_strided_slice %0 {offsets = [0, 4], sizes = [8, 1], strides = [1, 1]} : vector<8x15xi32> to vector<8x1xi32>
    %82 = vector.broadcast %81 : vector<8x1xi32> to vector<8x100xi32>
    %83 = arith.cmpi eq, %82, %3 : vector<8x100xi32>
    %84 = arith.extui %83 : vector<8x100xi1> to vector<8x100xi32>
    %85 = arith.sitofp %84 : vector<8x100xi32> to vector<8x100xf32>
    %86 = arith.addf %68, %85 : vector<8x100xf32>
    %87 = vector.extract_strided_slice %1 {offsets = [0, 4], sizes = [8, 1], strides = [1, 1]} : vector<8x15xi32> to vector<8x1xi32>
    %88 = vector.broadcast %87 : vector<8x1xi32> to vector<8x16xi32>
    %89 = arith.cmpi eq, %88, %4 : vector<8x16xi32>
    %90 = arith.extui %89 : vector<8x16xi1> to vector<8x16xi32>
    %91 = arith.sitofp %90 : vector<8x16xi32> to vector<8x16xf32>
    %92 = arith.addf %74, %91 : vector<8x16xf32>
    %93 = vector.extract_strided_slice %2 {offsets = [0, 4], sizes = [8, 1], strides = [1, 1]} : vector<8x15xi32> to vector<8x1xi32>
    %94 = vector.broadcast %93 : vector<8x1xi32> to vector<8x8xi32>
    %95 = arith.cmpi eq, %94, %5 : vector<8x8xi32>
    %96 = arith.extui %95 : vector<8x8xi1> to vector<8x8xi32>
    %97 = arith.sitofp %96 : vector<8x8xi32> to vector<8x8xf32>
    %98 = arith.addf %80, %97 : vector<8x8xf32>
    %99 = vector.extract_strided_slice %0 {offsets = [0, 5], sizes = [8, 1], strides = [1, 1]} : vector<8x15xi32> to vector<8x1xi32>
    %100 = vector.broadcast %99 : vector<8x1xi32> to vector<8x100xi32>
    %101 = arith.cmpi eq, %100, %3 : vector<8x100xi32>
    %102 = arith.extui %101 : vector<8x100xi1> to vector<8x100xi32>
    %103 = arith.sitofp %102 : vector<8x100xi32> to vector<8x100xf32>
    %104 = arith.addf %86, %103 : vector<8x100xf32>
    %105 = vector.extract_strided_slice %1 {offsets = [0, 5], sizes = [8, 1], strides = [1, 1]} : vector<8x15xi32> to vector<8x1xi32>
    %106 = vector.broadcast %105 : vector<8x1xi32> to vector<8x16xi32>
    %107 = arith.cmpi eq, %106, %4 : vector<8x16xi32>
    %108 = arith.extui %107 : vector<8x16xi1> to vector<8x16xi32>
    %109 = arith.sitofp %108 : vector<8x16xi32> to vector<8x16xf32>
    %110 = arith.addf %92, %109 : vector<8x16xf32>
    %111 = vector.extract_strided_slice %2 {offsets = [0, 5], sizes = [8, 1], strides = [1, 1]} : vector<8x15xi32> to vector<8x1xi32>
    %112 = vector.broadcast %111 : vector<8x1xi32> to vector<8x8xi32>
    %113 = arith.cmpi eq, %112, %5 : vector<8x8xi32>
    %114 = arith.extui %113 : vector<8x8xi1> to vector<8x8xi32>
    %115 = arith.sitofp %114 : vector<8x8xi32> to vector<8x8xf32>
    %116 = arith.addf %98, %115 : vector<8x8xf32>
    %117 = vector.extract_strided_slice %0 {offsets = [0, 6], sizes = [8, 1], strides = [1, 1]} : vector<8x15xi32> to vector<8x1xi32>
    %118 = vector.broadcast %117 : vector<8x1xi32> to vector<8x100xi32>
    %119 = arith.cmpi eq, %118, %3 : vector<8x100xi32>
    %120 = arith.extui %119 : vector<8x100xi1> to vector<8x100xi32>
    %121 = arith.sitofp %120 : vector<8x100xi32> to vector<8x100xf32>
    %122 = arith.addf %104, %121 : vector<8x100xf32>
    %123 = vector.extract_strided_slice %1 {offsets = [0, 6], sizes = [8, 1], strides = [1, 1]} : vector<8x15xi32> to vector<8x1xi32>
    %124 = vector.broadcast %123 : vector<8x1xi32> to vector<8x16xi32>
    %125 = arith.cmpi eq, %124, %4 : vector<8x16xi32>
    %126 = arith.extui %125 : vector<8x16xi1> to vector<8x16xi32>
    %127 = arith.sitofp %126 : vector<8x16xi32> to vector<8x16xf32>
    %128 = arith.addf %110, %127 : vector<8x16xf32>
    %129 = vector.extract_strided_slice %2 {offsets = [0, 6], sizes = [8, 1], strides = [1, 1]} : vector<8x15xi32> to vector<8x1xi32>
    %130 = vector.broadcast %129 : vector<8x1xi32> to vector<8x8xi32>
    %131 = arith.cmpi eq, %130, %5 : vector<8x8xi32>
    %132 = arith.extui %131 : vector<8x8xi1> to vector<8x8xi32>
    %133 = arith.sitofp %132 : vector<8x8xi32> to vector<8x8xf32>
    %134 = arith.addf %116, %133 : vector<8x8xf32>
    %135 = vector.extract_strided_slice %0 {offsets = [0, 7], sizes = [8, 1], strides = [1, 1]} : vector<8x15xi32> to vector<8x1xi32>
    %136 = vector.broadcast %135 : vector<8x1xi32> to vector<8x100xi32>
    %137 = arith.cmpi eq, %136, %3 : vector<8x100xi32>
    %138 = arith.extui %137 : vector<8x100xi1> to vector<8x100xi32>
    %139 = arith.sitofp %138 : vector<8x100xi32> to vector<8x100xf32>
    %140 = arith.addf %122, %139 : vector<8x100xf32>
    %141 = vector.extract_strided_slice %1 {offsets = [0, 7], sizes = [8, 1], strides = [1, 1]} : vector<8x15xi32> to vector<8x1xi32>
    %142 = vector.broadcast %141 : vector<8x1xi32> to vector<8x16xi32>
    %143 = arith.cmpi eq, %142, %4 : vector<8x16xi32>
    %144 = arith.extui %143 : vector<8x16xi1> to vector<8x16xi32>
    %145 = arith.sitofp %144 : vector<8x16xi32> to vector<8x16xf32>
    %146 = arith.addf %128, %145 : vector<8x16xf32>
    %147 = vector.extract_strided_slice %2 {offsets = [0, 7], sizes = [8, 1], strides = [1, 1]} : vector<8x15xi32> to vector<8x1xi32>
    %148 = vector.broadcast %147 : vector<8x1xi32> to vector<8x8xi32>
    %149 = arith.cmpi eq, %148, %5 : vector<8x8xi32>
    %150 = arith.extui %149 : vector<8x8xi1> to vector<8x8xi32>
    %151 = arith.sitofp %150 : vector<8x8xi32> to vector<8x8xf32>
    %152 = arith.addf %134, %151 : vector<8x8xf32>
    %153 = vector.extract_strided_slice %0 {offsets = [0, 8], sizes = [8, 1], strides = [1, 1]} : vector<8x15xi32> to vector<8x1xi32>
    %154 = vector.broadcast %153 : vector<8x1xi32> to vector<8x100xi32>
    %155 = arith.cmpi eq, %154, %3 : vector<8x100xi32>
    %156 = arith.extui %155 : vector<8x100xi1> to vector<8x100xi32>
    %157 = arith.sitofp %156 : vector<8x100xi32> to vector<8x100xf32>
    %158 = arith.addf %140, %157 : vector<8x100xf32>
    %159 = vector.extract_strided_slice %1 {offsets = [0, 8], sizes = [8, 1], strides = [1, 1]} : vector<8x15xi32> to vector<8x1xi32>
    %160 = vector.broadcast %159 : vector<8x1xi32> to vector<8x16xi32>
    %161 = arith.cmpi eq, %160, %4 : vector<8x16xi32>
    %162 = arith.extui %161 : vector<8x16xi1> to vector<8x16xi32>
    %163 = arith.sitofp %162 : vector<8x16xi32> to vector<8x16xf32>
    %164 = arith.addf %146, %163 : vector<8x16xf32>
    %165 = vector.extract_strided_slice %2 {offsets = [0, 8], sizes = [8, 1], strides = [1, 1]} : vector<8x15xi32> to vector<8x1xi32>
    %166 = vector.broadcast %165 : vector<8x1xi32> to vector<8x8xi32>
    %167 = arith.cmpi eq, %166, %5 : vector<8x8xi32>
    %168 = arith.extui %167 : vector<8x8xi1> to vector<8x8xi32>
    %169 = arith.sitofp %168 : vector<8x8xi32> to vector<8x8xf32>
    %170 = arith.addf %152, %169 : vector<8x8xf32>
    %171 = vector.extract_strided_slice %0 {offsets = [0, 9], sizes = [8, 1], strides = [1, 1]} : vector<8x15xi32> to vector<8x1xi32>
    %172 = vector.broadcast %171 : vector<8x1xi32> to vector<8x100xi32>
    %173 = arith.cmpi eq, %172, %3 : vector<8x100xi32>
    %174 = arith.extui %173 : vector<8x100xi1> to vector<8x100xi32>
    %175 = arith.sitofp %174 : vector<8x100xi32> to vector<8x100xf32>
    %176 = arith.addf %158, %175 : vector<8x100xf32>
    %177 = vector.extract_strided_slice %1 {offsets = [0, 9], sizes = [8, 1], strides = [1, 1]} : vector<8x15xi32> to vector<8x1xi32>
    %178 = vector.broadcast %177 : vector<8x1xi32> to vector<8x16xi32>
    %179 = arith.cmpi eq, %178, %4 : vector<8x16xi32>
    %180 = arith.extui %179 : vector<8x16xi1> to vector<8x16xi32>
    %181 = arith.sitofp %180 : vector<8x16xi32> to vector<8x16xf32>
    %182 = arith.addf %164, %181 : vector<8x16xf32>
    %183 = vector.extract_strided_slice %2 {offsets = [0, 9], sizes = [8, 1], strides = [1, 1]} : vector<8x15xi32> to vector<8x1xi32>
    %184 = vector.broadcast %183 : vector<8x1xi32> to vector<8x8xi32>
    %185 = arith.cmpi eq, %184, %5 : vector<8x8xi32>
    %186 = arith.extui %185 : vector<8x8xi1> to vector<8x8xi32>
    %187 = arith.sitofp %186 : vector<8x8xi32> to vector<8x8xf32>
    %188 = arith.addf %170, %187 : vector<8x8xf32>
    %189 = vector.extract_strided_slice %0 {offsets = [0, 10], sizes = [8, 1], strides = [1, 1]} : vector<8x15xi32> to vector<8x1xi32>
    %190 = vector.broadcast %189 : vector<8x1xi32> to vector<8x100xi32>
    %191 = arith.cmpi eq, %190, %3 : vector<8x100xi32>
    %192 = arith.extui %191 : vector<8x100xi1> to vector<8x100xi32>
    %193 = arith.sitofp %192 : vector<8x100xi32> to vector<8x100xf32>
    %194 = arith.addf %176, %193 : vector<8x100xf32>
    %195 = vector.extract_strided_slice %1 {offsets = [0, 10], sizes = [8, 1], strides = [1, 1]} : vector<8x15xi32> to vector<8x1xi32>
    %196 = vector.broadcast %195 : vector<8x1xi32> to vector<8x16xi32>
    %197 = arith.cmpi eq, %196, %4 : vector<8x16xi32>
    %198 = arith.extui %197 : vector<8x16xi1> to vector<8x16xi32>
    %199 = arith.sitofp %198 : vector<8x16xi32> to vector<8x16xf32>
    %200 = arith.addf %182, %199 : vector<8x16xf32>
    %201 = vector.extract_strided_slice %2 {offsets = [0, 10], sizes = [8, 1], strides = [1, 1]} : vector<8x15xi32> to vector<8x1xi32>
    %202 = vector.broadcast %201 : vector<8x1xi32> to vector<8x8xi32>
    %203 = arith.cmpi eq, %202, %5 : vector<8x8xi32>
    %204 = arith.extui %203 : vector<8x8xi1> to vector<8x8xi32>
    %205 = arith.sitofp %204 : vector<8x8xi32> to vector<8x8xf32>
    %206 = arith.addf %188, %205 : vector<8x8xf32>
    %207 = vector.extract_strided_slice %0 {offsets = [0, 11], sizes = [8, 1], strides = [1, 1]} : vector<8x15xi32> to vector<8x1xi32>
    %208 = vector.broadcast %207 : vector<8x1xi32> to vector<8x100xi32>
    %209 = arith.cmpi eq, %208, %3 : vector<8x100xi32>
    %210 = arith.extui %209 : vector<8x100xi1> to vector<8x100xi32>
    %211 = arith.sitofp %210 : vector<8x100xi32> to vector<8x100xf32>
    %212 = arith.addf %194, %211 : vector<8x100xf32>
    %213 = vector.extract_strided_slice %1 {offsets = [0, 11], sizes = [8, 1], strides = [1, 1]} : vector<8x15xi32> to vector<8x1xi32>
    %214 = vector.broadcast %213 : vector<8x1xi32> to vector<8x16xi32>
    %215 = arith.cmpi eq, %214, %4 : vector<8x16xi32>
    %216 = arith.extui %215 : vector<8x16xi1> to vector<8x16xi32>
    %217 = arith.sitofp %216 : vector<8x16xi32> to vector<8x16xf32>
    %218 = arith.addf %200, %217 : vector<8x16xf32>
    %219 = vector.extract_strided_slice %2 {offsets = [0, 11], sizes = [8, 1], strides = [1, 1]} : vector<8x15xi32> to vector<8x1xi32>
    %220 = vector.broadcast %219 : vector<8x1xi32> to vector<8x8xi32>
    %221 = arith.cmpi eq, %220, %5 : vector<8x8xi32>
    %222 = arith.extui %221 : vector<8x8xi1> to vector<8x8xi32>
    %223 = arith.sitofp %222 : vector<8x8xi32> to vector<8x8xf32>
    %224 = arith.addf %206, %223 : vector<8x8xf32>
    %225 = vector.extract_strided_slice %0 {offsets = [0, 12], sizes = [8, 1], strides = [1, 1]} : vector<8x15xi32> to vector<8x1xi32>
    %226 = vector.broadcast %225 : vector<8x1xi32> to vector<8x100xi32>
    %227 = arith.cmpi eq, %226, %3 : vector<8x100xi32>
    %228 = arith.extui %227 : vector<8x100xi1> to vector<8x100xi32>
    %229 = arith.sitofp %228 : vector<8x100xi32> to vector<8x100xf32>
    %230 = arith.addf %212, %229 : vector<8x100xf32>
    %231 = vector.extract_strided_slice %1 {offsets = [0, 12], sizes = [8, 1], strides = [1, 1]} : vector<8x15xi32> to vector<8x1xi32>
    %232 = vector.broadcast %231 : vector<8x1xi32> to vector<8x16xi32>
    %233 = arith.cmpi eq, %232, %4 : vector<8x16xi32>
    %234 = arith.extui %233 : vector<8x16xi1> to vector<8x16xi32>
    %235 = arith.sitofp %234 : vector<8x16xi32> to vector<8x16xf32>
    %236 = arith.addf %218, %235 : vector<8x16xf32>
    %237 = vector.extract_strided_slice %2 {offsets = [0, 12], sizes = [8, 1], strides = [1, 1]} : vector<8x15xi32> to vector<8x1xi32>
    %238 = vector.broadcast %237 : vector<8x1xi32> to vector<8x8xi32>
    %239 = arith.cmpi eq, %238, %5 : vector<8x8xi32>
    %240 = arith.extui %239 : vector<8x8xi1> to vector<8x8xi32>
    %241 = arith.sitofp %240 : vector<8x8xi32> to vector<8x8xf32>
    %242 = arith.addf %224, %241 : vector<8x8xf32>
    %243 = vector.extract_strided_slice %0 {offsets = [0, 13], sizes = [8, 1], strides = [1, 1]} : vector<8x15xi32> to vector<8x1xi32>
    %244 = vector.broadcast %243 : vector<8x1xi32> to vector<8x100xi32>
    %245 = arith.cmpi eq, %244, %3 : vector<8x100xi32>
    %246 = arith.extui %245 : vector<8x100xi1> to vector<8x100xi32>
    %247 = arith.sitofp %246 : vector<8x100xi32> to vector<8x100xf32>
    %248 = arith.addf %230, %247 : vector<8x100xf32>
    %249 = vector.extract_strided_slice %1 {offsets = [0, 13], sizes = [8, 1], strides = [1, 1]} : vector<8x15xi32> to vector<8x1xi32>
    %250 = vector.broadcast %249 : vector<8x1xi32> to vector<8x16xi32>
    %251 = arith.cmpi eq, %250, %4 : vector<8x16xi32>
    %252 = arith.extui %251 : vector<8x16xi1> to vector<8x16xi32>
    %253 = arith.sitofp %252 : vector<8x16xi32> to vector<8x16xf32>
    %254 = arith.addf %236, %253 : vector<8x16xf32>
    %255 = vector.extract_strided_slice %2 {offsets = [0, 13], sizes = [8, 1], strides = [1, 1]} : vector<8x15xi32> to vector<8x1xi32>
    %256 = vector.broadcast %255 : vector<8x1xi32> to vector<8x8xi32>
    %257 = arith.cmpi eq, %256, %5 : vector<8x8xi32>
    %258 = arith.extui %257 : vector<8x8xi1> to vector<8x8xi32>
    %259 = arith.sitofp %258 : vector<8x8xi32> to vector<8x8xf32>
    %260 = arith.addf %242, %259 : vector<8x8xf32>
    %261 = vector.extract_strided_slice %0 {offsets = [0, 14], sizes = [8, 1], strides = [1, 1]} : vector<8x15xi32> to vector<8x1xi32>
    %262 = vector.broadcast %261 : vector<8x1xi32> to vector<8x100xi32>
    %263 = arith.cmpi eq, %262, %3 : vector<8x100xi32>
    %264 = arith.extui %263 : vector<8x100xi1> to vector<8x100xi32>
    %265 = arith.sitofp %264 : vector<8x100xi32> to vector<8x100xf32>
    %266 = arith.addf %248, %265 : vector<8x100xf32>
    %267 = vector.extract_strided_slice %1 {offsets = [0, 14], sizes = [8, 1], strides = [1, 1]} : vector<8x15xi32> to vector<8x1xi32>
    %268 = vector.broadcast %267 : vector<8x1xi32> to vector<8x16xi32>
    %269 = arith.cmpi eq, %268, %4 : vector<8x16xi32>
    %270 = arith.extui %269 : vector<8x16xi1> to vector<8x16xi32>
    %271 = arith.sitofp %270 : vector<8x16xi32> to vector<8x16xf32>
    %272 = arith.addf %254, %271 : vector<8x16xf32>
    %273 = vector.extract_strided_slice %2 {offsets = [0, 14], sizes = [8, 1], strides = [1, 1]} : vector<8x15xi32> to vector<8x1xi32>
    %274 = vector.broadcast %273 : vector<8x1xi32> to vector<8x8xi32>
    %275 = arith.cmpi eq, %274, %5 : vector<8x8xi32>
    %276 = arith.extui %275 : vector<8x8xi1> to vector<8x8xi32>
    %277 = arith.sitofp %276 : vector<8x8xi32> to vector<8x8xf32>
    %278 = arith.addf %260, %277 : vector<8x8xf32>
    %c0_7 = arith.constant 0 : index
    %c0_8 = arith.constant 0 : index
    %279 = vector.load %arg4[%c0_7, %c0_8] : memref<100x32xf32, #tpu.memory_space<vmem>>, vector<100x32xf32>
    %cst_9 = arith.constant dense<0.000000e+00> : vector<8x32xf32>
    %280 = tpu.matmul %266, %279, %cst_9 {dimension_numbers = #tpu.dot_dimension_numbers<[1], [0], [0], [1], [0, 0, 1, 1], [], []>, precision = #tpu.contract_precision<fp32>} : vector<8x100xf32>, vector<100x32xf32>, vector<8x32xf32> -> vector<8x32xf32>
    %cst_10 = arith.constant 0.0666666701 : f32
    %281 = vector.broadcast %cst_10 : f32 to vector<8x32xf32>
    %282 = arith.mulf %280, %281 : vector<8x32xf32>
    %c0_11 = arith.constant 0 : index
    %c0_12 = arith.constant 0 : index
    %283 = vector.load %arg5[%c0_11, %c0_12] : memref<16x8xf32, #tpu.memory_space<vmem>>, vector<16x8xf32>
    %cst_13 = arith.constant dense<0.000000e+00> : vector<8x8xf32>
    %284 = tpu.matmul %272, %283, %cst_13 {dimension_numbers = #tpu.dot_dimension_numbers<[1], [0], [0], [1], [0, 0, 1, 1], [], []>, precision = #tpu.contract_precision<fp32>} : vector<8x16xf32>, vector<16x8xf32>, vector<8x8xf32> -> vector<8x8xf32>
    %cst_14 = arith.constant 0.0666666701 : f32
    %285 = vector.broadcast %cst_14 : f32 to vector<8x8xf32>
    %286 = arith.mulf %284, %285 : vector<8x8xf32>
    %c0_15 = arith.constant 0 : index
    %c0_16 = arith.constant 0 : index
    %287 = vector.load %arg6[%c0_15, %c0_16] : memref<8x8xf32, #tpu.memory_space<vmem>>, vector<8x8xf32>
    %cst_17 = arith.constant dense<0.000000e+00> : vector<8x8xf32>
    %288 = tpu.matmul %278, %287, %cst_17 {dimension_numbers = #tpu.dot_dimension_numbers<[1], [0], [0], [1], [0, 0, 1, 1], [], []>, precision = #tpu.contract_precision<fp32>} : vector<8x8xf32>, vector<8x8xf32>, vector<8x8xf32> -> vector<8x8xf32>
    %cst_18 = arith.constant 0.0666666701 : f32
    %289 = vector.broadcast %cst_18 : f32 to vector<8x8xf32>
    %290 = arith.mulf %288, %289 : vector<8x8xf32>
    %c0_19 = arith.constant 0 : index
    %c0_20 = arith.constant 0 : index
    %291 = vector.load %arg8[%c0_19, %c0_20] : memref<32x32xf32, #tpu.memory_space<vmem>>, vector<32x32xf32>
    %cst_21 = arith.constant dense<0.000000e+00> : vector<8x32xf32>
    %292 = tpu.matmul %282, %291, %cst_21 {dimension_numbers = #tpu.dot_dimension_numbers<[1], [0], [0], [1], [0, 0, 1, 1], [], []>, precision = #tpu.contract_precision<fp32>} : vector<8x32xf32>, vector<32x32xf32>, vector<8x32xf32> -> vector<8x32xf32>
    %c0_22 = arith.constant 0 : index
    %c0_23 = arith.constant 0 : index
    %293 = vector.load %arg9[%c0_22, %c0_23] : memref<8x32xf32, #tpu.memory_space<vmem>>, vector<8x32xf32>
    %cst_24 = arith.constant dense<0.000000e+00> : vector<8x32xf32>
    %294 = tpu.matmul %286, %293, %cst_24 {dimension_numbers = #tpu.dot_dimension_numbers<[1], [0], [0], [1], [0, 0, 1, 1], [], []>, precision = #tpu.contract_precision<fp32>} : vector<8x8xf32>, vector<8x32xf32>, vector<8x32xf32> -> vector<8x32xf32>
    %295 = arith.addf %292, %294 : vector<8x32xf32>
    %c0_25 = arith.constant 0 : index
    %c0_26 = arith.constant 0 : index
    %296 = vector.load %arg10[%c0_25, %c0_26] : memref<8x32xf32, #tpu.memory_space<vmem>>, vector<8x32xf32>
    %cst_27 = arith.constant dense<0.000000e+00> : vector<8x32xf32>
    %297 = tpu.matmul %290, %296, %cst_27 {dimension_numbers = #tpu.dot_dimension_numbers<[1], [0], [0], [1], [0, 0, 1, 1], [], []>, precision = #tpu.contract_precision<fp32>} : vector<8x8xf32>, vector<8x32xf32>, vector<8x32xf32> -> vector<8x32xf32>
    %298 = arith.addf %295, %297 : vector<8x32xf32>
    %c0_28 = arith.constant 0 : index
    %c0_29 = arith.constant 0 : index
    %299 = vector.load %arg11[%c0_28, %c0_29] : memref<1x32xf32, #tpu.memory_space<vmem>>, vector<1x32xf32>
    %300 = vector.broadcast %299 : vector<1x32xf32> to vector<8x32xf32>
    %301 = arith.addf %298, %300 : vector<8x32xf32>
    %302 = math.tanh %301 : vector<8x32xf32>
    %c0_30 = arith.constant 0 : index
    %c0_31 = arith.constant 0 : index
    %303 = vector.load %arg3[%c0_30, %c0_31] : memref<64x1xi32, #tpu.memory_space<vmem>>, vector<64x1xi32>
    %304 = tpu.iota {dimensions = array<i32: 1>} : vector<64x100xi32>
    %305 = vector.broadcast %303 : vector<64x1xi32> to vector<64x100xi32>
    %306 = arith.cmpi eq, %305, %304 : vector<64x100xi32>
    %307 = arith.extui %306 : vector<64x100xi1> to vector<64x100xi32>
    %308 = arith.sitofp %307 : vector<64x100xi32> to vector<64x100xf32>
    %c0_32 = arith.constant 0 : index
    %c0_33 = arith.constant 0 : index
    %309 = vector.load %arg4[%c0_32, %c0_33] : memref<100x32xf32, #tpu.memory_space<vmem>>, vector<100x32xf32>
    %cst_34 = arith.constant dense<0.000000e+00> : vector<64x32xf32>
    %310 = tpu.matmul %308, %309, %cst_34 {dimension_numbers = #tpu.dot_dimension_numbers<[1], [0], [0], [1], [0, 0, 1, 1], [], []>, precision = #tpu.contract_precision<fp32>} : vector<64x100xf32>, vector<100x32xf32>, vector<64x32xf32> -> vector<64x32xf32>
    %311 = tpu.iota {dimensions = array<i32: 0>} : vector<64x16xi32>
    %312 = tpu.iota {dimensions = array<i32: 1>} : vector<64x16xi32>
    %c7_i32 = arith.constant 7 : i32
    %313 = vector.broadcast %c7_i32 : i32 to vector<64x16xi32>
    %314 = arith.subi %313, %312 : vector<64x16xi32>
    %c8_i32 = arith.constant 8 : i32
    %315 = vector.broadcast %c8_i32 : i32 to vector<64x16xi32>
    %316 = arith.muli %314, %315 : vector<64x16xi32>
    %317 = arith.cmpi sge, %311, %316 : vector<64x16xi32>
    %c8_i32_35 = arith.constant 8 : i32
    %318 = vector.broadcast %c8_i32_35 : i32 to vector<64x16xi32>
    %319 = arith.addi %316, %318 : vector<64x16xi32>
    %320 = arith.cmpi slt, %311, %319 : vector<64x16xi32>
    %321 = arith.andi %317, %320 : vector<64x16xi1>
    %322 = arith.extui %321 : vector<64x16xi1> to vector<64x16xi32>
    %323 = arith.sitofp %322 : vector<64x16xi32> to vector<64x16xf32>
    %c0_36 = arith.constant 0 : index
    %c0_37 = arith.constant 0 : index
    %324 = vector.load %arg7[%c0_36, %c0_37] : memref<16x8xf32, #tpu.memory_space<vmem>>, vector<16x8xf32>
    %cst_38 = arith.constant dense<0.000000e+00> : vector<64x8xf32>
    %325 = tpu.matmul %323, %324, %cst_38 {dimension_numbers = #tpu.dot_dimension_numbers<[1], [0], [0], [1], [0, 0, 1, 1], [], []>, precision = #tpu.contract_precision<fp32>} : vector<64x16xf32>, vector<16x8xf32>, vector<64x8xf32> -> vector<64x8xf32>
    %c0_39 = arith.constant 0 : index
    %c0_40 = arith.constant 0 : index
    %326 = vector.load %arg12[%c0_39, %c0_40] : memref<32x32xf32, #tpu.memory_space<vmem>>, vector<32x32xf32>
    %cst_41 = arith.constant dense<0.000000e+00> : vector<64x32xf32>
    %327 = tpu.matmul %310, %326, %cst_41 {dimension_numbers = #tpu.dot_dimension_numbers<[1], [0], [0], [1], [0, 0, 1, 1], [], []>, precision = #tpu.contract_precision<fp32>} : vector<64x32xf32>, vector<32x32xf32>, vector<64x32xf32> -> vector<64x32xf32>
    %c0_42 = arith.constant 0 : index
    %c0_43 = arith.constant 0 : index
    %328 = vector.load %arg13[%c0_42, %c0_43] : memref<8x32xf32, #tpu.memory_space<vmem>>, vector<8x32xf32>
    %cst_44 = arith.constant dense<0.000000e+00> : vector<64x32xf32>
    %329 = tpu.matmul %325, %328, %cst_44 {dimension_numbers = #tpu.dot_dimension_numbers<[1], [0], [0], [1], [0, 0, 1, 1], [], []>, precision = #tpu.contract_precision<fp32>} : vector<64x8xf32>, vector<8x32xf32>, vector<64x32xf32> -> vector<64x32xf32>
    %330 = arith.addf %327, %329 : vector<64x32xf32>
    %c0_45 = arith.constant 0 : index
    %c0_46 = arith.constant 0 : index
    %331 = vector.load %arg15[%c0_45, %c0_46] : memref<1x32xf32, #tpu.memory_space<vmem>>, vector<1x32xf32>
    %332 = vector.broadcast %331 : vector<1x32xf32> to vector<64x32xf32>
    %333 = arith.addf %330, %332 : vector<64x32xf32>
    %c0_47 = arith.constant 0 : index
    %c0_48 = arith.constant 0 : index
    %334 = vector.load %arg14[%c0_47, %c0_48] : memref<32x32xf32, #tpu.memory_space<vmem>>, vector<32x32xf32>
    %335 = vector.extract_strided_slice %333 {offsets = [0, 0], sizes = [8, 32], strides = [1, 1]} : vector<64x32xf32> to vector<8x32xf32>
    %cst_49 = arith.constant dense<0.000000e+00> : vector<8x32xf32>
    %336 = tpu.matmul %302, %334, %cst_49 {dimension_numbers = #tpu.dot_dimension_numbers<[1], [0], [0], [1], [0, 0, 1, 1], [], []>, precision = #tpu.contract_precision<fp32>} : vector<8x32xf32>, vector<32x32xf32>, vector<8x32xf32> -> vector<8x32xf32>
    %337 = arith.addf %335, %336 : vector<8x32xf32>
    %338 = math.tanh %337 : vector<8x32xf32>
    %c0_50 = arith.constant 0 : index
    %c0_51 = arith.constant 0 : index
    %339 = vector.load %arg19[%c0_50, %c0_51] : memref<64x32xf32, #tpu.memory_space<vmem>>, vector<8x32xf32>
    tpu.vector_store %arg19[%c0_50, %c0_51], %338 {strides = array<i32>} : memref<64x32xf32, #tpu.memory_space<vmem>>, vector<8x32xf32>,
    %340 = vector.extract_strided_slice %333 {offsets = [8, 0], sizes = [8, 32], strides = [1, 1]} : vector<64x32xf32> to vector<8x32xf32>
    %cst_52 = arith.constant dense<0.000000e+00> : vector<8x32xf32>
    %341 = tpu.matmul %338, %334, %cst_52 {dimension_numbers = #tpu.dot_dimension_numbers<[1], [0], [0], [1], [0, 0, 1, 1], [], []>, precision = #tpu.contract_precision<fp32>} : vector<8x32xf32>, vector<32x32xf32>, vector<8x32xf32> -> vector<8x32xf32>
    %342 = arith.addf %340, %341 : vector<8x32xf32>
    %343 = math.tanh %342 : vector<8x32xf32>
    %c8 = arith.constant 8 : index
    %c0_53 = arith.constant 0 : index
    %344 = vector.load %arg19[%c8, %c0_53] : memref<64x32xf32, #tpu.memory_space<vmem>>, vector<8x32xf32>
    tpu.vector_store %arg19[%c8, %c0_53], %343 {strides = array<i32>} : memref<64x32xf32, #tpu.memory_space<vmem>>, vector<8x32xf32>,
    %345 = vector.extract_strided_slice %333 {offsets = [16, 0], sizes = [8, 32], strides = [1, 1]} : vector<64x32xf32> to vector<8x32xf32>
    %cst_54 = arith.constant dense<0.000000e+00> : vector<8x32xf32>
    %346 = tpu.matmul %343, %334, %cst_54 {dimension_numbers = #tpu.dot_dimension_numbers<[1], [0], [0], [1], [0, 0, 1, 1], [], []>, precision = #tpu.contract_precision<fp32>} : vector<8x32xf32>, vector<32x32xf32>, vector<8x32xf32> -> vector<8x32xf32>
    %347 = arith.addf %345, %346 : vector<8x32xf32>
    %348 = math.tanh %347 : vector<8x32xf32>
    %c16 = arith.constant 16 : index
    %c0_55 = arith.constant 0 : index
    %349 = vector.load %arg19[%c16, %c0_55] : memref<64x32xf32, #tpu.memory_space<vmem>>, vector<8x32xf32>
    tpu.vector_store %arg19[%c16, %c0_55], %348 {strides = array<i32>} : memref<64x32xf32, #tpu.memory_space<vmem>>, vector<8x32xf32>,
    %350 = vector.extract_strided_slice %333 {offsets = [24, 0], sizes = [8, 32], strides = [1, 1]} : vector<64x32xf32> to vector<8x32xf32>
    %cst_56 = arith.constant dense<0.000000e+00> : vector<8x32xf32>
    %351 = tpu.matmul %348, %334, %cst_56 {dimension_numbers = #tpu.dot_dimension_numbers<[1], [0], [0], [1], [0, 0, 1, 1], [], []>, precision = #tpu.contract_precision<fp32>} : vector<8x32xf32>, vector<32x32xf32>, vector<8x32xf32> -> vector<8x32xf32>
    %352 = arith.addf %350, %351 : vector<8x32xf32>
    %353 = math.tanh %352 : vector<8x32xf32>
    %c24 = arith.constant 24 : index
    %c0_57 = arith.constant 0 : index
    %354 = vector.load %arg19[%c24, %c0_57] : memref<64x32xf32, #tpu.memory_space<vmem>>, vector<8x32xf32>
    tpu.vector_store %arg19[%c24, %c0_57], %353 {strides = array<i32>} : memref<64x32xf32, #tpu.memory_space<vmem>>, vector<8x32xf32>,
    %355 = vector.extract_strided_slice %333 {offsets = [32, 0], sizes = [8, 32], strides = [1, 1]} : vector<64x32xf32> to vector<8x32xf32>
    %cst_58 = arith.constant dense<0.000000e+00> : vector<8x32xf32>
    %356 = tpu.matmul %353, %334, %cst_58 {dimension_numbers = #tpu.dot_dimension_numbers<[1], [0], [0], [1], [0, 0, 1, 1], [], []>, precision = #tpu.contract_precision<fp32>} : vector<8x32xf32>, vector<32x32xf32>, vector<8x32xf32> -> vector<8x32xf32>
    %357 = arith.addf %355, %356 : vector<8x32xf32>
    %358 = math.tanh %357 : vector<8x32xf32>
    %c32 = arith.constant 32 : index
    %c0_59 = arith.constant 0 : index
    %359 = vector.load %arg19[%c32, %c0_59] : memref<64x32xf32, #tpu.memory_space<vmem>>, vector<8x32xf32>
    tpu.vector_store %arg19[%c32, %c0_59], %358 {strides = array<i32>} : memref<64x32xf32, #tpu.memory_space<vmem>>, vector<8x32xf32>,
    %360 = vector.extract_strided_slice %333 {offsets = [40, 0], sizes = [8, 32], strides = [1, 1]} : vector<64x32xf32> to vector<8x32xf32>
    %cst_60 = arith.constant dense<0.000000e+00> : vector<8x32xf32>
    %361 = tpu.matmul %358, %334, %cst_60 {dimension_numbers = #tpu.dot_dimension_numbers<[1], [0], [0], [1], [0, 0, 1, 1], [], []>, precision = #tpu.contract_precision<fp32>} : vector<8x32xf32>, vector<32x32xf32>, vector<8x32xf32> -> vector<8x32xf32>
    %362 = arith.addf %360, %361 : vector<8x32xf32>
    %363 = math.tanh %362 : vector<8x32xf32>
    %c40 = arith.constant 40 : index
    %c0_61 = arith.constant 0 : index
    %364 = vector.load %arg19[%c40, %c0_61] : memref<64x32xf32, #tpu.memory_space<vmem>>, vector<8x32xf32>
    tpu.vector_store %arg19[%c40, %c0_61], %363 {strides = array<i32>} : memref<64x32xf32, #tpu.memory_space<vmem>>, vector<8x32xf32>,
    %365 = vector.extract_strided_slice %333 {offsets = [48, 0], sizes = [8, 32], strides = [1, 1]} : vector<64x32xf32> to vector<8x32xf32>
    %cst_62 = arith.constant dense<0.000000e+00> : vector<8x32xf32>
    %366 = tpu.matmul %363, %334, %cst_62 {dimension_numbers = #tpu.dot_dimension_numbers<[1], [0], [0], [1], [0, 0, 1, 1], [], []>, precision = #tpu.contract_precision<fp32>} : vector<8x32xf32>, vector<32x32xf32>, vector<8x32xf32> -> vector<8x32xf32>
    %367 = arith.addf %365, %366 : vector<8x32xf32>
    %368 = math.tanh %367 : vector<8x32xf32>
    %c48 = arith.constant 48 : index
    %c0_63 = arith.constant 0 : index
    %369 = vector.load %arg19[%c48, %c0_63] : memref<64x32xf32, #tpu.memory_space<vmem>>, vector<8x32xf32>
    tpu.vector_store %arg19[%c48, %c0_63], %368 {strides = array<i32>} : memref<64x32xf32, #tpu.memory_space<vmem>>, vector<8x32xf32>,
    %370 = vector.extract_strided_slice %333 {offsets = [56, 0], sizes = [8, 32], strides = [1, 1]} : vector<64x32xf32> to vector<8x32xf32>
    %cst_64 = arith.constant dense<0.000000e+00> : vector<8x32xf32>
    %371 = tpu.matmul %368, %334, %cst_64 {dimension_numbers = #tpu.dot_dimension_numbers<[1], [0], [0], [1], [0, 0, 1, 1], [], []>, precision = #tpu.contract_precision<fp32>} : vector<8x32xf32>, vector<32x32xf32>, vector<8x32xf32> -> vector<8x32xf32>
    %372 = arith.addf %370, %371 : vector<8x32xf32>
    %373 = math.tanh %372 : vector<8x32xf32>
    %c56 = arith.constant 56 : index
    %c0_65 = arith.constant 0 : index
    %374 = vector.load %arg19[%c56, %c0_65] : memref<64x32xf32, #tpu.memory_space<vmem>>, vector<8x32xf32>
    tpu.vector_store %arg19[%c56, %c0_65], %373 {strides = array<i32>} : memref<64x32xf32, #tpu.memory_space<vmem>>, vector<8x32xf32>,
    %c0_66 = arith.constant 0 : index
    %c0_67 = arith.constant 0 : index
    %375 = vector.load %arg19[%c0_66, %c0_67] : memref<64x32xf32, #tpu.memory_space<vmem>>, vector<64x32xf32>
    %c0_68 = arith.constant 0 : index
    %c0_69 = arith.constant 0 : index
    %376 = vector.load %arg16[%c0_68, %c0_69] : memref<32x64xf32, #tpu.memory_space<vmem>>, vector<32x64xf32>
    %cst_70 = arith.constant dense<0.000000e+00> : vector<64x64xf32>
    %377 = tpu.matmul %375, %376, %cst_70 {dimension_numbers = #tpu.dot_dimension_numbers<[1], [0], [0], [1], [0, 0, 1, 1], [], []>, precision = #tpu.contract_precision<fp32>} : vector<64x32xf32>, vector<32x64xf32>, vector<64x64xf32> -> vector<64x64xf32>
    %c0_71 = arith.constant 0 : index
    %c0_72 = arith.constant 0 : index
    %378 = vector.load %arg17[%c0_71, %c0_72] : memref<1x64xf32, #tpu.memory_space<vmem>>, vector<1x64xf32>
    %379 = vector.broadcast %378 : vector<1x64xf32> to vector<64x64xf32>
    %380 = arith.addf %377, %379 : vector<64x64xf32>
    %c0_73 = arith.constant 0 : index
    %c0_74 = arith.constant 0 : index
    %381 = vector.load %arg18[%c0_73, %c0_74] : memref<64x64xf32, #tpu.memory_space<vmem>>, vector<64x64xf32>
    tpu.vector_store %arg18[%c0_73, %c0_74], %380 {strides = array<i32>} : memref<64x64xf32, #tpu.memory_space<vmem>>, vector<64x64xf32>,
    return
  }
}

</mosaic_0001>

<llo_original>
// kernel: lemon_forward.1
$region0: #{lemon_forward.1}
  #allocation0 [shape = 'u32[]', space=smem, size = 0x4, offset = 0x4, fixed_abs, tag = 'smem constant byte address 0x4 - core index']
  #allocation1 [shape = 'u32[72,128]{1,0:T(1,128)}', space=vmem, size = 0x9000, scoped, tag = 'internal scratch']
  #allocation2 [shape = 'f32[64,32]{1,0:T(8,128)}', space=vmem, size = 0x8000, scoped, tag = 'scratch operand']
  %s0 = inlined_call_operand.vmem [shape: s32[8,15], index: 0, kind: input, shape index: {}]
  %s1 = inlined_call_operand.vmem [shape: s32[8,15], index: 1, kind: input, shape index: {}]
  %s2 = inlined_call_operand.vmem [shape: s32[8,15], index: 2, kind: input, shape index: {}]
  %s3 = inlined_call_operand.vmem [shape: s32[64,1], index: 3, kind: input, shape index: {}]
  %s4 = inlined_call_operand.vmem [shape: f32[100,32], index: 4, kind: input, shape index: {}]
  %s5 = inlined_call_operand.vmem [shape: f32[16,8], index: 5, kind: input, shape index: {}]
  %s6 = inlined_call_operand.vmem [shape: f32[8,8], index: 6, kind: input, shape index: {}]
  %s7 = inlined_call_operand.vmem [shape: f32[16,8], index: 7, kind: input, shape index: {}]
  %s8 = inlined_call_operand.vmem [shape: f32[32,32], index: 8, kind: input, shape index: {}]
  %s9 = inlined_call_operand.vmem [shape: f32[8,32], index: 9, kind: input, shape index: {}]
  %s10 = inlined_call_operand.vmem [shape: f32[8,32], index: 10, kind: input, shape index: {}]
  %s11 = inlined_call_operand.vmem [shape: f32[1,32], index: 11, kind: input, shape index: {}]
  %s12 = inlined_call_operand.vmem [shape: f32[32,32], index: 12, kind: input, shape index: {}]
  %s13 = inlined_call_operand.vmem [shape: f32[8,32], index: 13, kind: input, shape index: {}]
  %s14 = inlined_call_operand.vmem [shape: f32[32,32], index: 14, kind: input, shape index: {}]
  %s15 = inlined_call_operand.vmem [shape: f32[1,32], index: 15, kind: input, shape index: {}]
  %s16 = inlined_call_operand.vmem [shape: f32[32,64], index: 16, kind: input, shape index: {}]
  %s17 = inlined_call_operand.vmem [shape: f32[1,64], index: 17, kind: input, shape index: {}]
  %s18 = inlined_call_operand.vmem [shape: f32[64,64], index: 18, kind: output, shape index: {}]
  %s19 = sld [smem:[#allocation0]]
  $region82: #{lemon_forward.1} parent=0
    _
  %s21 = ssub.s32 1, %s19
  %s22 = scalar_select 0, %s21, %s19
  // Predicated region
  $region2: #{lemon_forward.1} parent=0 // pred_check
    _
  $region3: #{lemon_forward.1} parent=0 // pred_check_branch
    %24 = sbr.rel (0) target = $region5
  $region4: #{lemon_forward.1} parent=0 // pred_region
    _
  $region5: #{lemon_forward.1} parent=0 // pred_fallthru
    _
  // Predicated region
  $region6: #{lemon_forward.1} parent=0 // pred_check
    _
  $region7: #{lemon_forward.1} parent=0 // pred_check_branch
    %26 = sbr.rel (0) target = $region9
  $region8: #{lemon_forward.1} parent=0 // pred_region
    _
  $region9: #{lemon_forward.1} parent=0 // pred_fallthru
    _
  // Predicated region
  $region10: #{lemon_forward.1} parent=0 // pred_check
    _
  $region11: #{lemon_forward.1} parent=0 // pred_check_branch
    %28 = sbr.rel (0) target = $region13
  $region12: #{lemon_forward.1} parent=0 // pred_region
    _
  $region13: #{lemon_forward.1} parent=0 // pred_fallthru
    _
  // Predicated region
  $region14: #{lemon_forward.1} parent=0 // pred_check
    _
  $region15: #{lemon_forward.1} parent=0 // pred_check_branch
    %30 = sbr.rel (0) target = $region17
  $region16: #{lemon_forward.1} parent=0 // pred_region
    _
  $region17: #{lemon_forward.1} parent=0 // pred_fallthru
    _
  // Predicated region
  $region18: #{lemon_forward.1} parent=0 // pred_check
    _
  $region19: #{lemon_forward.1} parent=0 // pred_check_branch
    %32 = sbr.rel (0) target = $region21
  $region20: #{lemon_forward.1} parent=0 // pred_region
    _
  $region21: #{lemon_forward.1} parent=0 // pred_fallthru
    _
  // Predicated region
  $region22: #{lemon_forward.1} parent=0 // pred_check
    _
  $region23: #{lemon_forward.1} parent=0 // pred_check_branch
    %34 = sbr.rel (0) target = $region25
  $region24: #{lemon_forward.1} parent=0 // pred_region
    _
  $region25: #{lemon_forward.1} parent=0 // pred_fallthru
    _
  // Predicated region
  $region26: #{lemon_forward.1} parent=0 // pred_check
    _
  $region27: #{lemon_forward.1} parent=0 // pred_check_branch
    %36 = sbr.rel (0) target = $region29
  $region28: #{lemon_forward.1} parent=0 // pred_region
    _
  $region29: #{lemon_forward.1} parent=0 // pred_fallthru
    _
  // Predicated region
  $region30: #{lemon_forward.1} parent=0 // pred_check
    _
  $region31: #{lemon_forward.1} parent=0 // pred_check_branch
    %38 = sbr.rel (0) target = $region33
  $region32: #{lemon_forward.1} parent=0 // pred_region
    _
  $region33: #{lemon_forward.1} parent=0 // pred_fallthru
    _
  // Predicated region
  $region34: #{lemon_forward.1} parent=0 // pred_check
    _
  $region35: #{lemon_forward.1} parent=0 // pred_check_branch
    %40 = sbr.rel (0) target = $region37
  $region36: #{lemon_forward.1} parent=0 // pred_region
    _
  $region37: #{lemon_forward.1} parent=0 // pred_fallthru
    _
  // Predicated region
  $region38: #{lemon_forward.1} parent=0 // pred_check
    _
  $region39: #{lemon_forward.1} parent=0 // pred_check_branch
    %42 = sbr.rel (0) target = $region41
  $region40: #{lemon_forward.1} parent=0 // pred_region
    _
  $region41: #{lemon_forward.1} parent=0 // pred_fallthru
    _
  // Predicated region
  $region42: #{lemon_forward.1} parent=0 // pred_check
    _
  $region43: #{lemon_forward.1} parent=0 // pred_check_branch
    %44 = sbr.rel (0) target = $region45
  $region44: #{lemon_forward.1} parent=0 // pred_region
    _
  $region45: #{lemon_forward.1} parent=0 // pred_fallthru
    _
  // Predicated region
  $region46: #{lemon_forward.1} parent=0 // pred_check
    _
  $region47: #{lemon_forward.1} parent=0 // pred_check_branch
    %46 = sbr.rel (0) target = $region49
  $region48: #{lemon_forward.1} parent=0 // pred_region
    _
  $region49: #{lemon_forward.1} parent=0 // pred_fallthru
    _
  // Predicated region
  $region50: #{lemon_forward.1} parent=0 // pred_check
    _
  $region51: #{lemon_forward.1} parent=0 // pred_check_branch
    %48 = sbr.rel (0) target = $region53
  $region52: #{lemon_forward.1} parent=0 // pred_region
    _
  $region53: #{lemon_forward.1} parent=0 // pred_fallthru
    _
  // Predicated region
  $region54: #{lemon_forward.1} parent=0 // pred_check
    _
  $region55: #{lemon_forward.1} parent=0 // pred_check_branch
    %50 = sbr.rel (0) target = $region57
  $region56: #{lemon_forward.1} parent=0 // pred_region
    _
  $region57: #{lemon_forward.1} parent=0 // pred_fallthru
    _
  // Predicated region
  $region58: #{lemon_forward.1} parent=0 // pred_check
    _
  $region59: #{lemon_forward.1} parent=0 // pred_check_branch
    %52 = sbr.rel (0) target = $region61
  $region60: #{lemon_forward.1} parent=0 // pred_region
    _
  $region61: #{lemon_forward.1} parent=0 // pred_fallthru
    _
  // Predicated region
  $region62: #{lemon_forward.1} parent=0 // pred_check
    _
  $region63: #{lemon_forward.1} parent=0 // pred_check_branch
    %54 = sbr.rel (0) target = $region65
  $region64: #{lemon_forward.1} parent=0 // pred_region
    _
  $region65: #{lemon_forward.1} parent=0 // pred_fallthru
    _
  // Predicated region
  $region66: #{lemon_forward.1} parent=0 // pred_check
    _
  $region67: #{lemon_forward.1} parent=0 // pred_check_branch
    %56 = sbr.rel (0) target = $region69
  $region68: #{lemon_forward.1} parent=0 // pred_region
    _
  $region69: #{lemon_forward.1} parent=0 // pred_fallthru
    _
  // Predicated region
  $region70: #{lemon_forward.1} parent=0 // pred_check
    _
  $region71: #{lemon_forward.1} parent=0 // pred_check_branch
    %58 = sbr.rel (0) target = $region73
  $region72: #{lemon_forward.1} parent=0 // pred_region
    _
  $region73: #{lemon_forward.1} parent=0 // pred_fallthru
    _
  %v59 = vld [vmem:[%s0] sm:$0xff]
  %v60 = vld [vmem:[%s1] sm:$0xff]
  %v61 = vld [vmem:[%s2] sm:$0xff]
  %v62 = vlaneseq
  %v63 = vand.u32 %v62, 127
  %64 = vset.pattern.permute.xlu0 0
  %65 = vperm.xlu0 %64, %v59
  %v66 = vpop.permute.xlu0 %65
  %vm67 = vcmp.eq.s32.totalorder %v66, %v63
  %v68 = vsel %vm67, 1, 0
  %v69 = vcvt.s32.f32 %v68
  %v70 = vadd.f32 %v69, 0.0
  %71 = vset.pattern.permute.xlu0 0
  %72 = vperm.xlu0 %71, %v60
  %v73 = vpop.permute.xlu0 %72
  %vm74 = vcmp.eq.s32.totalorder %v73, %v63
  %v75 = vsel %vm74, 1, 0
  %v76 = vcvt.s32.f32 %v75
  %v77 = vadd.f32 %v76, 0.0
  %78 = vset.pattern.permute.xlu0 0
  %79 = vperm.xlu0 %78, %v61
  %v80 = vpop.permute.xlu0 %79
  %vm81 = vcmp.eq.s32.totalorder %v80, %v63
  %v82 = vsel %vm81, 1, 0
  %v83 = vcvt.s32.f32 %v82
  %v84 = vadd.f32 %v83, 0.0
  %85 = vset.pattern.permute.xlu0 1
  %86 = vperm.xlu0 %85, %v59
  %v87 = vpop.permute.xlu0 %86
  %vm88 = vcmp.eq.s32.totalorder %v87, %v63
  %v89 = vsel %vm88, 1, 0
  %v90 = vcvt.s32.f32 %v89
  %v91 = vadd.f32 %v70, %v90
  %92 = vset.pattern.permute.xlu0 1
  %93 = vperm.xlu0 %92, %v60
  %v94 = vpop.permute.xlu0 %93
  %vm95 = vcmp.eq.s32.totalorder %v94, %v63
  %v96 = vsel %vm95, 1, 0
  %v97 = vcvt.s32.f32 %v96
  %v98 = vadd.f32 %v77, %v97
  %99 = vset.pattern.permute.xlu0 1
  %100 = vperm.xlu0 %99, %v61
  %v101 = vpop.permute.xlu0 %100
  %vm102 = vcmp.eq.s32.totalorder %v101, %v63
  %v103 = vsel %vm102, 1, 0
  %v104 = vcvt.s32.f32 %v103
  %v105 = vadd.f32 %v84, %v104
  %106 = vset.pattern.permute.xlu0 2
  %107 = vperm.xlu0 %106, %v59
  %v108 = vpop.permute.xlu0 %107
  %vm109 = vcmp.eq.s32.totalorder %v108, %v63
  %v110 = vsel %vm109, 1, 0
  %v111 = vcvt.s32.f32 %v110
  %v112 = vadd.f32 %v91, %v111
  %113 = vset.pattern.permute.xlu0 2
  %114 = vperm.xlu0 %113, %v60
  %v115 = vpop.permute.xlu0 %114
  %vm116 = vcmp.eq.s32.totalorder %v115, %v63
  %v117 = vsel %vm116, 1, 0
  %v118 = vcvt.s32.f32 %v117
  %v119 = vadd.f32 %v98, %v118
  %120 = vset.pattern.permute.xlu0 2
  %121 = vperm.xlu0 %120, %v61
  %v122 = vpop.permute.xlu0 %121
  %vm123 = vcmp.eq.s32.totalorder %v122, %v63
  %v124 = vsel %vm123, 1, 0
  %v125 = vcvt.s32.f32 %v124
  %v126 = vadd.f32 %v105, %v125
  %127 = vset.pattern.permute.xlu0 3
  %128 = vperm.xlu0 %127, %v59
  %v129 = vpop.permute.xlu0 %128
  %vm130 = vcmp.eq.s32.totalorder %v129, %v63
  %v131 = vsel %vm130, 1, 0
  %v132 = vcvt.s32.f32 %v131
  %v133 = vadd.f32 %v112, %v132
  %134 = vset.pattern.permute.xlu0 3
  %135 = vperm.xlu0 %134, %v60
  %v136 = vpop.permute.xlu0 %135
  %vm137 = vcmp.eq.s32.totalorder %v136, %v63
  %v138 = vsel %vm137, 1, 0
  %v139 = vcvt.s32.f32 %v138
  %v140 = vadd.f32 %v119, %v139
  %141 = vset.pattern.permute.xlu0 3
  %142 = vperm.xlu0 %141, %v61
  %v143 = vpop.permute.xlu0 %142
  %vm144 = vcmp.eq.s32.totalorder %v143, %v63
  %v145 = vsel %vm144, 1, 0
  %v146 = vcvt.s32.f32 %v145
  %v147 = vadd.f32 %v126, %v146
  %148 = vset.pattern.permute.xlu0 4
  %149 = vperm.xlu0 %148, %v59
  %v150 = vpop.permute.xlu0 %149
  %vm151 = vcmp.eq.s32.totalorder %v150, %v63
  %v152 = vsel %vm151, 1, 0
  %v153 = vcvt.s32.f32 %v152
  %v154 = vadd.f32 %v133, %v153
  %155 = vset.pattern.permute.xlu0 4
  %156 = vperm.xlu0 %155, %v60
  %v157 = vpop.permute.xlu0 %156
  %vm158 = vcmp.eq.s32.totalorder %v157, %v63
  %v159 = vsel %vm158, 1, 0
  %v160 = vcvt.s32.f32 %v159
  %v161 = vadd.f32 %v140, %v160
  %162 = vset.pattern.permute.xlu0 4
  %163 = vperm.xlu0 %162, %v61
  %v164 = vpop.permute.xlu0 %163
  %vm165 = vcmp.eq.s32.totalorder %v164, %v63
  %v166 = vsel %vm165, 1, 0
  %v167 = vcvt.s32.f32 %v166
  %v168 = vadd.f32 %v147, %v167
  %169 = vset.pattern.permute.xlu0 5
  %170 = vperm.xlu0 %169, %v59
  %v171 = vpop.permute.xlu0 %170
  %vm172 = vcmp.eq.s32.totalorder %v171, %v63
  %v173 = vsel %vm172, 1, 0
  %v174 = vcvt.s32.f32 %v173
  %v175 = vadd.f32 %v154, %v174
  %176 = vset.pattern.permute.xlu0 5
  %177 = vperm.xlu0 %176, %v60
  %v178 = vpop.permute.xlu0 %177
  %vm179 = vcmp.eq.s32.totalorder %v178, %v63
  %v180 = vsel %vm179, 1, 0
  %v181 = vcvt.s32.f32 %v180
  %v182 = vadd.f32 %v161, %v181
  %183 = vset.pattern.permute.xlu0 5
  %184 = vperm.xlu0 %183, %v61
  %v185 = vpop.permute.xlu0 %184
  %vm186 = vcmp.eq.s32.totalorder %v185, %v63
  %v187 = vsel %vm186, 1, 0
  %v188 = vcvt.s32.f32 %v187
  %v189 = vadd.f32 %v168, %v188
  %190 = vset.pattern.permute.xlu0 6
  %191 = vperm.xlu0 %190, %v59
  %v192 = vpop.permute.xlu0 %191
  %vm193 = vcmp.eq.s32.totalorder %v192, %v63
  %v194 = vsel %vm193, 1, 0
  %v195 = vcvt.s32.f32 %v194
  %v196 = vadd.f32 %v175, %v195
  %197 = vset.pattern.permute.xlu0 6
  %198 = vperm.xlu0 %197, %v60
  %v199 = vpop.permute.xlu0 %198
  %vm200 = vcmp.eq.s32.totalorder %v199, %v63
  %v201 = vsel %vm200, 1, 0
  %v202 = vcvt.s32.f32 %v201
  %v203 = vadd.f32 %v182, %v202
  %204 = vset.pattern.permute.xlu0 6
  %205 = vperm.xlu0 %204, %v61
  %v206 = vpop.permute.xlu0 %205
  %vm207 = vcmp.eq.s32.totalorder %v206, %v63
  %v208 = vsel %vm207, 1, 0
  %v209 = vcvt.s32.f32 %v208
  %v210 = vadd.f32 %v189, %v209
  %211 = vset.pattern.permute.xlu0 7
  %212 = vperm.xlu0 %211, %v59
  %v213 = vpop.permute.xlu0 %212
  %vm214 = vcmp.eq.s32.totalorder %v213, %v63
  %v215 = vsel %vm214, 1, 0
  %v216 = vcvt.s32.f32 %v215
  %v217 = vadd.f32 %v196, %v216
  %218 = vset.pattern.permute.xlu0 7
  %219 = vperm.xlu0 %218, %v60
  %v220 = vpop.permute.xlu0 %219
  %vm221 = vcmp.eq.s32.totalorder %v220, %v63
  %v222 = vsel %vm221, 1, 0
  %v223 = vcvt.s32.f32 %v222
  %v224 = vadd.f32 %v203, %v223
  %225 = vset.pattern.permute.xlu0 7
  %226 = vperm.xlu0 %225, %v61
  %v227 = vpop.permute.xlu0 %226
  %vm228 = vcmp.eq.s32.totalorder %v227, %v63
  %v229 = vsel %vm228, 1, 0
  %v230 = vcvt.s32.f32 %v229
  %v231 = vadd.f32 %v210, %v230
  %232 = vset.pattern.permute.xlu0 8
  %233 = vperm.xlu0 %232, %v59
  %v234 = vpop.permute.xlu0 %233
  %vm235 = vcmp.eq.s32.totalorder %v234, %v63
  %v236 = vsel %vm235, 1, 0
  %v237 = vcvt.s32.f32 %v236
  %v238 = vadd.f32 %v217, %v237
  %239 = vset.pattern.permute.xlu0 8
  %240 = vperm.xlu0 %239, %v60
  %v241 = vpop.permute.xlu0 %240
  %vm242 = vcmp.eq.s32.totalorder %v241, %v63
  %v243 = vsel %vm242, 1, 0
  %v244 = vcvt.s32.f32 %v243
  %v245 = vadd.f32 %v224, %v244
  %246 = vset.pattern.permute.xlu0 8
  %247 = vperm.xlu0 %246, %v61
  %v248 = vpop.permute.xlu0 %247
  %vm249 = vcmp.eq.s32.totalorder %v248, %v63
  %v250 = vsel %vm249, 1, 0
  %v251 = vcvt.s32.f32 %v250
  %v252 = vadd.f32 %v231, %v251
  %253 = vset.pattern.permute.xlu0 9
  %254 = vperm.xlu0 %253, %v59
  %v255 = vpop.permute.xlu0 %254
  %vm256 = vcmp.eq.s32.totalorder %v255, %v63
  %v257 = vsel %vm256, 1, 0
  %v258 = vcvt.s32.f32 %v257
  %v259 = vadd.f32 %v238, %v258
  %260 = vset.pattern.permute.xlu0 9
  %261 = vperm.xlu0 %260, %v60
  %v262 = vpop.permute.xlu0 %261
  %vm263 = vcmp.eq.s32.totalorder %v262, %v63
  %v264 = vsel %vm263, 1, 0
  %v265 = vcvt.s32.f32 %v264
  %v266 = vadd.f32 %v245, %v265
  %267 = vset.pattern.permute.xlu0 9
  %268 = vperm.xlu0 %267, %v61
  %v269 = vpop.permute.xlu0 %268
  %vm270 = vcmp.eq.s32.totalorder %v269, %v63
  %v271 = vsel %vm270, 1, 0
  %v272 = vcvt.s32.f32 %v271
  %v273 = vadd.f32 %v252, %v272
  %274 = vset.pattern.permute.xlu0 10
  %275 = vperm.xlu0 %274, %v59
  %v276 = vpop.permute.xlu0 %275
  %vm277 = vcmp.eq.s32.totalorder %v276, %v63
  %v278 = vsel %vm277, 1, 0
  %v279 = vcvt.s32.f32 %v278
  %v280 = vadd.f32 %v259, %v279
  %281 = vset.pattern.permute.xlu0 10
  %282 = vperm.xlu0 %281, %v60
  %v283 = vpop.permute.xlu0 %282
  %vm284 = vcmp.eq.s32.totalorder %v283, %v63
  %v285 = vsel %vm284, 1, 0
  %v286 = vcvt.s32.f32 %v285
  %v287 = vadd.f32 %v266, %v286
  %288 = vset.pattern.permute.xlu0 10
  %289 = vperm.xlu0 %288, %v61
  %v290 = vpop.permute.xlu0 %289
  %vm291 = vcmp.eq.s32.totalorder %v290, %v63
  %v292 = vsel %vm291, 1, 0
  %v293 = vcvt.s32.f32 %v292
  %v294 = vadd.f32 %v273, %v293
  %295 = vset.pattern.permute.xlu0 11
  %296 = vperm.xlu0 %295, %v59
  %v297 = vpop.permute.xlu0 %296
  %vm298 = vcmp.eq.s32.totalorder %v297, %v63
  %v299 = vsel %vm298, 1, 0
  %v300 = vcvt.s32.f32 %v299
  %v301 = vadd.f32 %v280, %v300
  %302 = vset.pattern.permute.xlu0 11
  %303 = vperm.xlu0 %302, %v60
  %v304 = vpop.permute.xlu0 %303
  %vm305 = vcmp.eq.s32.totalorder %v304, %v63
  %v306 = vsel %vm305, 1, 0
  %v307 = vcvt.s32.f32 %v306
  %v308 = vadd.f32 %v287, %v307
  %309 = vset.pattern.permute.xlu0 11
  %310 = vperm.xlu0 %309, %v61
  %v311 = vpop.permute.xlu0 %310
  %vm312 = vcmp.eq.s32.totalorder %v311, %v63
  %v313 = vsel %vm312, 1, 0
  %v314 = vcvt.s32.f32 %v313
  %v315 = vadd.f32 %v294, %v314
  %316 = vset.pattern.permute.xlu0 12
  %317 = vperm.xlu0 %316, %v59
  %v318 = vpop.permute.xlu0 %317
  %vm319 = vcmp.eq.s32.totalorder %v318, %v63
  %v320 = vsel %vm319, 1, 0
  %v321 = vcvt.s32.f32 %v320
  %v322 = vadd.f32 %v301, %v321
  %323 = vset.pattern.permute.xlu0 12
  %324 = vperm.xlu0 %323, %v60
  %v325 = vpop.permute.xlu0 %324
  %vm326 = vcmp.eq.s32.totalorder %v325, %v63
  %v327 = vsel %vm326, 1, 0
  %v328 = vcvt.s32.f32 %v327
  %v329 = vadd.f32 %v308, %v328
  %330 = vset.pattern.permute.xlu0 12
  %331 = vperm.xlu0 %330, %v61
  %v332 = vpop.permute.xlu0 %331
  %vm333 = vcmp.eq.s32.totalorder %v332, %v63
  %v334 = vsel %vm333, 1, 0
  %v335 = vcvt.s32.f32 %v334
  %v336 = vadd.f32 %v315, %v335
  %337 = vset.pattern.permute.xlu0 13
  %338 = vperm.xlu0 %337, %v59
  %v339 = vpop.permute.xlu0 %338
  %vm340 = vcmp.eq.s32.totalorder %v339, %v63
  %v341 = vsel %vm340, 1, 0
  %v342 = vcvt.s32.f32 %v341
  %v343 = vadd.f32 %v322, %v342
  %344 = vset.pattern.permute.xlu0 13
  %345 = vperm.xlu0 %344, %v60
  %v346 = vpop.permute.xlu0 %345
  %vm347 = vcmp.eq.s32.totalorder %v346, %v63
  %v348 = vsel %vm347, 1, 0
  %v349 = vcvt.s32.f32 %v348
  %v350 = vadd.f32 %v329, %v349
  %351 = vset.pattern.permute.xlu0 13
  %352 = vperm.xlu0 %351, %v61
  %v353 = vpop.permute.xlu0 %352
  %vm354 = vcmp.eq.s32.totalorder %v353, %v63
  %v355 = vsel %vm354, 1, 0
  %v356 = vcvt.s32.f32 %v355
  %v357 = vadd.f32 %v336, %v356
  %358 = vset.pattern.permute.xlu0 14
  %359 = vperm.xlu0 %358, %v59
  %v360 = vpop.permute.xlu0 %359
  %vm361 = vcmp.eq.s32.totalorder %v360, %v63
  %v362 = vsel %vm361, 1, 0
  %v363 = vcvt.s32.f32 %v362
  %v364 = vadd.f32 %v343, %v363
  %365 = vset.pattern.permute.xlu0 14
  %366 = vperm.xlu0 %365, %v60
  %v367 = vpop.permute.xlu0 %366
  %vm368 = vcmp.eq.s32.totalorder %v367, %v63
  %v369 = vsel %vm368, 1, 0
  %v370 = vcvt.s32.f32 %v369
  %v371 = vadd.f32 %v350, %v370
  %372 = vset.pattern.permute.xlu0 14
  %373 = vperm.xlu0 %372, %v61
  %v374 = vpop.permute.xlu0 %373
  %vm375 = vcmp.eq.s32.totalorder %v374, %v63
  %v376 = vsel %vm375, 1, 0
  %v377 = vcvt.s32.f32 %v376
  %v378 = vadd.f32 %v357, %v377
  %v379 = vld [vmem:[%s4] sm:$0xff]
  %v380 = vld [vmem:[%s4 + $0x8] sm:$0xff]
  %v381 = vld [vmem:[%s4 + $0x10] sm:$0xff]
  %v382 = vld [vmem:[%s4 + $0x18] sm:$0xff]
  %v383 = vld [vmem:[%s4 + $0x20] sm:$0xff]
  %v384 = vld [vmem:[%s4 + $0x28] sm:$0xff]
  %v385 = vld [vmem:[%s4 + $0x30] sm:$0xff]
  %v386 = vld [vmem:[%s4 + $0x38] sm:$0xff]
  %v387 = vld [vmem:[%s4 + $0x40] sm:$0xff]
  %v388 = vld [vmem:[%s4 + $0x48] sm:$0xff]
  %v389 = vld [vmem:[%s4 + $0x50] sm:$0xff]
  %v390 = vld [vmem:[%s4 + $0x58] sm:$0xff]
  %v391 = vld [vmem:[%s4 + $0x60] sm:$0xf]
  %vm392 = vcmask 818176
  %v394 = vsel %vm392, %v364, 0
  %vm396 = vcmask 1043456
  %v398 = vsel %vm396, %v391, 0
  %400 = vmatpush.msra.mxu0 0.0
  %401 = vmatpush.msra.mxu0 0.0
  %402 = vmatpush.msra.mxu0 0.0
  %v403 = vand.u32 %v398, 4294901760
  %404 = vmatpush.msra.mxu0 %v403
  %v405 = vand.u32 %v390, 4294901760
  %406 = vmatpush.msra.mxu0 %v405
  %v407 = vand.u32 %v389, 4294901760
  %408 = vmatpush.msra.mxu0 %v407
  %v409 = vand.u32 %v388, 4294901760
  %410 = vmatpush.msra.mxu0 %v409
  %v411 = vand.u32 %v387, 4294901760
  %412 = vmatpush.msra.mxu0 %v411
  %v413 = vand.u32 %v386, 4294901760
  %414 = vmatpush.msra.mxu0 %v413
  %v415 = vand.u32 %v385, 4294901760
  %416 = vmatpush.msra.mxu0 %v415
  %v417 = vand.u32 %v384, 4294901760
  %418 = vmatpush.msra.mxu0 %v417
  %v419 = vand.u32 %v383, 4294901760
  %420 = vmatpush.msra.mxu0 %v419
  %v421 = vand.u32 %v382, 4294901760
  %422 = vmatpush.msra.mxu0 %v421
  %v423 = vand.u32 %v381, 4294901760
  %424 = vmatpush.msra.mxu0 %v423
  %v425 = vand.u32 %v380, 4294901760
  %426 = vmatpush.msra.mxu0 %v425
  %v427 = vand.u32 %v379, 4294901760
  %428 = vmatpush.msra.mxu0 %v427
  %v429 = vand.u32 %v394, 4294901760
  %v430 = vsub.f32 %v394, %v429
  %v431 = vand.u32 %v430, 4294901760
  %v432 = vsub.f32 %v430, %v431
  %v433 = vand.u32 %v432, 4294901760
  %434 = vmatmul.f32.gmra.mxu0 %v433
  %v435 = vpop.f32.mrf.mxu0
  %v436 = vadd.f32 0.0, %v435
  %437 = vdwg.mxu0
  %438 = vmatpush.msra.mxu0 0.0
  %439 = vmatpush.msra.mxu0 0.0
  %440 = vmatpush.msra.mxu0 0.0
  %v441 = vand.u32 %v398, 4294901760
  %v442 = vsub.f32 %v398, %v441
  %v443 = vand.u32 %v442, 4294901760
  %v444 = vsub.f32 %v442, %v443
  %v445 = vand.u32 %v444, 4294901760
  %446 = vmatpush.msra.mxu0 %v445
  %v447 = vand.u32 %v390, 4294901760
  %v448 = vsub.f32 %v390, %v447
  %v449 = vand.u32 %v448, 4294901760
  %v450 = vsub.f32 %v448, %v449
  %v451 = vand.u32 %v450, 4294901760
  %452 = vmatpush.msra.mxu0 %v451
  %v453 = vand.u32 %v389, 4294901760
  %v454 = vsub.f32 %v389, %v453
  %v455 = vand.u32 %v454, 4294901760
  %v456 = vsub.f32 %v454, %v455
  %v457 = vand.u32 %v456, 4294901760
  %458 = vmatpush.msra.mxu0 %v457
  %v459 = vand.u32 %v388, 4294901760
  %v460 = vsub.f32 %v388, %v459
  %v461 = vand.u32 %v460, 4294901760
  %v462 = vsub.f32 %v460, %v461
  %v463 = vand.u32 %v462, 4294901760
  %464 = vmatpush.msra.mxu0 %v463
  %v465 = vand.u32 %v387, 4294901760
  %v466 = vsub.f32 %v387, %v465
  %v467 = vand.u32 %v466, 4294901760
  %v468 = vsub.f32 %v466, %v467
  %v469 = vand.u32 %v468, 4294901760
  %470 = vmatpush.msra.mxu0 %v469
  %v471 = vand.u32 %v386, 4294901760
  %v472 = vsub.f32 %v386, %v471
  %v473 = vand.u32 %v472, 4294901760
  %v474 = vsub.f32 %v472, %v473
  %v475 = vand.u32 %v474, 4294901760
  %476 = vmatpush.msra.mxu0 %v475
  %v477 = vand.u32 %v385, 4294901760
  %v478 = vsub.f32 %v385, %v477
  %v479 = vand.u32 %v478, 4294901760
  %v480 = vsub.f32 %v478, %v479
  %v481 = vand.u32 %v480, 4294901760
  %482 = vmatpush.msra.mxu0 %v481
  %v483 = vand.u32 %v384, 4294901760
  %v484 = vsub.f32 %v384, %v483
  %v485 = vand.u32 %v484, 4294901760
  %v486 = vsub.f32 %v484, %v485
  %v487 = vand.u32 %v486, 4294901760
  %488 = vmatpush.msra.mxu0 %v487
  %v489 = vand.u32 %v383, 4294901760
  %v490 = vsub.f32 %v383, %v489
  %v491 = vand.u32 %v490, 4294901760
  %v492 = vsub.f32 %v490, %v491
  %v493 = vand.u32 %v492, 4294901760
  %494 = vmatpush.msra.mxu0 %v493
  %v495 = vand.u32 %v382, 4294901760
  %v496 = vsub.f32 %v382, %v495
  %v497 = vand.u32 %v496, 4294901760
  %v498 = vsub.f32 %v496, %v497
  %v499 = vand.u32 %v498, 4294901760
  %500 = vmatpush.msra.mxu0 %v499
  %v501 = vand.u32 %v381, 4294901760
  %v502 = vsub.f32 %v381, %v501
  %v503 = vand.u32 %v502, 4294901760
  %v504 = vsub.f32 %v502, %v503
  %v505 = vand.u32 %v504, 4294901760
  %506 = vmatpush.msra.mxu0 %v505
  %v507 = vand.u32 %v380, 4294901760
  %v508 = vsub.f32 %v380, %v507
  %v509 = vand.u32 %v508, 4294901760
  %v510 = vsub.f32 %v508, %v509
  %v511 = vand.u32 %v510, 4294901760
  %512 = vmatpush.msra.mxu0 %v511
  %v513 = vand.u32 %v379, 4294901760
  %v514 = vsub.f32 %v379, %v513
  %v515 = vand.u32 %v514, 4294901760
  %v516 = vsub.f32 %v514, %v515
  %v517 = vand.u32 %v516, 4294901760
  %518 = vmatpush.msra.mxu0 %v517
  %v519 = vand.u32 %v394, 4294901760
  %520 = vmatmul.f32.gmra.mxu0 %v519
  %v521 = vpop.f32.mrf.mxu0
  %v522 = vadd.f32 %v436, %v521
  %523 = vdwg.mxu0
  %524 = vmatpush.msra.mxu0 0.0
  %525 = vmatpush.msra.mxu0 0.0
  %526 = vmatpush.msra.mxu0 0.0
  %v527 = vand.u32 %v398, 4294901760
  %v528 = vsub.f32 %v398, %v527
  %529 = vmatpush.msra.mxu0 %v528
  %v530 = vand.u32 %v390, 4294901760
  %v531 = vsub.f32 %v390, %v530
  %532 = vmatpush.msra.mxu0 %v531
  %v533 = vand.u32 %v389, 4294901760
  %v534 = vsub.f32 %v389, %v533
  %535 = vmatpush.msra.mxu0 %v534
  %v536 = vand.u32 %v388, 4294901760
  %v537 = vsub.f32 %v388, %v536
  %538 = vmatpush.msra.mxu0 %v537
  %v539 = vand.u32 %v387, 4294901760
  %v540 = vsub.f32 %v387, %v539
  %541 = vmatpush.msra.mxu0 %v540
  %v542 = vand.u32 %v386, 4294901760
  %v543 = vsub.f32 %v386, %v542
  %544 = vmatpush.msra.mxu0 %v543
  %v545 = vand.u32 %v385, 4294901760
  %v546 = vsub.f32 %v385, %v545
  %547 = vmatpush.msra.mxu0 %v546
  %v548 = vand.u32 %v384, 4294901760
  %v549 = vsub.f32 %v384, %v548
  %550 = vmatpush.msra.mxu0 %v549
  %v551 = vand.u32 %v383, 4294901760
  %v552 = vsub.f32 %v383, %v551
  %553 = vmatpush.msra.mxu0 %v552
  %v554 = vand.u32 %v382, 4294901760
  %v555 = vsub.f32 %v382, %v554
  %556 = vmatpush.msra.mxu0 %v555
  %v557 = vand.u32 %v381, 4294901760
  %v558 = vsub.f32 %v381, %v557
  %559 = vmatpush.msra.mxu0 %v558
  %v560 = vand.u32 %v380, 4294901760
  %v561 = vsub.f32 %v380, %v560
  %562 = vmatpush.msra.mxu0 %v561
  %v563 = vand.u32 %v379, 4294901760
  %v564 = vsub.f32 %v379, %v563
  %565 = vmatpush.msra.mxu0 %v564
  %v566 = vand.u32 %v394, 4294901760
  %v567 = vsub.f32 %v394, %v566
  %568 = vmatmul.f32.gmra.mxu0 %v567
  %v569 = vpop.f32.mrf.mxu0
  %v570 = vadd.f32 %v522, %v569
  %571 = vdwg.mxu0
  %572 = vmatpush.msra.mxu0 0.0
  %573 = vmatpush.msra.mxu0 0.0
  %574 = vmatpush.msra.mxu0 0.0
  %v575 = vand.u32 %v398, 4294901760
  %576 = vmatpush.msra.mxu0 %v575
  %v577 = vand.u32 %v390, 4294901760
  %578 = vmatpush.msra.mxu0 %v577
  %v579 = vand.u32 %v389, 4294901760
  %580 = vmatpush.msra.mxu0 %v579
  %v581 = vand.u32 %v388, 4294901760
  %582 = vmatpush.msra.mxu0 %v581
  %v583 = vand.u32 %v387, 4294901760
  %584 = vmatpush.msra.mxu0 %v583
  %v585 = vand.u32 %v386, 4294901760
  %586 = vmatpush.msra.mxu0 %v585
  %v587 = vand.u32 %v385, 4294901760
  %588 = vmatpush.msra.mxu0 %v587
  %v589 = vand.u32 %v384, 4294901760
  %590 = vmatpush.msra.mxu0 %v589
  %v591 = vand.u32 %v383, 4294901760
  %592 = vmatpush.msra.mxu0 %v591
  %v593 = vand.u32 %v382, 4294901760
  %594 = vmatpush.msra.mxu0 %v593
  %v595 = vand.u32 %v381, 4294901760
  %596 = vmatpush.msra.mxu0 %v595
  %v597 = vand.u32 %v380, 4294901760
  %598 = vmatpush.msra.mxu0 %v597
  %v599 = vand.u32 %v379, 4294901760
  %600 = vmatpush.msra.mxu0 %v599
  %v601 = vand.u32 %v394, 4294901760
  %v602 = vsub.f32 %v394, %v601
  %v603 = vand.u32 %v602, 4294901760
  %604 = vmatmul.f32.gmra.mxu0 %v603
  %v605 = vpop.f32.mrf.mxu0
  %v606 = vadd.f32 %v570, %v605
  %607 = vdwg.mxu0
  %608 = vmatpush.msra.mxu0 0.0
  %609 = vmatpush.msra.mxu0 0.0
  %610 = vmatpush.msra.mxu0 0.0
  %v611 = vand.u32 %v398, 4294901760
  %v612 = vsub.f32 %v398, %v611
  %v613 = vand.u32 %v612, 4294901760
  %614 = vmatpush.msra.mxu0 %v613
  %v615 = vand.u32 %v390, 4294901760
  %v616 = vsub.f32 %v390, %v615
  %v617 = vand.u32 %v616, 4294901760
  %618 = vmatpush.msra.mxu0 %v617
  %v619 = vand.u32 %v389, 4294901760
  %v620 = vsub.f32 %v389, %v619
  %v621 = vand.u32 %v620, 4294901760
  %622 = vmatpush.msra.mxu0 %v621
  %v623 = vand.u32 %v388, 4294901760
  %v624 = vsub.f32 %v388, %v623
  %v625 = vand.u32 %v624, 4294901760
  %626 = vmatpush.msra.mxu0 %v625
  %v627 = vand.u32 %v387, 4294901760
  %v628 = vsub.f32 %v387, %v627
  %v629 = vand.u32 %v628, 4294901760
  %630 = vmatpush.msra.mxu0 %v629
  %v631 = vand.u32 %v386, 4294901760
  %v632 = vsub.f32 %v386, %v631
  %v633 = vand.u32 %v632, 4294901760
  %634 = vmatpush.msra.mxu0 %v633
  %v635 = vand.u32 %v385, 4294901760
  %v636 = vsub.f32 %v385, %v635
  %v637 = vand.u32 %v636, 4294901760
  %638 = vmatpush.msra.mxu0 %v637
  %v639 = vand.u32 %v384, 4294901760
  %v640 = vsub.f32 %v384, %v639
  %v641 = vand.u32 %v640, 4294901760
  %642 = vmatpush.msra.mxu0 %v641
  %v643 = vand.u32 %v383, 4294901760
  %v644 = vsub.f32 %v383, %v643
  %v645 = vand.u32 %v644, 4294901760
  %646 = vmatpush.msra.mxu0 %v645
  %v647 = vand.u32 %v382, 4294901760
  %v648 = vsub.f32 %v382, %v647
  %v649 = vand.u32 %v648, 4294901760
  %650 = vmatpush.msra.mxu0 %v649
  %v651 = vand.u32 %v381, 4294901760
  %v652 = vsub.f32 %v381, %v651
  %v653 = vand.u32 %v652, 4294901760
  %654 = vmatpush.msra.mxu0 %v653
  %v655 = vand.u32 %v380, 4294901760
  %v656 = vsub.f32 %v380, %v655
  %v657 = vand.u32 %v656, 4294901760
  %658 = vmatpush.msra.mxu0 %v657
  %v659 = vand.u32 %v379, 4294901760
  %v660 = vsub.f32 %v379, %v659
  %v661 = vand.u32 %v660, 4294901760
  %662 = vmatpush.msra.mxu0 %v661
  %v663 = vand.u32 %v394, 4294901760
  %664 = vmatmul.f32.gmra.mxu0 %v663
  %v665 = vpop.f32.mrf.mxu0
  %v666 = vadd.f32 %v606, %v665
  %667 = vdwg.mxu0
  %668 = vmatpush.msra.mxu0 0.0
  %669 = vmatpush.msra.mxu0 0.0
  %670 = vmatpush.msra.mxu0 0.0
  %v671 = vand.u32 %v398, 4294901760
  %672 = vmatpush.msra.mxu0 %v671
  %v673 = vand.u32 %v390, 4294901760
  %674 = vmatpush.msra.mxu0 %v673
  %v675 = vand.u32 %v389, 4294901760
  %676 = vmatpush.msra.mxu0 %v675
  %v677 = vand.u32 %v388, 4294901760
  %678 = vmatpush.msra.mxu0 %v677
  %v679 = vand.u32 %v387, 4294901760
  %680 = vmatpush.msra.mxu0 %v679
  %v681 = vand.u32 %v386, 4294901760
  %682 = vmatpush.msra.mxu0 %v681
  %v683 = vand.u32 %v385, 4294901760
  %684 = vmatpush.msra.mxu0 %v683
  %v685 = vand.u32 %v384, 4294901760
  %686 = vmatpush.msra.mxu0 %v685
  %v687 = vand.u32 %v383, 4294901760
  %688 = vmatpush.msra.mxu0 %v687
  %v689 = vand.u32 %v382, 4294901760
  %690 = vmatpush.msra.mxu0 %v689
  %v691 = vand.u32 %v381, 4294901760
  %692 = vmatpush.msra.mxu0 %v691
  %v693 = vand.u32 %v380, 4294901760
  %694 = vmatpush.msra.mxu0 %v693
  %v695 = vand.u32 %v379, 4294901760
  %696 = vmatpush.msra.mxu0 %v695
  %v697 = vand.u32 %v394, 4294901760
  %698 = vmatmul.f32.gmra.mxu0 %v697
  %v699 = vpop.f32.mrf.mxu0
  %v700 = vadd.f32 %v666, %v699
  %701 = vdwg.mxu0
  %v702 = vmul.f32 %v700, 0.06666667
  %v703 = vld [vmem:[%s5] sm:$0xff]
  %v704 = vld [vmem:[%s5 + $0x8] sm:$0xff]
  %vm705 = vcmask 130048
  %v707 = vsel %vm705, %v371, 0
  %709 = vmatpush.msra.mxu0 0.0
  %710 = vmatpush.msra.mxu0 0.0
  %711 = vmatpush.msra.mxu0 0.0
  %712 = vmatpush.msra.mxu0 0.0
  %713 = vmatpush.msra.mxu0 0.0
  %714 = vmatpush.msra.mxu0 0.0
  %715 = vmatpush.msra.mxu0 0.0
  %716 = vmatpush.msra.mxu0 0.0
  %717 = vmatpush.msra.mxu0 0.0
  %718 = vmatpush.msra.mxu0 0.0
  %719 = vmatpush.msra.mxu0 0.0
  %720 = vmatpush.msra.mxu0 0.0
  %721 = vmatpush.msra.mxu0 0.0
  %722 = vmatpush.msra.mxu0 0.0
  %v723 = vand.u32 %v704, 4294901760
  %724 = vmatpush.msra.mxu0 %v723
  %v725 = vand.u32 %v703, 4294901760
  %726 = vmatpush.msra.mxu0 %v725
  %v727 = vand.u32 %v707, 4294901760
  %v728 = vsub.f32 %v707, %v727
  %v729 = vand.u32 %v728, 4294901760
  %v730 = vsub.f32 %v728, %v729
  %v731 = vand.u32 %v730, 4294901760
  %732 = vmatmul.f32.gmra.mxu0 %v731
  %v733 = vpop.f32.mrf.mxu0
  %v734 = vadd.f32 0.0, %v733
  %735 = vdwg.mxu0
  %736 = vmatpush.msra.mxu0 0.0
  %737 = vmatpush.msra.mxu0 0.0
  %738 = vmatpush.msra.mxu0 0.0
  %739 = vmatpush.msra.mxu0 0.0
  %740 = vmatpush.msra.mxu0 0.0
  %741 = vmatpush.msra.mxu0 0.0
  %742 = vmatpush.msra.mxu0 0.0
  %743 = vmatpush.msra.mxu0 0.0
  %744 = vmatpush.msra.mxu0 0.0
  %745 = vmatpush.msra.mxu0 0.0
  %746 = vmatpush.msra.mxu0 0.0
  %747 = vmatpush.msra.mxu0 0.0
  %748 = vmatpush.msra.mxu0 0.0
  %749 = vmatpush.msra.mxu0 0.0
  %v750 = vand.u32 %v704, 4294901760
  %v751 = vsub.f32 %v704, %v750
  %v752 = vand.u32 %v751, 4294901760
  %v753 = vsub.f32 %v751, %v752
  %v754 = vand.u32 %v753, 4294901760
  %755 = vmatpush.msra.mxu0 %v754
  %v756 = vand.u32 %v703, 4294901760
  %v757 = vsub.f32 %v703, %v756
  %v758 = vand.u32 %v757, 4294901760
  %v759 = vsub.f32 %v757, %v758
  %v760 = vand.u32 %v759, 4294901760
  %761 = vmatpush.msra.mxu0 %v760
  %v762 = vand.u32 %v707, 4294901760
  %763 = vmatmul.f32.gmra.mxu0 %v762
  %v764 = vpop.f32.mrf.mxu0
  %v765 = vadd.f32 %v734, %v764
  %766 = vdwg.mxu0
  %767 = vmatpush.msra.mxu0 0.0
  %768 = vmatpush.msra.mxu0 0.0
  %769 = vmatpush.msra.mxu0 0.0
  %770 = vmatpush.msra.mxu0 0.0
  %771 = vmatpush.msra.mxu0 0.0
  %772 = vmatpush.msra.mxu0 0.0
  %773 = vmatpush.msra.mxu0 0.0
  %774 = vmatpush.msra.mxu0 0.0
  %775 = vmatpush.msra.mxu0 0.0
  %776 = vmatpush.msra.mxu0 0.0
  %777 = vmatpush.msra.mxu0 0.0
  %778 = vmatpush.msra.mxu0 0.0
  %779 = vmatpush.msra.mxu0 0.0
  %780 = vmatpush.msra.mxu0 0.0
  %v781 = vand.u32 %v704, 4294901760
  %v782 = vsub.f32 %v704, %v781
  %783 = vmatpush.msra.mxu0 %v782
  %v784 = vand.u32 %v703, 4294901760
  %v785 = vsub.f32 %v703, %v784
  %786 = vmatpush.msra.mxu0 %v785
  %v787 = vand.u32 %v707, 4294901760
  %v788 = vsub.f32 %v707, %v787
  %789 = vmatmul.f32.gmra.mxu0 %v788
  %v790 = vpop.f32.mrf.mxu0
  %v791 = vadd.f32 %v765, %v790
  %792 = vdwg.mxu0
  %793 = vmatpush.msra.mxu0 0.0
  %794 = vmatpush.msra.mxu0 0.0
  %795 = vmatpush.msra.mxu0 0.0
  %796 = vmatpush.msra.mxu0 0.0
  %797 = vmatpush.msra.mxu0 0.0
  %798 = vmatpush.msra.mxu0 0.0
  %799 = vmatpush.msra.mxu0 0.0
  %800 = vmatpush.msra.mxu0 0.0
  %801 = vmatpush.msra.mxu0 0.0
  %802 = vmatpush.msra.mxu0 0.0
  %803 = vmatpush.msra.mxu0 0.0
  %804 = vmatpush.msra.mxu0 0.0
  %805 = vmatpush.msra.mxu0 0.0
  %806 = vmatpush.msra.mxu0 0.0
  %v807 = vand.u32 %v704, 4294901760
  %808 = vmatpush.msra.mxu0 %v807
  %v809 = vand.u32 %v703, 4294901760
  %810 = vmatpush.msra.mxu0 %v809
  %v811 = vand.u32 %v707, 4294901760
  %v812 = vsub.f32 %v707, %v811
  %v813 = vand.u32 %v812, 4294901760
  %814 = vmatmul.f32.gmra.mxu0 %v813
  %v815 = vpop.f32.mrf.mxu0
  %v816 = vadd.f32 %v791, %v815
  %817 = vdwg.mxu0
  %818 = vmatpush.msra.mxu0 0.0
  %819 = vmatpush.msra.mxu0 0.0
  %820 = vmatpush.msra.mxu0 0.0
  %821 = vmatpush.msra.mxu0 0.0
  %822 = vmatpush.msra.mxu0 0.0
  %823 = vmatpush.msra.mxu0 0.0
  %824 = vmatpush.msra.mxu0 0.0
  %825 = vmatpush.msra.mxu0 0.0
  %826 = vmatpush.msra.mxu0 0.0
  %827 = vmatpush.msra.mxu0 0.0
  %828 = vmatpush.msra.mxu0 0.0
  %829 = vmatpush.msra.mxu0 0.0
  %830 = vmatpush.msra.mxu0 0.0
  %831 = vmatpush.msra.mxu0 0.0
  %v832 = vand.u32 %v704, 4294901760
  %v833 = vsub.f32 %v704, %v832
  %v834 = vand.u32 %v833, 4294901760
  %835 = vmatpush.msra.mxu0 %v834
  %v836 = vand.u32 %v703, 4294901760
  %v837 = vsub.f32 %v703, %v836
  %v838 = vand.u32 %v837, 4294901760
  %839 = vmatpush.msra.mxu0 %v838
  %v840 = vand.u32 %v707, 4294901760
  %841 = vmatmul.f32.gmra.mxu0 %v840
  %v842 = vpop.f32.mrf.mxu0
  %v843 = vadd.f32 %v816, %v842
  %844 = vdwg.mxu0
  %845 = vmatpush.msra.mxu0 0.0
  %846 = vmatpush.msra.mxu0 0.0
  %847 = vmatpush.msra.mxu0 0.0
  %848 = vmatpush.msra.mxu0 0.0
  %849 = vmatpush.msra.mxu0 0.0
  %850 = vmatpush.msra.mxu0 0.0
  %851 = vmatpush.msra.mxu0 0.0
  %852 = vmatpush.msra.mxu0 0.0
  %853 = vmatpush.msra.mxu0 0.0
  %854 = vmatpush.msra.mxu0 0.0
  %855 = vmatpush.msra.mxu0 0.0
  %856 = vmatpush.msra.mxu0 0.0
  %857 = vmatpush.msra.mxu0 0.0
  %858 = vmatpush.msra.mxu0 0.0
  %v859 = vand.u32 %v704, 4294901760
  %860 = vmatpush.msra.mxu0 %v859
  %v861 = vand.u32 %v703, 4294901760
  %862 = vmatpush.msra.mxu0 %v861
  %v863 = vand.u32 %v707, 4294901760
  %864 = vmatmul.f32.gmra.mxu0 %v863
  %v865 = vpop.f32.mrf.mxu0
  %v866 = vadd.f32 %v843, %v865
  %867 = vdwg.mxu0
  %v868 = vmul.f32 %v866, 0.06666667
  %v869 = vld [vmem:[%s6] sm:$0xff]
  %vm870 = vcmask 64512
  %v872 = vsel %vm870, %v378, 0
  %874 = vmatpush.msra.mxu0 0.0
  %875 = vmatpush.msra.mxu0 0.0
  %876 = vmatpush.msra.mxu0 0.0
  %877 = vmatpush.msra.mxu0 0.0
  %878 = vmatpush.msra.mxu0 0.0
  %879 = vmatpush.msra.mxu0 0.0
  %880 = vmatpush.msra.mxu0 0.0
  %881 = vmatpush.msra.mxu0 0.0
  %882 = vmatpush.msra.mxu0 0.0
  %883 = vmatpush.msra.mxu0 0.0
  %884 = vmatpush.msra.mxu0 0.0
  %885 = vmatpush.msra.mxu0 0.0
  %886 = vmatpush.msra.mxu0 0.0
  %887 = vmatpush.msra.mxu0 0.0
  %888 = vmatpush.msra.mxu0 0.0
  %v889 = vand.u32 %v869, 4294901760
  %890 = vmatpush.msra.mxu0 %v889
  %v891 = vand.u32 %v872, 4294901760
  %v892 = vsub.f32 %v872, %v891
  %v893 = vand.u32 %v892, 4294901760
  %v894 = vsub.f32 %v892, %v893
  %v895 = vand.u32 %v894, 4294901760
  %896 = vmatmul.f32.gmra.mxu0 %v895
  %v897 = vpop.f32.mrf.mxu0
  %v898 = vadd.f32 0.0, %v897
  %899 = vdwg.mxu0
  %900 = vmatpush.msra.mxu0 0.0
  %901 = vmatpush.msra.mxu0 0.0
  %902 = vmatpush.msra.mxu0 0.0
  %903 = vmatpush.msra.mxu0 0.0
  %904 = vmatpush.msra.mxu0 0.0
  %905 = vmatpush.msra.mxu0 0.0
  %906 = vmatpush.msra.mxu0 0.0
  %907 = vmatpush.msra.mxu0 0.0
  %908 = vmatpush.msra.mxu0 0.0
  %909 = vmatpush.msra.mxu0 0.0
  %910 = vmatpush.msra.mxu0 0.0
  %911 = vmatpush.msra.mxu0 0.0
  %912 = vmatpush.msra.mxu0 0.0
  %913 = vmatpush.msra.mxu0 0.0
  %914 = vmatpush.msra.mxu0 0.0
  %v915 = vand.u32 %v869, 4294901760
  %v916 = vsub.f32 %v869, %v915
  %v917 = vand.u32 %v916, 4294901760
  %v918 = vsub.f32 %v916, %v917
  %v919 = vand.u32 %v918, 4294901760
  %920 = vmatpush.msra.mxu0 %v919
  %v921 = vand.u32 %v872, 4294901760
  %922 = vmatmul.f32.gmra.mxu0 %v921
  %v923 = vpop.f32.mrf.mxu0
  %v924 = vadd.f32 %v898, %v923
  %925 = vdwg.mxu0
  %926 = vmatpush.msra.mxu0 0.0
  %927 = vmatpush.msra.mxu0 0.0
  %928 = vmatpush.msra.mxu0 0.0
  %929 = vmatpush.msra.mxu0 0.0
  %930 = vmatpush.msra.mxu0 0.0
  %931 = vmatpush.msra.mxu0 0.0
  %932 = vmatpush.msra.mxu0 0.0
  %933 = vmatpush.msra.mxu0 0.0
  %934 = vmatpush.msra.mxu0 0.0
  %935 = vmatpush.msra.mxu0 0.0
  %936 = vmatpush.msra.mxu0 0.0
  %937 = vmatpush.msra.mxu0 0.0
  %938 = vmatpush.msra.mxu0 0.0
  %939 = vmatpush.msra.mxu0 0.0
  %940 = vmatpush.msra.mxu0 0.0
  %v941 = vand.u32 %v869, 4294901760
  %v942 = vsub.f32 %v869, %v941
  %943 = vmatpush.msra.mxu0 %v942
  %v944 = vand.u32 %v872, 4294901760
  %v945 = vsub.f32 %v872, %v944
  %946 = vmatmul.f32.gmra.mxu0 %v945
  %v947 = vpop.f32.mrf.mxu0
  %v948 = vadd.f32 %v924, %v947
  %949 = vdwg.mxu0
  %950 = vmatpush.msra.mxu0 0.0
  %951 = vmatpush.msra.mxu0 0.0
  %952 = vmatpush.msra.mxu0 0.0
  %953 = vmatpush.msra.mxu0 0.0
  %954 = vmatpush.msra.mxu0 0.0
  %955 = vmatpush.msra.mxu0 0.0
  %956 = vmatpush.msra.mxu0 0.0
  %957 = vmatpush.msra.mxu0 0.0
  %958 = vmatpush.msra.mxu0 0.0
  %959 = vmatpush.msra.mxu0 0.0
  %960 = vmatpush.msra.mxu0 0.0
  %961 = vmatpush.msra.mxu0 0.0
  %962 = vmatpush.msra.mxu0 0.0
  %963 = vmatpush.msra.mxu0 0.0
  %964 = vmatpush.msra.mxu0 0.0
  %v965 = vand.u32 %v869, 4294901760
  %966 = vmatpush.msra.mxu0 %v965
  %v967 = vand.u32 %v872, 4294901760
  %v968 = vsub.f32 %v872, %v967
  %v969 = vand.u32 %v968, 4294901760
  %970 = vmatmul.f32.gmra.mxu0 %v969
  %v971 = vpop.f32.mrf.mxu0
  %v972 = vadd.f32 %v948, %v971
  %973 = vdwg.mxu0
  %974 = vmatpush.msra.mxu0 0.0
  %975 = vmatpush.msra.mxu0 0.0
  %976 = vmatpush.msra.mxu0 0.0
  %977 = vmatpush.msra.mxu0 0.0
  %978 = vmatpush.msra.mxu0 0.0
  %979 = vmatpush.msra.mxu0 0.0
  %980 = vmatpush.msra.mxu0 0.0
  %981 = vmatpush.msra.mxu0 0.0
  %982 = vmatpush.msra.mxu0 0.0
  %983 = vmatpush.msra.mxu0 0.0
  %984 = vmatpush.msra.mxu0 0.0
  %985 = vmatpush.msra.mxu0 0.0
  %986 = vmatpush.msra.mxu0 0.0
  %987 = vmatpush.msra.mxu0 0.0
  %988 = vmatpush.msra.mxu0 0.0
  %v989 = vand.u32 %v869, 4294901760
  %v990 = vsub.f32 %v869, %v989
  %v991 = vand.u32 %v990, 4294901760
  %992 = vmatpush.msra.mxu0 %v991
  %v993 = vand.u32 %v872, 4294901760
  %994 = vmatmul.f32.gmra.mxu0 %v993
  %v995 = vpop.f32.mrf.mxu0
  %v996 = vadd.f32 %v972, %v995
  %997 = vdwg.mxu0
  %998 = vmatpush.msra.mxu0 0.0
  %999 = vmatpush.msra.mxu0 0.0
  %1000 = vmatpush.msra.mxu0 0.0
  %1001 = vmatpush.msra.mxu0 0.0
  %1002 = vmatpush.msra.mxu0 0.0
  %1003 = vmatpush.msra.mxu0 0.0
  %1004 = vmatpush.msra.mxu0 0.0
  %1005 = vmatpush.msra.mxu0 0.0
  %1006 = vmatpush.msra.mxu0 0.0
  %1007 = vmatpush.msra.mxu0 0.0
  %1008 = vmatpush.msra.mxu0 0.0
  %1009 = vmatpush.msra.mxu0 0.0
  %1010 = vmatpush.msra.mxu0 0.0
  %1011 = vmatpush.msra.mxu0 0.0
  %1012 = vmatpush.msra.mxu0 0.0
  %v1013 = vand.u32 %v869, 4294901760
  %1014 = vmatpush.msra.mxu0 %v1013
  %v1015 = vand.u32 %v872, 4294901760
  %1016 = vmatmul.f32.gmra.mxu0 %v1015
  %v1017 = vpop.f32.mrf.mxu0
  %v1018 = vadd.f32 %v996, %v1017
  %1019 = vdwg.mxu0
  %v1020 = vmul.f32 %v1018, 0.06666667
  %v1021 = vld [vmem:[%s8] sm:$0xff]
  %v1022 = vld [vmem:[%s8 + $0x8] sm:$0xff]
  %v1023 = vld [vmem:[%s8 + $0x10] sm:$0xff]
  %v1024 = vld [vmem:[%s8 + $0x18] sm:$0xff]
  %v1025 = vld [vmem:[%s9] sm:$0xff]
  %v1027 = vsel %vm870, %v868, 0
  %1029 = vmatpush.msra.mxu0 0.0
  %1030 = vmatpush.msra.mxu0 0.0
  %1031 = vmatpush.msra.mxu0 0.0
  %1032 = vmatpush.msra.mxu0 0.0
  %1033 = vmatpush.msra.mxu0 0.0
  %1034 = vmatpush.msra.mxu0 0.0
  %1035 = vmatpush.msra.mxu0 0.0
  %1036 = vmatpush.msra.mxu0 0.0
  %1037 = vmatpush.msra.mxu0 0.0
  %1038 = vmatpush.msra.mxu0 0.0
  %1039 = vmatpush.msra.mxu0 0.0
  %1040 = vmatpush.msra.mxu0 0.0
  %1041 = vmatpush.msra.mxu0 0.0
  %1042 = vmatpush.msra.mxu0 0.0
  %1043 = vmatpush.msra.mxu0 0.0
  %v1044 = vand.u32 %v1025, 4294901760
  %1045 = vmatpush.msra.mxu0 %v1044
  %v1046 = vand.u32 %v1027, 4294901760
  %v1047 = vsub.f32 %v1027, %v1046
  %v1048 = vand.u32 %v1047, 4294901760
  %v1049 = vsub.f32 %v1047, %v1048
  %v1050 = vand.u32 %v1049, 4294901760
  %1051 = vmatmul.f32.gmra.mxu0 %v1050
  %v1052 = vpop.f32.mrf.mxu0
  %v1053 = vadd.f32 0.0, %v1052
  %1054 = vdwg.mxu0
  %1055 = vmatpush.msra.mxu0 0.0
  %1056 = vmatpush.msra.mxu0 0.0
  %1057 = vmatpush.msra.mxu0 0.0
  %1058 = vmatpush.msra.mxu0 0.0
  %1059 = vmatpush.msra.mxu0 0.0
  %1060 = vmatpush.msra.mxu0 0.0
  %1061 = vmatpush.msra.mxu0 0.0
  %1062 = vmatpush.msra.mxu0 0.0
  %1063 = vmatpush.msra.mxu0 0.0
  %1064 = vmatpush.msra.mxu0 0.0
  %1065 = vmatpush.msra.mxu0 0.0
  %1066 = vmatpush.msra.mxu0 0.0
  %1067 = vmatpush.msra.mxu0 0.0
  %1068 = vmatpush.msra.mxu0 0.0
  %1069 = vmatpush.msra.mxu0 0.0
  %v1070 = vand.u32 %v1025, 4294901760
  %v1071 = vsub.f32 %v1025, %v1070
  %v1072 = vand.u32 %v1071, 4294901760
  %v1073 = vsub.f32 %v1071, %v1072
  %v1074 = vand.u32 %v1073, 4294901760
  %1075 = vmatpush.msra.mxu0 %v1074
  %v1076 = vand.u32 %v1027, 4294901760
  %1077 = vmatmul.f32.gmra.mxu0 %v1076
  %v1078 = vpop.f32.mrf.mxu0
  %v1079 = vadd.f32 %v1053, %v1078
  %1080 = vdwg.mxu0
  %1081 = vmatpush.msra.mxu0 0.0
  %1082 = vmatpush.msra.mxu0 0.0
  %1083 = vmatpush.msra.mxu0 0.0
  %1084 = vmatpush.msra.mxu0 0.0
  %1085 = vmatpush.msra.mxu0 0.0
  %1086 = vmatpush.msra.mxu0 0.0
  %1087 = vmatpush.msra.mxu0 0.0
  %1088 = vmatpush.msra.mxu0 0.0
  %1089 = vmatpush.msra.mxu0 0.0
  %1090 = vmatpush.msra.mxu0 0.0
  %1091 = vmatpush.msra.mxu0 0.0
  %1092 = vmatpush.msra.mxu0 0.0
  %1093 = vmatpush.msra.mxu0 0.0
  %1094 = vmatpush.msra.mxu0 0.0
  %1095 = vmatpush.msra.mxu0 0.0
  %v1096 = vand.u32 %v1025, 4294901760
  %v1097 = vsub.f32 %v1025, %v1096
  %1098 = vmatpush.msra.mxu0 %v1097
  %v1099 = vand.u32 %v1027, 4294901760
  %v1100 = vsub.f32 %v1027, %v1099
  %1101 = vmatmul.f32.gmra.mxu0 %v1100
  %v1102 = vpop.f32.mrf.mxu0
  %v1103 = vadd.f32 %v1079, %v1102
  %1104 = vdwg.mxu0
  %1105 = vmatpush.msra.mxu0 0.0
  %1106 = vmatpush.msra.mxu0 0.0
  %1107 = vmatpush.msra.mxu0 0.0
  %1108 = vmatpush.msra.mxu0 0.0
  %1109 = vmatpush.msra.mxu0 0.0
  %1110 = vmatpush.msra.mxu0 0.0
  %1111 = vmatpush.msra.mxu0 0.0
  %1112 = vmatpush.msra.mxu0 0.0
  %1113 = vmatpush.msra.mxu0 0.0
  %1114 = vmatpush.msra.mxu0 0.0
  %1115 = vmatpush.msra.mxu0 0.0
  %1116 = vmatpush.msra.mxu0 0.0
  %1117 = vmatpush.msra.mxu0 0.0
  %1118 = vmatpush.msra.mxu0 0.0
  %1119 = vmatpush.msra.mxu0 0.0
  %v1120 = vand.u32 %v1025, 4294901760
  %1121 = vmatpush.msra.mxu0 %v1120
  %v1122 = vand.u32 %v1027, 4294901760
  %v1123 = vsub.f32 %v1027, %v1122
  %v1124 = vand.u32 %v1123, 4294901760
  %1125 = vmatmul.f32.gmra.mxu0 %v1124
  %v1126 = vpop.f32.mrf.mxu0
  %v1127 = vadd.f32 %v1103, %v1126
  %1128 = vdwg.mxu0
  %1129 = vmatpush.msra.mxu0 0.0
  %1130 = vmatpush.msra.mxu0 0.0
  %1131 = vmatpush.msra.mxu0 0.0
  %1132 = vmatpush.msra.mxu0 0.0
  %1133 = vmatpush.msra.mxu0 0.0
  %1134 = vmatpush.msra.mxu0 0.0
  %1135 = vmatpush.msra.mxu0 0.0
  %1136 = vmatpush.msra.mxu0 0.0
  %1137 = vmatpush.msra.mxu0 0.0
  %1138 = vmatpush.msra.mxu0 0.0
  %1139 = vmatpush.msra.mxu0 0.0
  %1140 = vmatpush.msra.mxu0 0.0
  %1141 = vmatpush.msra.mxu0 0.0
  %1142 = vmatpush.msra.mxu0 0.0
  %1143 = vmatpush.msra.mxu0 0.0
  %v1144 = vand.u32 %v1025, 4294901760
  %v1145 = vsub.f32 %v1025, %v1144
  %v1146 = vand.u32 %v1145, 4294901760
  %1147 = vmatpush.msra.mxu0 %v1146
  %v1148 = vand.u32 %v1027, 4294901760
  %1149 = vmatmul.f32.gmra.mxu0 %v1148
  %v1150 = vpop.f32.mrf.mxu0
  %v1151 = vadd.f32 %v1127, %v1150
  %1152 = vdwg.mxu0
  %1153 = vmatpush.msra.mxu0 0.0
  %1154 = vmatpush.msra.mxu0 0.0
  %1155 = vmatpush.msra.mxu0 0.0
  %1156 = vmatpush.msra.mxu0 0.0
  %1157 = vmatpush.msra.mxu0 0.0
  %1158 = vmatpush.msra.mxu0 0.0
  %1159 = vmatpush.msra.mxu0 0.0
  %1160 = vmatpush.msra.mxu0 0.0
  %1161 = vmatpush.msra.mxu0 0.0
  %1162 = vmatpush.msra.mxu0 0.0
  %1163 = vmatpush.msra.mxu0 0.0
  %1164 = vmatpush.msra.mxu0 0.0
  %1165 = vmatpush.msra.mxu0 0.0
  %1166 = vmatpush.msra.mxu0 0.0
  %1167 = vmatpush.msra.mxu0 0.0
  %v1168 = vand.u32 %v1025, 4294901760
  %1169 = vmatpush.msra.mxu0 %v1168
  %v1170 = vand.u32 %v1027, 4294901760
  %1171 = vmatmul.f32.gmra.mxu0 %v1170
  %v1172 = vpop.f32.mrf.mxu0
  %v1173 = vadd.f32 %v1151, %v1172
  %1174 = vdwg.mxu0
  %vm1175 = vcmask 261120
  %v1177 = vsel %vm1175, %v702, 0
  %1179 = vmatpush.msra.mxu0 0.0
  %1180 = vmatpush.msra.mxu0 0.0
  %1181 = vmatpush.msra.mxu0 0.0
  %1182 = vmatpush.msra.mxu0 0.0
  %1183 = vmatpush.msra.mxu0 0.0
  %1184 = vmatpush.msra.mxu0 0.0
  %1185 = vmatpush.msra.mxu0 0.0
  %1186 = vmatpush.msra.mxu0 0.0
  %1187 = vmatpush.msra.mxu0 0.0
  %1188 = vmatpush.msra.mxu0 0.0
  %1189 = vmatpush.msra.mxu0 0.0
  %1190 = vmatpush.msra.mxu0 0.0
  %v1191 = vand.u32 %v1024, 4294901760
  %1192 = vmatpush.msra.mxu0 %v1191
  %v1193 = vand.u32 %v1023, 4294901760
  %1194 = vmatpush.msra.mxu0 %v1193
  %v1195 = vand.u32 %v1022, 4294901760
  %1196 = vmatpush.msra.mxu0 %v1195
  %v1197 = vand.u32 %v1021, 4294901760
  %1198 = vmatpush.msra.mxu0 %v1197
  %v1199 = vand.u32 %v1177, 4294901760
  %v1200 = vsub.f32 %v1177, %v1199
  %v1201 = vand.u32 %v1200, 4294901760
  %v1202 = vsub.f32 %v1200, %v1201
  %v1203 = vand.u32 %v1202, 4294901760
  %1204 = vmatmul.f32.gmra.mxu0 %v1203
  %v1205 = vpop.f32.mrf.mxu0
  %v1206 = vadd.f32 %v1173, %v1205
  %1207 = vdwg.mxu0
  %1208 = vmatpush.msra.mxu0 0.0
  %1209 = vmatpush.msra.mxu0 0.0
  %1210 = vmatpush.msra.mxu0 0.0
  %1211 = vmatpush.msra.mxu0 0.0
  %1212 = vmatpush.msra.mxu0 0.0
  %1213 = vmatpush.msra.mxu0 0.0
  %1214 = vmatpush.msra.mxu0 0.0
  %1215 = vmatpush.msra.mxu0 0.0
  %1216 = vmatpush.msra.mxu0 0.0
  %1217 = vmatpush.msra.mxu0 0.0
  %1218 = vmatpush.msra.mxu0 0.0
  %1219 = vmatpush.msra.mxu0 0.0
  %v1220 = vand.u32 %v1024, 4294901760
  %v1221 = vsub.f32 %v1024, %v1220
  %v1222 = vand.u32 %v1221, 4294901760
  %v1223 = vsub.f32 %v1221, %v1222
  %v1224 = vand.u32 %v1223, 4294901760
  %1225 = vmatpush.msra.mxu0 %v1224
  %v1226 = vand.u32 %v1023, 4294901760
  %v1227 = vsub.f32 %v1023, %v1226
  %v1228 = vand.u32 %v1227, 4294901760
  %v1229 = vsub.f32 %v1227, %v1228
  %v1230 = vand.u32 %v1229, 4294901760
  %1231 = vmatpush.msra.mxu0 %v1230
  %v1232 = vand.u32 %v1022, 4294901760
  %v1233 = vsub.f32 %v1022, %v1232
  %v1234 = vand.u32 %v1233, 4294901760
  %v1235 = vsub.f32 %v1233, %v1234
  %v1236 = vand.u32 %v1235, 4294901760
  %1237 = vmatpush.msra.mxu0 %v1236
  %v1238 = vand.u32 %v1021, 4294901760
  %v1239 = vsub.f32 %v1021, %v1238
  %v1240 = vand.u32 %v1239, 4294901760
  %v1241 = vsub.f32 %v1239, %v1240
  %v1242 = vand.u32 %v1241, 4294901760
  %1243 = vmatpush.msra.mxu0 %v1242
  %v1244 = vand.u32 %v1177, 4294901760
  %1245 = vmatmul.f32.gmra.mxu0 %v1244
  %v1246 = vpop.f32.mrf.mxu0
  %v1247 = vadd.f32 %v1206, %v1246
  %1248 = vdwg.mxu0
  %1249 = vmatpush.msra.mxu0 0.0
  %1250 = vmatpush.msra.mxu0 0.0
  %1251 = vmatpush.msra.mxu0 0.0
  %1252 = vmatpush.msra.mxu0 0.0
  %1253 = vmatpush.msra.mxu0 0.0
  %1254 = vmatpush.msra.mxu0 0.0
  %1255 = vmatpush.msra.mxu0 0.0
  %1256 = vmatpush.msra.mxu0 0.0
  %1257 = vmatpush.msra.mxu0 0.0
  %1258 = vmatpush.msra.mxu0 0.0
  %1259 = vmatpush.msra.mxu0 0.0
  %1260 = vmatpush.msra.mxu0 0.0
  %v1261 = vand.u32 %v1024, 4294901760
  %v1262 = vsub.f32 %v1024, %v1261
  %1263 = vmatpush.msra.mxu0 %v1262
  %v1264 = vand.u32 %v1023, 4294901760
  %v1265 = vsub.f32 %v1023, %v1264
  %1266 = vmatpush.msra.mxu0 %v1265
  %v1267 = vand.u32 %v1022, 4294901760
  %v1268 = vsub.f32 %v1022, %v1267
  %1269 = vmatpush.msra.mxu0 %v1268
  %v1270 = vand.u32 %v1021, 4294901760
  %v1271 = vsub.f32 %v1021, %v1270
  %1272 = vmatpush.msra.mxu0 %v1271
  %v1273 = vand.u32 %v1177, 4294901760
  %v1274 = vsub.f32 %v1177, %v1273
  %1275 = vmatmul.f32.gmra.mxu0 %v1274
  %v1276 = vpop.f32.mrf.mxu0
  %v1277 = vadd.f32 %v1247, %v1276
  %1278 = vdwg.mxu0
  %1279 = vmatpush.msra.mxu0 0.0
  %1280 = vmatpush.msra.mxu0 0.0
  %1281 = vmatpush.msra.mxu0 0.0
  %1282 = vmatpush.msra.mxu0 0.0
  %1283 = vmatpush.msra.mxu0 0.0
  %1284 = vmatpush.msra.mxu0 0.0
  %1285 = vmatpush.msra.mxu0 0.0
  %1286 = vmatpush.msra.mxu0 0.0
  %1287 = vmatpush.msra.mxu0 0.0
  %1288 = vmatpush.msra.mxu0 0.0
  %1289 = vmatpush.msra.mxu0 0.0
  %1290 = vmatpush.msra.mxu0 0.0
  %v1291 = vand.u32 %v1024, 4294901760
  %1292 = vmatpush.msra.mxu0 %v1291
  %v1293 = vand.u32 %v1023, 4294901760
  %1294 = vmatpush.msra.mxu0 %v1293
  %v1295 = vand.u32 %v1022, 4294901760
  %1296 = vmatpush.msra.mxu0 %v1295
  %v1297 = vand.u32 %v1021, 4294901760
  %1298 = vmatpush.msra.mxu0 %v1297
  %v1299 = vand.u32 %v1177, 4294901760
  %v1300 = vsub.f32 %v1177, %v1299
  %v1301 = vand.u32 %v1300, 4294901760
  %1302 = vmatmul.f32.gmra.mxu0 %v1301
  %v1303 = vpop.f32.mrf.mxu0
  %v1304 = vadd.f32 %v1277, %v1303
  %1305 = vdwg.mxu0
  %1306 = vmatpush.msra.mxu0 0.0
  %1307 = vmatpush.msra.mxu0 0.0
  %1308 = vmatpush.msra.mxu0 0.0
  %1309 = vmatpush.msra.mxu0 0.0
  %1310 = vmatpush.msra.mxu0 0.0
  %1311 = vmatpush.msra.mxu0 0.0
  %1312 = vmatpush.msra.mxu0 0.0
  %1313 = vmatpush.msra.mxu0 0.0
  %1314 = vmatpush.msra.mxu0 0.0
  %1315 = vmatpush.msra.mxu0 0.0
  %1316 = vmatpush.msra.mxu0 0.0
  %1317 = vmatpush.msra.mxu0 0.0
  %v1318 = vand.u32 %v1024, 4294901760
  %v1319 = vsub.f32 %v1024, %v1318
  %v1320 = vand.u32 %v1319, 4294901760
  %1321 = vmatpush.msra.mxu0 %v1320
  %v1322 = vand.u32 %v1023, 4294901760
  %v1323 = vsub.f32 %v1023, %v1322
  %v1324 = vand.u32 %v1323, 4294901760
  %1325 = vmatpush.msra.mxu0 %v1324
  %v1326 = vand.u32 %v1022, 4294901760
  %v1327 = vsub.f32 %v1022, %v1326
  %v1328 = vand.u32 %v1327, 4294901760
  %1329 = vmatpush.msra.mxu0 %v1328
  %v1330 = vand.u32 %v1021, 4294901760
  %v1331 = vsub.f32 %v1021, %v1330
  %v1332 = vand.u32 %v1331, 4294901760
  %1333 = vmatpush.msra.mxu0 %v1332
  %v1334 = vand.u32 %v1177, 4294901760
  %1335 = vmatmul.f32.gmra.mxu0 %v1334
  %v1336 = vpop.f32.mrf.mxu0
  %v1337 = vadd.f32 %v1304, %v1336
  %1338 = vdwg.mxu0
  %1339 = vmatpush.msra.mxu0 0.0
  %1340 = vmatpush.msra.mxu0 0.0
  %1341 = vmatpush.msra.mxu0 0.0
  %1342 = vmatpush.msra.mxu0 0.0
  %1343 = vmatpush.msra.mxu0 0.0
  %1344 = vmatpush.msra.mxu0 0.0
  %1345 = vmatpush.msra.mxu0 0.0
  %1346 = vmatpush.msra.mxu0 0.0
  %1347 = vmatpush.msra.mxu0 0.0
  %1348 = vmatpush.msra.mxu0 0.0
  %1349 = vmatpush.msra.mxu0 0.0
  %1350 = vmatpush.msra.mxu0 0.0
  %v1351 = vand.u32 %v1024, 4294901760
  %1352 = vmatpush.msra.mxu0 %v1351
  %v1353 = vand.u32 %v1023, 4294901760
  %1354 = vmatpush.msra.mxu0 %v1353
  %v1355 = vand.u32 %v1022, 4294901760
  %1356 = vmatpush.msra.mxu0 %v1355
  %v1357 = vand.u32 %v1021, 4294901760
  %1358 = vmatpush.msra.mxu0 %v1357
  %v1359 = vand.u32 %v1177, 4294901760
  %1360 = vmatmul.f32.gmra.mxu0 %v1359
  %v1361 = vpop.f32.mrf.mxu0
  %v1362 = vadd.f32 %v1337, %v1361
  %1363 = vdwg.mxu0
  %v1364 = vld [vmem:[%s10] sm:$0xff]
  %v1366 = vsel %vm870, %v1020, 0
  %1368 = vmatpush.msra.mxu0 0.0
  %1369 = vmatpush.msra.mxu0 0.0
  %1370 = vmatpush.msra.mxu0 0.0
  %1371 = vmatpush.msra.mxu0 0.0
  %1372 = vmatpush.msra.mxu0 0.0
  %1373 = vmatpush.msra.mxu0 0.0
  %1374 = vmatpush.msra.mxu0 0.0
  %1375 = vmatpush.msra.mxu0 0.0
  %1376 = vmatpush.msra.mxu0 0.0
  %1377 = vmatpush.msra.mxu0 0.0
  %1378 = vmatpush.msra.mxu0 0.0
  %1379 = vmatpush.msra.mxu0 0.0
  %1380 = vmatpush.msra.mxu0 0.0
  %1381 = vmatpush.msra.mxu0 0.0
  %1382 = vmatpush.msra.mxu0 0.0
  %v1383 = vand.u32 %v1364, 4294901760
  %1384 = vmatpush.msra.mxu0 %v1383
  %v1385 = vand.u32 %v1366, 4294901760
  %v1386 = vsub.f32 %v1366, %v1385
  %v1387 = vand.u32 %v1386, 4294901760
  %v1388 = vsub.f32 %v1386, %v1387
  %v1389 = vand.u32 %v1388, 4294901760
  %1390 = vmatmul.f32.gmra.mxu0 %v1389
  %v1391 = vpop.f32.mrf.mxu0
  %v1392 = vadd.f32 0.0, %v1391
  %1393 = vdwg.mxu0
  %1394 = vmatpush.msra.mxu0 0.0
  %1395 = vmatpush.msra.mxu0 0.0
  %1396 = vmatpush.msra.mxu0 0.0
  %1397 = vmatpush.msra.mxu0 0.0
  %1398 = vmatpush.msra.mxu0 0.0
  %1399 = vmatpush.msra.mxu0 0.0
  %1400 = vmatpush.msra.mxu0 0.0
  %1401 = vmatpush.msra.mxu0 0.0
  %1402 = vmatpush.msra.mxu0 0.0
  %1403 = vmatpush.msra.mxu0 0.0
  %1404 = vmatpush.msra.mxu0 0.0
  %1405 = vmatpush.msra.mxu0 0.0
  %1406 = vmatpush.msra.mxu0 0.0
  %1407 = vmatpush.msra.mxu0 0.0
  %1408 = vmatpush.msra.mxu0 0.0
  %v1409 = vand.u32 %v1364, 4294901760
  %v1410 = vsub.f32 %v1364, %v1409
  %v1411 = vand.u32 %v1410, 4294901760
  %v1412 = vsub.f32 %v1410, %v1411
  %v1413 = vand.u32 %v1412, 4294901760
  %1414 = vmatpush.msra.mxu0 %v1413
  %v1415 = vand.u32 %v1366, 4294901760
  %1416 = vmatmul.f32.gmra.mxu0 %v1415
  %v1417 = vpop.f32.mrf.mxu0
  %v1418 = vadd.f32 %v1392, %v1417
  %1419 = vdwg.mxu0
  %1420 = vmatpush.msra.mxu0 0.0
  %1421 = vmatpush.msra.mxu0 0.0
  %1422 = vmatpush.msra.mxu0 0.0
  %1423 = vmatpush.msra.mxu0 0.0
  %1424 = vmatpush.msra.mxu0 0.0
  %1425 = vmatpush.msra.mxu0 0.0
  %1426 = vmatpush.msra.mxu0 0.0
  %1427 = vmatpush.msra.mxu0 0.0
  %1428 = vmatpush.msra.mxu0 0.0
  %1429 = vmatpush.msra.mxu0 0.0
  %1430 = vmatpush.msra.mxu0 0.0
  %1431 = vmatpush.msra.mxu0 0.0
  %1432 = vmatpush.msra.mxu0 0.0
  %1433 = vmatpush.msra.mxu0 0.0
  %1434 = vmatpush.msra.mxu0 0.0
  %v1435 = vand.u32 %v1364, 4294901760
  %v1436 = vsub.f32 %v1364, %v1435
  %1437 = vmatpush.msra.mxu0 %v1436
  %v1438 = vand.u32 %v1366, 4294901760
  %v1439 = vsub.f32 %v1366, %v1438
  %1440 = vmatmul.f32.gmra.mxu0 %v1439
  %v1441 = vpop.f32.mrf.mxu0
  %v1442 = vadd.f32 %v1418, %v1441
  %1443 = vdwg.mxu0
  %1444 = vmatpush.msra.mxu0 0.0
  %1445 = vmatpush.msra.mxu0 0.0
  %1446 = vmatpush.msra.mxu0 0.0
  %1447 = vmatpush.msra.mxu0 0.0
  %1448 = vmatpush.msra.mxu0 0.0
  %1449 = vmatpush.msra.mxu0 0.0
  %1450 = vmatpush.msra.mxu0 0.0
  %1451 = vmatpush.msra.mxu0 0.0
  %1452 = vmatpush.msra.mxu0 0.0
  %1453 = vmatpush.msra.mxu0 0.0
  %1454 = vmatpush.msra.mxu0 0.0
  %1455 = vmatpush.msra.mxu0 0.0
  %1456 = vmatpush.msra.mxu0 0.0
  %1457 = vmatpush.msra.mxu0 0.0
  %1458 = vmatpush.msra.mxu0 0.0
  %v1459 = vand.u32 %v1364, 4294901760
  %1460 = vmatpush.msra.mxu0 %v1459
  %v1461 = vand.u32 %v1366, 4294901760
  %v1462 = vsub.f32 %v1366, %v1461
  %v1463 = vand.u32 %v1462, 4294901760
  %1464 = vmatmul.f32.gmra.mxu0 %v1463
  %v1465 = vpop.f32.mrf.mxu0
  %v1466 = vadd.f32 %v1442, %v1465
  %1467 = vdwg.mxu0
  %1468 = vmatpush.msra.mxu0 0.0
  %1469 = vmatpush.msra.mxu0 0.0
  %1470 = vmatpush.msra.mxu0 0.0
  %1471 = vmatpush.msra.mxu0 0.0
  %1472 = vmatpush.msra.mxu0 0.0
  %1473 = vmatpush.msra.mxu0 0.0
  %1474 = vmatpush.msra.mxu0 0.0
  %1475 = vmatpush.msra.mxu0 0.0
  %1476 = vmatpush.msra.mxu0 0.0
  %1477 = vmatpush.msra.mxu0 0.0
  %1478 = vmatpush.msra.mxu0 0.0
  %1479 = vmatpush.msra.mxu0 0.0
  %1480 = vmatpush.msra.mxu0 0.0
  %1481 = vmatpush.msra.mxu0 0.0
  %1482 = vmatpush.msra.mxu0 0.0
  %v1483 = vand.u32 %v1364, 4294901760
  %v1484 = vsub.f32 %v1364, %v1483
  %v1485 = vand.u32 %v1484, 4294901760
  %1486 = vmatpush.msra.mxu0 %v1485
  %v1487 = vand.u32 %v1366, 4294901760
  %1488 = vmatmul.f32.gmra.mxu0 %v1487
  %v1489 = vpop.f32.mrf.mxu0
  %v1490 = vadd.f32 %v1466, %v1489
  %1491 = vdwg.mxu0
  %1492 = vmatpush.msra.mxu0 0.0
  %1493 = vmatpush.msra.mxu0 0.0
  %1494 = vmatpush.msra.mxu0 0.0
  %1495 = vmatpush.msra.mxu0 0.0
  %1496 = vmatpush.msra.mxu0 0.0
  %1497 = vmatpush.msra.mxu0 0.0
  %1498 = vmatpush.msra.mxu0 0.0
  %1499 = vmatpush.msra.mxu0 0.0
  %1500 = vmatpush.msra.mxu0 0.0
  %1501 = vmatpush.msra.mxu0 0.0
  %1502 = vmatpush.msra.mxu0 0.0
  %1503 = vmatpush.msra.mxu0 0.0
  %1504 = vmatpush.msra.mxu0 0.0
  %1505 = vmatpush.msra.mxu0 0.0
  %1506 = vmatpush.msra.mxu0 0.0
  %v1507 = vand.u32 %v1364, 4294901760
  %1508 = vmatpush.msra.mxu0 %v1507
  %v1509 = vand.u32 %v1366, 4294901760
  %1510 = vmatmul.f32.gmra.mxu0 %v1509
  %v1511 = vpop.f32.mrf.mxu0
  %v1512 = vadd.f32 %v1490, %v1511
  %1513 = vdwg.mxu0
  %v1514 = vadd.f32 %v1362, %v1512
  %v1515 = vld [vmem:[%s11] sm:$0x1]
  %v1517 = vperm.slane %v1515, 0
  %v1519 = vadd.f32 %v1514, %v1517
  %v1520 = vtanh.pop %v1519
  %v1521 = vld [vmem:[%s3] sm:$0xff]
  %v1522 = vld [vmem:[%s3 + $0x8] sm:$0xff]
  %v1523 = vld [vmem:[%s3 + $0x10] sm:$0xff]
  %v1524 = vld [vmem:[%s3 + $0x18] sm:$0xff]
  %v1525 = vld [vmem:[%s3 + $0x20] sm:$0xff]
  %v1526 = vld [vmem:[%s3 + $0x28] sm:$0xff]
  %v1527 = vld [vmem:[%s3 + $0x30] sm:$0xff]
  %v1528 = vld [vmem:[%s3 + $0x38] sm:$0xff]
  %1529 = vset.pattern.permute.xlu0 0
  %1530 = vperm.xlu0 %1529, %v1521
  %v1531 = vpop.permute.xlu0 %1530
  %1532 = vset.pattern.permute.xlu0 0
  %1533 = vperm.xlu0 %1532, %v1522
  %v1534 = vpop.permute.xlu0 %1533
  %1535 = vset.pattern.permute.xlu0 0
  %1536 = vperm.xlu0 %1535, %v1523
  %v1537 = vpop.permute.xlu0 %1536
  %1538 = vset.pattern.permute.xlu0 0
  %1539 = vperm.xlu0 %1538, %v1524
  %v1540 = vpop.permute.xlu0 %1539
  %1541 = vset.pattern.permute.xlu0 0
  %1542 = vperm.xlu0 %1541, %v1525
  %v1543 = vpop.permute.xlu0 %1542
  %1544 = vset.pattern.permute.xlu0 0
  %1545 = vperm.xlu0 %1544, %v1526
  %v1546 = vpop.permute.xlu0 %1545
  %1547 = vset.pattern.permute.xlu0 0
  %1548 = vperm.xlu0 %1547, %v1527
  %v1549 = vpop.permute.xlu0 %1548
  %1550 = vset.pattern.permute.xlu0 0
  %1551 = vperm.xlu0 %1550, %v1528
  %v1552 = vpop.permute.xlu0 %1551
  %vm1553 = vcmp.eq.s32.totalorder %v1531, %v63
  %vm1554 = vcmp.eq.s32.totalorder %v1534, %v63
  %vm1555 = vcmp.eq.s32.totalorder %v1537, %v63
  %vm1556 = vcmp.eq.s32.totalorder %v1540, %v63
  %vm1557 = vcmp.eq.s32.totalorder %v1543, %v63
  %vm1558 = vcmp.eq.s32.totalorder %v1546, %v63
  %vm1559 = vcmp.eq.s32.totalorder %v1549, %v63
  %vm1560 = vcmp.eq.s32.totalorder %v1552, %v63
  %v1561 = vsel %vm1553, 1, 0
  %v1562 = vsel %vm1554, 1, 0
  %v1563 = vsel %vm1555, 1, 0
  %v1564 = vsel %vm1556, 1, 0
  %v1565 = vsel %vm1557, 1, 0
  %v1566 = vsel %vm1558, 1, 0
  %v1567 = vsel %vm1559, 1, 0
  %v1568 = vsel %vm1560, 1, 0
  %v1569 = vcvt.s32.f32 %v1561
  %v1570 = vcvt.s32.f32 %v1562
  %v1571 = vcvt.s32.f32 %v1563
  %v1572 = vcvt.s32.f32 %v1564
  %v1573 = vcvt.s32.f32 %v1565
  %v1574 = vcvt.s32.f32 %v1566
  %v1575 = vcvt.s32.f32 %v1567
  %v1576 = vcvt.s32.f32 %v1568
  %v1578 = vsel %vm392, %v1569, 0
  %v1581 = vsel %vm392, %v1570, 0
  %v1584 = vsel %vm392, %v1571, 0
  %v1587 = vsel %vm392, %v1572, 0
  %v1590 = vsel %vm392, %v1573, 0
  %v1593 = vsel %vm392, %v1574, 0
  %v1596 = vsel %vm392, %v1575, 0
  %v1599 = vsel %vm392, %v1576, 0
  %1601 = vmatpush.msra.mxu0 0.0
  %1602 = vmatpush.msra.mxu0 0.0
  %1603 = vmatpush.msra.mxu0 0.0
  %v1604 = vand.u32 %v398, 4294901760
  %1605 = vmatpush.msra.mxu0 %v1604
  %v1606 = vand.u32 %v390, 4294901760
  %1607 = vmatpush.msra.mxu0 %v1606
  %v1608 = vand.u32 %v389, 4294901760
  %1609 = vmatpush.msra.mxu0 %v1608
  %v1610 = vand.u32 %v388, 4294901760
  %1611 = vmatpush.msra.mxu0 %v1610
  %v1612 = vand.u32 %v387, 4294901760
  %1613 = vmatpush.msra.mxu0 %v1612
  %v1614 = vand.u32 %v386, 4294901760
  %1615 = vmatpush.msra.mxu0 %v1614
  %v1616 = vand.u32 %v385, 4294901760
  %1617 = vmatpush.msra.mxu0 %v1616
  %v1618 = vand.u32 %v384, 4294901760
  %1619 = vmatpush.msra.mxu0 %v1618
  %v1620 = vand.u32 %v383, 4294901760
  %1621 = vmatpush.msra.mxu0 %v1620
  %v1622 = vand.u32 %v382, 4294901760
  %1623 = vmatpush.msra.mxu0 %v1622
  %v1624 = vand.u32 %v381, 4294901760
  %1625 = vmatpush.msra.mxu0 %v1624
  %v1626 = vand.u32 %v380, 4294901760
  %1627 = vmatpush.msra.mxu0 %v1626
  %v1628 = vand.u32 %v379, 4294901760
  %1629 = vmatpush.msra.mxu0 %v1628
  %v1630 = vand.u32 %v1578, 4294901760
  %v1631 = vsub.f32 %v1578, %v1630
  %v1632 = vand.u32 %v1631, 4294901760
  %v1633 = vsub.f32 %v1631, %v1632
  %v1634 = vand.u32 %v1633, 4294901760
  %1635 = vmatmul.f32.gmra.mxu0 %v1634
  %v1636 = vpop.f32.mrf.mxu0
  %v1637 = vadd.f32 0.0, %v1636
  %v1638 = vand.u32 %v1581, 4294901760
  %v1639 = vsub.f32 %v1581, %v1638
  %v1640 = vand.u32 %v1639, 4294901760
  %v1641 = vsub.f32 %v1639, %v1640
  %v1642 = vand.u32 %v1641, 4294901760
  %1643 = vmatmul.f32.gmra.mxu0 %v1642
  %v1644 = vpop.f32.mrf.mxu0
  %v1645 = vadd.f32 0.0, %v1644
  %v1646 = vand.u32 %v1584, 4294901760
  %v1647 = vsub.f32 %v1584, %v1646
  %v1648 = vand.u32 %v1647, 4294901760
  %v1649 = vsub.f32 %v1647, %v1648
  %v1650 = vand.u32 %v1649, 4294901760
  %1651 = vmatmul.f32.gmra.mxu0 %v1650
  %v1652 = vpop.f32.mrf.mxu0
  %v1653 = vadd.f32 0.0, %v1652
  %v1654 = vand.u32 %v1587, 4294901760
  %v1655 = vsub.f32 %v1587, %v1654
  %v1656 = vand.u32 %v1655, 4294901760
  %v1657 = vsub.f32 %v1655, %v1656
  %v1658 = vand.u32 %v1657, 4294901760
  %1659 = vmatmul.f32.gmra.mxu0 %v1658
  %v1660 = vpop.f32.mrf.mxu0
  %v1661 = vadd.f32 0.0, %v1660
  %v1662 = vand.u32 %v1590, 4294901760
  %v1663 = vsub.f32 %v1590, %v1662
  %v1664 = vand.u32 %v1663, 4294901760
  %v1665 = vsub.f32 %v1663, %v1664
  %v1666 = vand.u32 %v1665, 4294901760
  %1667 = vmatmul.f32.gmra.mxu0 %v1666
  %v1668 = vpop.f32.mrf.mxu0
  %v1669 = vadd.f32 0.0, %v1668
  %v1670 = vand.u32 %v1593, 4294901760
  %v1671 = vsub.f32 %v1593, %v1670
  %v1672 = vand.u32 %v1671, 4294901760
  %v1673 = vsub.f32 %v1671, %v1672
  %v1674 = vand.u32 %v1673, 4294901760
  %1675 = vmatmul.f32.gmra.mxu0 %v1674
  %v1676 = vpop.f32.mrf.mxu0
  %v1677 = vadd.f32 0.0, %v1676
  %v1678 = vand.u32 %v1596, 4294901760
  %v1679 = vsub.f32 %v1596, %v1678
  %v1680 = vand.u32 %v1679, 4294901760
  %v1681 = vsub.f32 %v1679, %v1680
  %v1682 = vand.u32 %v1681, 4294901760
  %1683 = vmatmul.f32.gmra.mxu0 %v1682
  %v1684 = vpop.f32.mrf.mxu0
  %v1685 = vadd.f32 0.0, %v1684
  %v1686 = vand.u32 %v1599, 4294901760
  %v1687 = vsub.f32 %v1599, %v1686
  %v1688 = vand.u32 %v1687, 4294901760
  %v1689 = vsub.f32 %v1687, %v1688
  %v1690 = vand.u32 %v1689, 4294901760
  %1691 = vmatmul.f32.gmra.mxu0 %v1690
  %v1692 = vpop.f32.mrf.mxu0
  %v1693 = vadd.f32 0.0, %v1692
  %1694 = vdwg.mxu0
  %1695 = vmatpush.msra.mxu0 0.0
  %1696 = vmatpush.msra.mxu0 0.0
  %1697 = vmatpush.msra.mxu0 0.0
  %v1698 = vand.u32 %v398, 4294901760
  %v1699 = vsub.f32 %v398, %v1698
  %v1700 = vand.u32 %v1699, 4294901760
  %v1701 = vsub.f32 %v1699, %v1700
  %v1702 = vand.u32 %v1701, 4294901760
  %1703 = vmatpush.msra.mxu0 %v1702
  %v1704 = vand.u32 %v390, 4294901760
  %v1705 = vsub.f32 %v390, %v1704
  %v1706 = vand.u32 %v1705, 4294901760
  %v1707 = vsub.f32 %v1705, %v1706
  %v1708 = vand.u32 %v1707, 4294901760
  %1709 = vmatpush.msra.mxu0 %v1708
  %v1710 = vand.u32 %v389, 4294901760
  %v1711 = vsub.f32 %v389, %v1710
  %v1712 = vand.u32 %v1711, 4294901760
  %v1713 = vsub.f32 %v1711, %v1712
  %v1714 = vand.u32 %v1713, 4294901760
  %1715 = vmatpush.msra.mxu0 %v1714
  %v1716 = vand.u32 %v388, 4294901760
  %v1717 = vsub.f32 %v388, %v1716
  %v1718 = vand.u32 %v1717, 4294901760
  %v1719 = vsub.f32 %v1717, %v1718
  %v1720 = vand.u32 %v1719, 4294901760
  %1721 = vmatpush.msra.mxu0 %v1720
  %v1722 = vand.u32 %v387, 4294901760
  %v1723 = vsub.f32 %v387, %v1722
  %v1724 = vand.u32 %v1723, 4294901760
  %v1725 = vsub.f32 %v1723, %v1724
  %v1726 = vand.u32 %v1725, 4294901760
  %1727 = vmatpush.msra.mxu0 %v1726
  %v1728 = vand.u32 %v386, 4294901760
  %v1729 = vsub.f32 %v386, %v1728
  %v1730 = vand.u32 %v1729, 4294901760
  %v1731 = vsub.f32 %v1729, %v1730
  %v1732 = vand.u32 %v1731, 4294901760
  %1733 = vmatpush.msra.mxu0 %v1732
  %v1734 = vand.u32 %v385, 4294901760
  %v1735 = vsub.f32 %v385, %v1734
  %v1736 = vand.u32 %v1735, 4294901760
  %v1737 = vsub.f32 %v1735, %v1736
  %v1738 = vand.u32 %v1737, 4294901760
  %1739 = vmatpush.msra.mxu0 %v1738
  %v1740 = vand.u32 %v384, 4294901760
  %v1741 = vsub.f32 %v384, %v1740
  %v1742 = vand.u32 %v1741, 4294901760
  %v1743 = vsub.f32 %v1741, %v1742
  %v1744 = vand.u32 %v1743, 4294901760
  %1745 = vmatpush.msra.mxu0 %v1744
  %v1746 = vand.u32 %v383, 4294901760
  %v1747 = vsub.f32 %v383, %v1746
  %v1748 = vand.u32 %v1747, 4294901760
  %v1749 = vsub.f32 %v1747, %v1748
  %v1750 = vand.u32 %v1749, 4294901760
  %1751 = vmatpush.msra.mxu0 %v1750
  %v1752 = vand.u32 %v382, 4294901760
  %v1753 = vsub.f32 %v382, %v1752
  %v1754 = vand.u32 %v1753, 4294901760
  %v1755 = vsub.f32 %v1753, %v1754
  %v1756 = vand.u32 %v1755, 4294901760
  %1757 = vmatpush.msra.mxu0 %v1756
  %v1758 = vand.u32 %v381, 4294901760
  %v1759 = vsub.f32 %v381, %v1758
  %v1760 = vand.u32 %v1759, 4294901760
  %v1761 = vsub.f32 %v1759, %v1760
  %v1762 = vand.u32 %v1761, 4294901760
  %1763 = vmatpush.msra.mxu0 %v1762
  %v1764 = vand.u32 %v380, 4294901760
  %v1765 = vsub.f32 %v380, %v1764
  %v1766 = vand.u32 %v1765, 4294901760
  %v1767 = vsub.f32 %v1765, %v1766
  %v1768 = vand.u32 %v1767, 4294901760
  %1769 = vmatpush.msra.mxu0 %v1768
  %v1770 = vand.u32 %v379, 4294901760
  %v1771 = vsub.f32 %v379, %v1770
  %v1772 = vand.u32 %v1771, 4294901760
  %v1773 = vsub.f32 %v1771, %v1772
  %v1774 = vand.u32 %v1773, 4294901760
  %1775 = vmatpush.msra.mxu0 %v1774
  %v1776 = vand.u32 %v1578, 4294901760
  %1777 = vmatmul.f32.gmra.mxu0 %v1776
  %v1778 = vpop.f32.mrf.mxu0
  %v1779 = vadd.f32 %v1637, %v1778
  %v1780 = vand.u32 %v1581, 4294901760
  %1781 = vmatmul.f32.gmra.mxu0 %v1780
  %v1782 = vpop.f32.mrf.mxu0
  %v1783 = vadd.f32 %v1645, %v1782
  %v1784 = vand.u32 %v1584, 4294901760
  %1785 = vmatmul.f32.gmra.mxu0 %v1784
  %v1786 = vpop.f32.mrf.mxu0
  %v1787 = vadd.f32 %v1653, %v1786
  %v1788 = vand.u32 %v1587, 4294901760
  %1789 = vmatmul.f32.gmra.mxu0 %v1788
  %v1790 = vpop.f32.mrf.mxu0
  %v1791 = vadd.f32 %v1661, %v1790
  %v1792 = vand.u32 %v1590, 4294901760
  %1793 = vmatmul.f32.gmra.mxu0 %v1792
  %v1794 = vpop.f32.mrf.mxu0
  %v1795 = vadd.f32 %v1669, %v1794
  %v1796 = vand.u32 %v1593, 4294901760
  %1797 = vmatmul.f32.gmra.mxu0 %v1796
  %v1798 = vpop.f32.mrf.mxu0
  %v1799 = vadd.f32 %v1677, %v1798
  %v1800 = vand.u32 %v1596, 4294901760
  %1801 = vmatmul.f32.gmra.mxu0 %v1800
  %v1802 = vpop.f32.mrf.mxu0
  %v1803 = vadd.f32 %v1685, %v1802
  %v1804 = vand.u32 %v1599, 4294901760
  %1805 = vmatmul.f32.gmra.mxu0 %v1804
  %v1806 = vpop.f32.mrf.mxu0
  %v1807 = vadd.f32 %v1693, %v1806
  %1808 = vdwg.mxu0
  %1809 = vmatpush.msra.mxu0 0.0
  %1810 = vmatpush.msra.mxu0 0.0
  %1811 = vmatpush.msra.mxu0 0.0
  %v1812 = vand.u32 %v398, 4294901760
  %v1813 = vsub.f32 %v398, %v1812
  %1814 = vmatpush.msra.mxu0 %v1813
  %v1815 = vand.u32 %v390, 4294901760
  %v1816 = vsub.f32 %v390, %v1815
  %1817 = vmatpush.msra.mxu0 %v1816
  %v1818 = vand.u32 %v389, 4294901760
  %v1819 = vsub.f32 %v389, %v1818
  %1820 = vmatpush.msra.mxu0 %v1819
  %v1821 = vand.u32 %v388, 4294901760
  %v1822 = vsub.f32 %v388, %v1821
  %1823 = vmatpush.msra.mxu0 %v1822
  %v1824 = vand.u32 %v387, 4294901760
  %v1825 = vsub.f32 %v387, %v1824
  %1826 = vmatpush.msra.mxu0 %v1825
  %v1827 = vand.u32 %v386, 4294901760
  %v1828 = vsub.f32 %v386, %v1827
  %1829 = vmatpush.msra.mxu0 %v1828
  %v1830 = vand.u32 %v385, 4294901760
  %v1831 = vsub.f32 %v385, %v1830
  %1832 = vmatpush.msra.mxu0 %v1831
  %v1833 = vand.u32 %v384, 4294901760
  %v1834 = vsub.f32 %v384, %v1833
  %1835 = vmatpush.msra.mxu0 %v1834
  %v1836 = vand.u32 %v383, 4294901760
  %v1837 = vsub.f32 %v383, %v1836
  %1838 = vmatpush.msra.mxu0 %v1837
  %v1839 = vand.u32 %v382, 4294901760
  %v1840 = vsub.f32 %v382, %v1839
  %1841 = vmatpush.msra.mxu0 %v1840
  %v1842 = vand.u32 %v381, 4294901760
  %v1843 = vsub.f32 %v381, %v1842
  %1844 = vmatpush.msra.mxu0 %v1843
  %v1845 = vand.u32 %v380, 4294901760
  %v1846 = vsub.f32 %v380, %v1845
  %1847 = vmatpush.msra.mxu0 %v1846
  %v1848 = vand.u32 %v379, 4294901760
  %v1849 = vsub.f32 %v379, %v1848
  %1850 = vmatpush.msra.mxu0 %v1849
  %v1851 = vand.u32 %v1578, 4294901760
  %v1852 = vsub.f32 %v1578, %v1851
  %1853 = vmatmul.f32.gmra.mxu0 %v1852
  %v1854 = vpop.f32.mrf.mxu0
  %v1855 = vadd.f32 %v1779, %v1854
  %v1856 = vand.u32 %v1581, 4294901760
  %v1857 = vsub.f32 %v1581, %v1856
  %1858 = vmatmul.f32.gmra.mxu0 %v1857
  %v1859 = vpop.f32.mrf.mxu0
  %v1860 = vadd.f32 %v1783, %v1859
  %v1861 = vand.u32 %v1584, 4294901760
  %v1862 = vsub.f32 %v1584, %v1861
  %1863 = vmatmul.f32.gmra.mxu0 %v1862
  %v1864 = vpop.f32.mrf.mxu0
  %v1865 = vadd.f32 %v1787, %v1864
  %v1866 = vand.u32 %v1587, 4294901760
  %v1867 = vsub.f32 %v1587, %v1866
  %1868 = vmatmul.f32.gmra.mxu0 %v1867
  %v1869 = vpop.f32.mrf.mxu0
  %v1870 = vadd.f32 %v1791, %v1869
  %v1871 = vand.u32 %v1590, 4294901760
  %v1872 = vsub.f32 %v1590, %v1871
  %1873 = vmatmul.f32.gmra.mxu0 %v1872
  %v1874 = vpop.f32.mrf.mxu0
  %v1875 = vadd.f32 %v1795, %v1874
  %v1876 = vand.u32 %v1593, 4294901760
  %v1877 = vsub.f32 %v1593, %v1876
  %1878 = vmatmul.f32.gmra.mxu0 %v1877
  %v1879 = vpop.f32.mrf.mxu0
  %v1880 = vadd.f32 %v1799, %v1879
  %v1881 = vand.u32 %v1596, 4294901760
  %v1882 = vsub.f32 %v1596, %v1881
  %1883 = vmatmul.f32.gmra.mxu0 %v1882
  %v1884 = vpop.f32.mrf.mxu0
  %v1885 = vadd.f32 %v1803, %v1884
  %v1886 = vand.u32 %v1599, 4294901760
  %v1887 = vsub.f32 %v1599, %v1886
  %1888 = vmatmul.f32.gmra.mxu0 %v1887
  %v1889 = vpop.f32.mrf.mxu0
  %v1890 = vadd.f32 %v1807, %v1889
  %1891 = vdwg.mxu0
  %1892 = vmatpush.msra.mxu0 0.0
  %1893 = vmatpush.msra.mxu0 0.0
  %1894 = vmatpush.msra.mxu0 0.0
  %v1895 = vand.u32 %v398, 4294901760
  %1896 = vmatpush.msra.mxu0 %v1895
  %v1897 = vand.u32 %v390, 4294901760
  %1898 = vmatpush.msra.mxu0 %v1897
  %v1899 = vand.u32 %v389, 4294901760
  %1900 = vmatpush.msra.mxu0 %v1899
  %v1901 = vand.u32 %v388, 4294901760
  %1902 = vmatpush.msra.mxu0 %v1901
  %v1903 = vand.u32 %v387, 4294901760
  %1904 = vmatpush.msra.mxu0 %v1903
  %v1905 = vand.u32 %v386, 4294901760
  %1906 = vmatpush.msra.mxu0 %v1905
  %v1907 = vand.u32 %v385, 4294901760
  %1908 = vmatpush.msra.mxu0 %v1907
  %v1909 = vand.u32 %v384, 4294901760
  %1910 = vmatpush.msra.mxu0 %v1909
  %v1911 = vand.u32 %v383, 4294901760
  %1912 = vmatpush.msra.mxu0 %v1911
  %v1913 = vand.u32 %v382, 4294901760
  %1914 = vmatpush.msra.mxu0 %v1913
  %v1915 = vand.u32 %v381, 4294901760
  %1916 = vmatpush.msra.mxu0 %v1915
  %v1917 = vand.u32 %v380, 4294901760
  %1918 = vmatpush.msra.mxu0 %v1917
  %v1919 = vand.u32 %v379, 4294901760
  %1920 = vmatpush.msra.mxu0 %v1919
  %v1921 = vand.u32 %v1578, 4294901760
  %v1922 = vsub.f32 %v1578, %v1921
  %v1923 = vand.u32 %v1922, 4294901760
  %1924 = vmatmul.f32.gmra.mxu0 %v1923
  %v1925 = vpop.f32.mrf.mxu0
  %v1926 = vadd.f32 %v1855, %v1925
  %v1927 = vand.u32 %v1581, 4294901760
  %v1928 = vsub.f32 %v1581, %v1927
  %v1929 = vand.u32 %v1928, 4294901760
  %1930 = vmatmul.f32.gmra.mxu0 %v1929
  %v1931 = vpop.f32.mrf.mxu0
  %v1932 = vadd.f32 %v1860, %v1931
  %v1933 = vand.u32 %v1584, 4294901760
  %v1934 = vsub.f32 %v1584, %v1933
  %v1935 = vand.u32 %v1934, 4294901760
  %1936 = vmatmul.f32.gmra.mxu0 %v1935
  %v1937 = vpop.f32.mrf.mxu0
  %v1938 = vadd.f32 %v1865, %v1937
  %v1939 = vand.u32 %v1587, 4294901760
  %v1940 = vsub.f32 %v1587, %v1939
  %v1941 = vand.u32 %v1940, 4294901760
  %1942 = vmatmul.f32.gmra.mxu0 %v1941
  %v1943 = vpop.f32.mrf.mxu0
  %v1944 = vadd.f32 %v1870, %v1943
  %v1945 = vand.u32 %v1590, 4294901760
  %v1946 = vsub.f32 %v1590, %v1945
  %v1947 = vand.u32 %v1946, 4294901760
  %1948 = vmatmul.f32.gmra.mxu0 %v1947
  %v1949 = vpop.f32.mrf.mxu0
  %v1950 = vadd.f32 %v1875, %v1949
  %v1951 = vand.u32 %v1593, 4294901760
  %v1952 = vsub.f32 %v1593, %v1951
  %v1953 = vand.u32 %v1952, 4294901760
  %1954 = vmatmul.f32.gmra.mxu0 %v1953
  %v1955 = vpop.f32.mrf.mxu0
  %v1956 = vadd.f32 %v1880, %v1955
  %v1957 = vand.u32 %v1596, 4294901760
  %v1958 = vsub.f32 %v1596, %v1957
  %v1959 = vand.u32 %v1958, 4294901760
  %1960 = vmatmul.f32.gmra.mxu0 %v1959
  %v1961 = vpop.f32.mrf.mxu0
  %v1962 = vadd.f32 %v1885, %v1961
  %v1963 = vand.u32 %v1599, 4294901760
  %v1964 = vsub.f32 %v1599, %v1963
  %v1965 = vand.u32 %v1964, 4294901760
  %1966 = vmatmul.f32.gmra.mxu0 %v1965
  %v1967 = vpop.f32.mrf.mxu0
  %v1968 = vadd.f32 %v1890, %v1967
  %1969 = vdwg.mxu0
  %1970 = vmatpush.msra.mxu0 0.0
  %1971 = vmatpush.msra.mxu0 0.0
  %1972 = vmatpush.msra.mxu0 0.0
  %v1973 = vand.u32 %v398, 4294901760
  %v1974 = vsub.f32 %v398, %v1973
  %v1975 = vand.u32 %v1974, 4294901760
  %1976 = vmatpush.msra.mxu0 %v1975
  %v1977 = vand.u32 %v390, 4294901760
  %v1978 = vsub.f32 %v390, %v1977
  %v1979 = vand.u32 %v1978, 4294901760
  %1980 = vmatpush.msra.mxu0 %v1979
  %v1981 = vand.u32 %v389, 4294901760
  %v1982 = vsub.f32 %v389, %v1981
  %v1983 = vand.u32 %v1982, 4294901760
  %1984 = vmatpush.msra.mxu0 %v1983
  %v1985 = vand.u32 %v388, 4294901760
  %v1986 = vsub.f32 %v388, %v1985
  %v1987 = vand.u32 %v1986, 4294901760
  %1988 = vmatpush.msra.mxu0 %v1987
  %v1989 = vand.u32 %v387, 4294901760
  %v1990 = vsub.f32 %v387, %v1989
  %v1991 = vand.u32 %v1990, 4294901760
  %1992 = vmatpush.msra.mxu0 %v1991
  %v1993 = vand.u32 %v386, 4294901760
  %v1994 = vsub.f32 %v386, %v1993
  %v1995 = vand.u32 %v1994, 4294901760
  %1996 = vmatpush.msra.mxu0 %v1995
  %v1997 = vand.u32 %v385, 4294901760
  %v1998 = vsub.f32 %v385, %v1997
  %v1999 = vand.u32 %v1998, 4294901760
  %2000 = vmatpush.msra.mxu0 %v1999
  %v2001 = vand.u32 %v384, 4294901760
  %v2002 = vsub.f32 %v384, %v2001
  %v2003 = vand.u32 %v2002, 4294901760
  %2004 = vmatpush.msra.mxu0 %v2003
  %v2005 = vand.u32 %v383, 4294901760
  %v2006 = vsub.f32 %v383, %v2005
  %v2007 = vand.u32 %v2006, 4294901760
  %2008 = vmatpush.msra.mxu0 %v2007
  %v2009 = vand.u32 %v382, 4294901760
  %v2010 = vsub.f32 %v382, %v2009
  %v2011 = vand.u32 %v2010, 4294901760
  %2012 = vmatpush.msra.mxu0 %v2011
  %v2013 = vand.u32 %v381, 4294901760
  %v2014 = vsub.f32 %v381, %v2013
  %v2015 = vand.u32 %v2014, 4294901760
  %2016 = vmatpush.msra.mxu0 %v2015
  %v2017 = vand.u32 %v380, 4294901760
  %v2018 = vsub.f32 %v380, %v2017
  %v2019 = vand.u32 %v2018, 4294901760
  %2020 = vmatpush.msra.mxu0 %v2019
  %v2021 = vand.u32 %v379, 4294901760
  %v2022 = vsub.f32 %v379, %v2021
  %v2023 = vand.u32 %v2022, 4294901760
  %2024 = vmatpush.msra.mxu0 %v2023
  %v2025 = vand.u32 %v1578, 4294901760
  %2026 = vmatmul.f32.gmra.mxu0 %v2025
  %v2027 = vpop.f32.mrf.mxu0
  %v2028 = vadd.f32 %v1926, %v2027
  %v2029 = vand.u32 %v1581, 4294901760
  %2030 = vmatmul.f32.gmra.mxu0 %v2029
  %v2031 = vpop.f32.mrf.mxu0
  %v2032 = vadd.f32 %v1932, %v2031
  %v2033 = vand.u32 %v1584, 4294901760
  %2034 = vmatmul.f32.gmra.mxu0 %v2033
  %v2035 = vpop.f32.mrf.mxu0
  %v2036 = vadd.f32 %v1938, %v2035
  %v2037 = vand.u32 %v1587, 4294901760
  %2038 = vmatmul.f32.gmra.mxu0 %v2037
  %v2039 = vpop.f32.mrf.mxu0
  %v2040 = vadd.f32 %v1944, %v2039
  %v2041 = vand.u32 %v1590, 4294901760
  %2042 = vmatmul.f32.gmra.mxu0 %v2041
  %v2043 = vpop.f32.mrf.mxu0
  %v2044 = vadd.f32 %v1950, %v2043
  %v2045 = vand.u32 %v1593, 4294901760
  %2046 = vmatmul.f32.gmra.mxu0 %v2045
  %v2047 = vpop.f32.mrf.mxu0
  %v2048 = vadd.f32 %v1956, %v2047
  %v2049 = vand.u32 %v1596, 4294901760
  %2050 = vmatmul.f32.gmra.mxu0 %v2049
  %v2051 = vpop.f32.mrf.mxu0
  %v2052 = vadd.f32 %v1962, %v2051
  %v2053 = vand.u32 %v1599, 4294901760
  %2054 = vmatmul.f32.gmra.mxu0 %v2053
  %v2055 = vpop.f32.mrf.mxu0
  %v2056 = vadd.f32 %v1968, %v2055
  %2057 = vdwg.mxu0
  %2058 = vmatpush.msra.mxu0 0.0
  %2059 = vmatpush.msra.mxu0 0.0
  %2060 = vmatpush.msra.mxu0 0.0
  %v2061 = vand.u32 %v398, 4294901760
  %2062 = vmatpush.msra.mxu0 %v2061
  %v2063 = vand.u32 %v390, 4294901760
  %2064 = vmatpush.msra.mxu0 %v2063
  %v2065 = vand.u32 %v389, 4294901760
  %2066 = vmatpush.msra.mxu0 %v2065
  %v2067 = vand.u32 %v388, 4294901760
  %2068 = vmatpush.msra.mxu0 %v2067
  %v2069 = vand.u32 %v387, 4294901760
  %2070 = vmatpush.msra.mxu0 %v2069
  %v2071 = vand.u32 %v386, 4294901760
  %2072 = vmatpush.msra.mxu0 %v2071
  %v2073 = vand.u32 %v385, 4294901760
  %2074 = vmatpush.msra.mxu0 %v2073
  %v2075 = vand.u32 %v384, 4294901760
  %2076 = vmatpush.msra.mxu0 %v2075
  %v2077 = vand.u32 %v383, 4294901760
  %2078 = vmatpush.msra.mxu0 %v2077
  %v2079 = vand.u32 %v382, 4294901760
  %2080 = vmatpush.msra.mxu0 %v2079
  %v2081 = vand.u32 %v381, 4294901760
  %2082 = vmatpush.msra.mxu0 %v2081
  %v2083 = vand.u32 %v380, 4294901760
  %2084 = vmatpush.msra.mxu0 %v2083
  %v2085 = vand.u32 %v379, 4294901760
  %2086 = vmatpush.msra.mxu0 %v2085
  %v2087 = vand.u32 %v1578, 4294901760
  %2088 = vmatmul.f32.gmra.mxu0 %v2087
  %v2089 = vpop.f32.mrf.mxu0
  %v2090 = vadd.f32 %v2028, %v2089
  %v2091 = vand.u32 %v1581, 4294901760
  %2092 = vmatmul.f32.gmra.mxu0 %v2091
  %v2093 = vpop.f32.mrf.mxu0
  %v2094 = vadd.f32 %v2032, %v2093
  %v2095 = vand.u32 %v1584, 4294901760
  %2096 = vmatmul.f32.gmra.mxu0 %v2095
  %v2097 = vpop.f32.mrf.mxu0
  %v2098 = vadd.f32 %v2036, %v2097
  %v2099 = vand.u32 %v1587, 4294901760
  %2100 = vmatmul.f32.gmra.mxu0 %v2099
  %v2101 = vpop.f32.mrf.mxu0
  %v2102 = vadd.f32 %v2040, %v2101
  %v2103 = vand.u32 %v1590, 4294901760
  %2104 = vmatmul.f32.gmra.mxu0 %v2103
  %v2105 = vpop.f32.mrf.mxu0
  %v2106 = vadd.f32 %v2044, %v2105
  %v2107 = vand.u32 %v1593, 4294901760
  %2108 = vmatmul.f32.gmra.mxu0 %v2107
  %v2109 = vpop.f32.mrf.mxu0
  %v2110 = vadd.f32 %v2048, %v2109
  %v2111 = vand.u32 %v1596, 4294901760
  %2112 = vmatmul.f32.gmra.mxu0 %v2111
  %v2113 = vpop.f32.mrf.mxu0
  %v2114 = vadd.f32 %v2052, %v2113
  %v2115 = vand.u32 %v1599, 4294901760
  %2116 = vmatmul.f32.gmra.mxu0 %v2115
  %v2117 = vpop.f32.mrf.mxu0
  %v2118 = vadd.f32 %v2056, %v2117
  %2119 = vdwg.mxu0
  %v2120 = vlaneseq
  %v2121 = vshrl.u32 %v2120, 7
  %v2122 = vadd.s32 %v2121, 8
  %v2123 = vadd.s32 %v2121, 16
  %v2124 = vadd.s32 %v2121, 24
  %v2125 = vadd.s32 %v2121, 32
  %v2126 = vadd.s32 %v2121, 40
  %v2127 = vadd.s32 %v2121, 48
  %v2128 = vadd.s32 %v2121, 56
  %v2129 = vsub.s32 7, %v63
  %v2130 = vmul.u32 %v2129, 8
  %vm2131 = vcmp.ge.s32.totalorder %v2121, %v2130
  %vm2132 = vcmp.ge.s32.totalorder %v2122, %v2130
  %vm2133 = vcmp.ge.s32.totalorder %v2123, %v2130
  %vm2134 = vcmp.ge.s32.totalorder %v2124, %v2130
  %vm2135 = vcmp.ge.s32.totalorder %v2125, %v2130
  %vm2136 = vcmp.ge.s32.totalorder %v2126, %v2130
  %vm2137 = vcmp.ge.s32.totalorder %v2127, %v2130
  %vm2138 = vcmp.ge.s32.totalorder %v2128, %v2130
  %v2139 = vadd.s32 %v2130, 8
  %vm2140 = vcmp.lt.s32.totalorder %v2121, %v2139
  %vm2141 = vcmp.lt.s32.totalorder %v2122, %v2139
  %vm2142 = vcmp.lt.s32.totalorder %v2123, %v2139
  %vm2143 = vcmp.lt.s32.totalorder %v2124, %v2139
  %vm2144 = vcmp.lt.s32.totalorder %v2125, %v2139
  %vm2145 = vcmp.lt.s32.totalorder %v2126, %v2139
  %vm2146 = vcmp.lt.s32.totalorder %v2127, %v2139
  %vm2147 = vcmp.lt.s32.totalorder %v2128, %v2139
  %vm2148 = vmand %vm2131, %vm2140
  %vm2149 = vmand %vm2132, %vm2141
  %vm2150 = vmand %vm2133, %vm2142
  %vm2151 = vmand %vm2134, %vm2143
  %vm2152 = vmand %vm2135, %vm2144
  %vm2153 = vmand %vm2136, %vm2145
  %vm2154 = vmand %vm2137, %vm2146
  %vm2155 = vmand %vm2138, %vm2147
  %v2156 = vsel %vm2148, 1, 0
  %v2157 = vsel %vm2149, 1, 0
  %v2158 = vsel %vm2150, 1, 0
  %v2159 = vsel %vm2151, 1, 0
  %v2160 = vsel %vm2152, 1, 0
  %v2161 = vsel %vm2153, 1, 0
  %v2162 = vsel %vm2154, 1, 0
  %v2163 = vsel %vm2155, 1, 0
  %v2164 = vcvt.s32.f32 %v2156
  %v2165 = vcvt.s32.f32 %v2157
  %v2166 = vcvt.s32.f32 %v2158
  %v2167 = vcvt.s32.f32 %v2159
  %v2168 = vcvt.s32.f32 %v2160
  %v2169 = vcvt.s32.f32 %v2161
  %v2170 = vcvt.s32.f32 %v2162
  %v2171 = vcvt.s32.f32 %v2163
  %v2172 = vld [vmem:[%s7] sm:$0xff]
  %v2173 = vld [vmem:[%s7 + $0x8] sm:$0xff]
  %v2175 = vsel %vm705, %v2164, 0
  %v2178 = vsel %vm705, %v2165, 0
  %v2181 = vsel %vm705, %v2166, 0
  %v2184 = vsel %vm705, %v2167, 0
  %v2187 = vsel %vm705, %v2168, 0
  %v2190 = vsel %vm705, %v2169, 0
  %v2193 = vsel %vm705, %v2170, 0
  %v2196 = vsel %vm705, %v2171, 0
  %2198 = vmatpush.msra.mxu0 0.0
  %2199 = vmatpush.msra.mxu0 0.0
  %2200 = vmatpush.msra.mxu0 0.0
  %2201 = vmatpush.msra.mxu0 0.0
  %2202 = vmatpush.msra.mxu0 0.0
  %2203 = vmatpush.msra.mxu0 0.0
  %2204 = vmatpush.msra.mxu0 0.0
  %2205 = vmatpush.msra.mxu0 0.0
  %2206 = vmatpush.msra.mxu0 0.0
  %2207 = vmatpush.msra.mxu0 0.0
  %2208 = vmatpush.msra.mxu0 0.0
  %2209 = vmatpush.msra.mxu0 0.0
  %2210 = vmatpush.msra.mxu0 0.0
  %2211 = vmatpush.msra.mxu0 0.0
  %v2212 = vand.u32 %v2173, 4294901760
  %2213 = vmatpush.msra.mxu0 %v2212
  %v2214 = vand.u32 %v2172, 4294901760
  %2215 = vmatpush.msra.mxu0 %v2214
  %v2216 = vand.u32 %v2175, 4294901760
  %v2217 = vsub.f32 %v2175, %v2216
  %v2218 = vand.u32 %v2217, 4294901760
  %v2219 = vsub.f32 %v2217, %v2218
  %v2220 = vand.u32 %v2219, 4294901760
  %2221 = vmatmul.f32.gmra.mxu0 %v2220
  %v2222 = vpop.f32.mrf.mxu0
  %v2223 = vadd.f32 0.0, %v2222
  %v2224 = vand.u32 %v2178, 4294901760
  %v2225 = vsub.f32 %v2178, %v2224
  %v2226 = vand.u32 %v2225, 4294901760
  %v2227 = vsub.f32 %v2225, %v2226
  %v2228 = vand.u32 %v2227, 4294901760
  %2229 = vmatmul.f32.gmra.mxu0 %v2228
  %v2230 = vpop.f32.mrf.mxu0
  %v2231 = vadd.f32 0.0, %v2230
  %v2232 = vand.u32 %v2181, 4294901760
  %v2233 = vsub.f32 %v2181, %v2232
  %v2234 = vand.u32 %v2233, 4294901760
  %v2235 = vsub.f32 %v2233, %v2234
  %v2236 = vand.u32 %v2235, 4294901760
  %2237 = vmatmul.f32.gmra.mxu0 %v2236
  %v2238 = vpop.f32.mrf.mxu0
  %v2239 = vadd.f32 0.0, %v2238
  %v2240 = vand.u32 %v2184, 4294901760
  %v2241 = vsub.f32 %v2184, %v2240
  %v2242 = vand.u32 %v2241, 4294901760
  %v2243 = vsub.f32 %v2241, %v2242
  %v2244 = vand.u32 %v2243, 4294901760
  %2245 = vmatmul.f32.gmra.mxu0 %v2244
  %v2246 = vpop.f32.mrf.mxu0
  %v2247 = vadd.f32 0.0, %v2246
  %v2248 = vand.u32 %v2187, 4294901760
  %v2249 = vsub.f32 %v2187, %v2248
  %v2250 = vand.u32 %v2249, 4294901760
  %v2251 = vsub.f32 %v2249, %v2250
  %v2252 = vand.u32 %v2251, 4294901760
  %2253 = vmatmul.f32.gmra.mxu0 %v2252
  %v2254 = vpop.f32.mrf.mxu0
  %v2255 = vadd.f32 0.0, %v2254
  %v2256 = vand.u32 %v2190, 4294901760
  %v2257 = vsub.f32 %v2190, %v2256
  %v2258 = vand.u32 %v2257, 4294901760
  %v2259 = vsub.f32 %v2257, %v2258
  %v2260 = vand.u32 %v2259, 4294901760
  %2261 = vmatmul.f32.gmra.mxu0 %v2260
  %v2262 = vpop.f32.mrf.mxu0
  %v2263 = vadd.f32 0.0, %v2262
  %v2264 = vand.u32 %v2193, 4294901760
  %v2265 = vsub.f32 %v2193, %v2264
  %v2266 = vand.u32 %v2265, 4294901760
  %v2267 = vsub.f32 %v2265, %v2266
  %v2268 = vand.u32 %v2267, 4294901760
  %2269 = vmatmul.f32.gmra.mxu0 %v2268
  %v2270 = vpop.f32.mrf.mxu0
  %v2271 = vadd.f32 0.0, %v2270
  %v2272 = vand.u32 %v2196, 4294901760
  %v2273 = vsub.f32 %v2196, %v2272
  %v2274 = vand.u32 %v2273, 4294901760
  %v2275 = vsub.f32 %v2273, %v2274
  %v2276 = vand.u32 %v2275, 4294901760
  %2277 = vmatmul.f32.gmra.mxu0 %v2276
  %v2278 = vpop.f32.mrf.mxu0
  %v2279 = vadd.f32 0.0, %v2278
  %2280 = vdwg.mxu0
  %2281 = vmatpush.msra.mxu0 0.0
  %2282 = vmatpush.msra.mxu0 0.0
  %2283 = vmatpush.msra.mxu0 0.0
  %2284 = vmatpush.msra.mxu0 0.0
  %2285 = vmatpush.msra.mxu0 0.0
  %2286 = vmatpush.msra.mxu0 0.0
  %2287 = vmatpush.msra.mxu0 0.0
  %2288 = vmatpush.msra.mxu0 0.0
  %2289 = vmatpush.msra.mxu0 0.0
  %2290 = vmatpush.msra.mxu0 0.0
  %2291 = vmatpush.msra.mxu0 0.0
  %2292 = vmatpush.msra.mxu0 0.0
  %2293 = vmatpush.msra.mxu0 0.0
  %2294 = vmatpush.msra.mxu0 0.0
  %v2295 = vand.u32 %v2173, 4294901760
  %v2296 = vsub.f32 %v2173, %v2295
  %v2297 = vand.u32 %v2296, 4294901760
  %v2298 = vsub.f32 %v2296, %v2297
  %v2299 = vand.u32 %v2298, 4294901760
  %2300 = vmatpush.msra.mxu0 %v2299
  %v2301 = vand.u32 %v2172, 4294901760
  %v2302 = vsub.f32 %v2172, %v2301
  %v2303 = vand.u32 %v2302, 4294901760
  %v2304 = vsub.f32 %v2302, %v2303
  %v2305 = vand.u32 %v2304, 4294901760
  %2306 = vmatpush.msra.mxu0 %v2305
  %v2307 = vand.u32 %v2175, 4294901760
  %2308 = vmatmul.f32.gmra.mxu0 %v2307
  %v2309 = vpop.f32.mrf.mxu0
  %v2310 = vadd.f32 %v2223, %v2309
  %v2311 = vand.u32 %v2178, 4294901760
  %2312 = vmatmul.f32.gmra.mxu0 %v2311
  %v2313 = vpop.f32.mrf.mxu0
  %v2314 = vadd.f32 %v2231, %v2313
  %v2315 = vand.u32 %v2181, 4294901760
  %2316 = vmatmul.f32.gmra.mxu0 %v2315
  %v2317 = vpop.f32.mrf.mxu0
  %v2318 = vadd.f32 %v2239, %v2317
  %v2319 = vand.u32 %v2184, 4294901760
  %2320 = vmatmul.f32.gmra.mxu0 %v2319
  %v2321 = vpop.f32.mrf.mxu0
  %v2322 = vadd.f32 %v2247, %v2321
  %v2323 = vand.u32 %v2187, 4294901760
  %2324 = vmatmul.f32.gmra.mxu0 %v2323
  %v2325 = vpop.f32.mrf.mxu0
  %v2326 = vadd.f32 %v2255, %v2325
  %v2327 = vand.u32 %v2190, 4294901760
  %2328 = vmatmul.f32.gmra.mxu0 %v2327
  %v2329 = vpop.f32.mrf.mxu0
  %v2330 = vadd.f32 %v2263, %v2329
  %v2331 = vand.u32 %v2193, 4294901760
  %2332 = vmatmul.f32.gmra.mxu0 %v2331
  %v2333 = vpop.f32.mrf.mxu0
  %v2334 = vadd.f32 %v2271, %v2333
  %v2335 = vand.u32 %v2196, 4294901760
  %2336 = vmatmul.f32.gmra.mxu0 %v2335
  %v2337 = vpop.f32.mrf.mxu0
  %v2338 = vadd.f32 %v2279, %v2337
  %2339 = vdwg.mxu0
  %2340 = vmatpush.msra.mxu0 0.0
  %2341 = vmatpush.msra.mxu0 0.0
  %2342 = vmatpush.msra.mxu0 0.0
  %2343 = vmatpush.msra.mxu0 0.0
  %2344 = vmatpush.msra.mxu0 0.0
  %2345 = vmatpush.msra.mxu0 0.0
  %2346 = vmatpush.msra.mxu0 0.0
  %2347 = vmatpush.msra.mxu0 0.0
  %2348 = vmatpush.msra.mxu0 0.0
  %2349 = vmatpush.msra.mxu0 0.0
  %2350 = vmatpush.msra.mxu0 0.0
  %2351 = vmatpush.msra.mxu0 0.0
  %2352 = vmatpush.msra.mxu0 0.0
  %2353 = vmatpush.msra.mxu0 0.0
  %v2354 = vand.u32 %v2173, 4294901760
  %v2355 = vsub.f32 %v2173, %v2354
  %2356 = vmatpush.msra.mxu0 %v2355
  %v2357 = vand.u32 %v2172, 4294901760
  %v2358 = vsub.f32 %v2172, %v2357
  %2359 = vmatpush.msra.mxu0 %v2358
  %v2360 = vand.u32 %v2175, 4294901760
  %v2361 = vsub.f32 %v2175, %v2360
  %2362 = vmatmul.f32.gmra.mxu0 %v2361
  %v2363 = vpop.f32.mrf.mxu0
  %v2364 = vadd.f32 %v2310, %v2363
  %v2365 = vand.u32 %v2178, 4294901760
  %v2366 = vsub.f32 %v2178, %v2365
  %2367 = vmatmul.f32.gmra.mxu0 %v2366
  %v2368 = vpop.f32.mrf.mxu0
  %v2369 = vadd.f32 %v2314, %v2368
  %v2370 = vand.u32 %v2181, 4294901760
  %v2371 = vsub.f32 %v2181, %v2370
  %2372 = vmatmul.f32.gmra.mxu0 %v2371
  %v2373 = vpop.f32.mrf.mxu0
  %v2374 = vadd.f32 %v2318, %v2373
  %v2375 = vand.u32 %v2184, 4294901760
  %v2376 = vsub.f32 %v2184, %v2375
  %2377 = vmatmul.f32.gmra.mxu0 %v2376
  %v2378 = vpop.f32.mrf.mxu0
  %v2379 = vadd.f32 %v2322, %v2378
  %v2380 = vand.u32 %v2187, 4294901760
  %v2381 = vsub.f32 %v2187, %v2380
  %2382 = vmatmul.f32.gmra.mxu0 %v2381
  %v2383 = vpop.f32.mrf.mxu0
  %v2384 = vadd.f32 %v2326, %v2383
  %v2385 = vand.u32 %v2190, 4294901760
  %v2386 = vsub.f32 %v2190, %v2385
  %2387 = vmatmul.f32.gmra.mxu0 %v2386
  %v2388 = vpop.f32.mrf.mxu0
  %v2389 = vadd.f32 %v2330, %v2388
  %v2390 = vand.u32 %v2193, 4294901760
  %v2391 = vsub.f32 %v2193, %v2390
  %2392 = vmatmul.f32.gmra.mxu0 %v2391
  %v2393 = vpop.f32.mrf.mxu0
  %v2394 = vadd.f32 %v2334, %v2393
  %v2395 = vand.u32 %v2196, 4294901760
  %v2396 = vsub.f32 %v2196, %v2395
  %2397 = vmatmul.f32.gmra.mxu0 %v2396
  %v2398 = vpop.f32.mrf.mxu0
  %v2399 = vadd.f32 %v2338, %v2398
  %2400 = vdwg.mxu0
  %2401 = vmatpush.msra.mxu0 0.0
  %2402 = vmatpush.msra.mxu0 0.0
  %2403 = vmatpush.msra.mxu0 0.0
  %2404 = vmatpush.msra.mxu0 0.0
  %2405 = vmatpush.msra.mxu0 0.0
  %2406 = vmatpush.msra.mxu0 0.0
  %2407 = vmatpush.msra.mxu0 0.0
  %2408 = vmatpush.msra.mxu0 0.0
  %2409 = vmatpush.msra.mxu0 0.0
  %2410 = vmatpush.msra.mxu0 0.0
  %2411 = vmatpush.msra.mxu0 0.0
  %2412 = vmatpush.msra.mxu0 0.0
  %2413 = vmatpush.msra.mxu0 0.0
  %2414 = vmatpush.msra.mxu0 0.0
  %v2415 = vand.u32 %v2173, 4294901760
  %2416 = vmatpush.msra.mxu0 %v2415
  %v2417 = vand.u32 %v2172, 4294901760
  %2418 = vmatpush.msra.mxu0 %v2417
  %v2419 = vand.u32 %v2175, 4294901760
  %v2420 = vsub.f32 %v2175, %v2419
  %v2421 = vand.u32 %v2420, 4294901760
  %2422 = vmatmul.f32.gmra.mxu0 %v2421
  %v2423 = vpop.f32.mrf.mxu0
  %v2424 = vadd.f32 %v2364, %v2423
  %v2425 = vand.u32 %v2178, 4294901760
  %v2426 = vsub.f32 %v2178, %v2425
  %v2427 = vand.u32 %v2426, 4294901760
  %2428 = vmatmul.f32.gmra.mxu0 %v2427
  %v2429 = vpop.f32.mrf.mxu0
  %v2430 = vadd.f32 %v2369, %v2429
  %v2431 = vand.u32 %v2181, 4294901760
  %v2432 = vsub.f32 %v2181, %v2431
  %v2433 = vand.u32 %v2432, 4294901760
  %2434 = vmatmul.f32.gmra.mxu0 %v2433
  %v2435 = vpop.f32.mrf.mxu0
  %v2436 = vadd.f32 %v2374, %v2435
  %v2437 = vand.u32 %v2184, 4294901760
  %v2438 = vsub.f32 %v2184, %v2437
  %v2439 = vand.u32 %v2438, 4294901760
  %2440 = vmatmul.f32.gmra.mxu0 %v2439
  %v2441 = vpop.f32.mrf.mxu0
  %v2442 = vadd.f32 %v2379, %v2441
  %v2443 = vand.u32 %v2187, 4294901760
  %v2444 = vsub.f32 %v2187, %v2443
  %v2445 = vand.u32 %v2444, 4294901760
  %2446 = vmatmul.f32.gmra.mxu0 %v2445
  %v2447 = vpop.f32.mrf.mxu0
  %v2448 = vadd.f32 %v2384, %v2447
  %v2449 = vand.u32 %v2190, 4294901760
  %v2450 = vsub.f32 %v2190, %v2449
  %v2451 = vand.u32 %v2450, 4294901760
  %2452 = vmatmul.f32.gmra.mxu0 %v2451
  %v2453 = vpop.f32.mrf.mxu0
  %v2454 = vadd.f32 %v2389, %v2453
  %v2455 = vand.u32 %v2193, 4294901760
  %v2456 = vsub.f32 %v2193, %v2455
  %v2457 = vand.u32 %v2456, 4294901760
  %2458 = vmatmul.f32.gmra.mxu0 %v2457
  %v2459 = vpop.f32.mrf.mxu0
  %v2460 = vadd.f32 %v2394, %v2459
  %v2461 = vand.u32 %v2196, 4294901760
  %v2462 = vsub.f32 %v2196, %v2461
  %v2463 = vand.u32 %v2462, 4294901760
  %2464 = vmatmul.f32.gmra.mxu0 %v2463
  %v2465 = vpop.f32.mrf.mxu0
  %v2466 = vadd.f32 %v2399, %v2465
  %2467 = vdwg.mxu0
  %2468 = vmatpush.msra.mxu0 0.0
  %2469 = vmatpush.msra.mxu0 0.0
  %2470 = vmatpush.msra.mxu0 0.0
  %2471 = vmatpush.msra.mxu0 0.0
  %2472 = vmatpush.msra.mxu0 0.0
  %2473 = vmatpush.msra.mxu0 0.0
  %2474 = vmatpush.msra.mxu0 0.0
  %2475 = vmatpush.msra.mxu0 0.0
  %2476 = vmatpush.msra.mxu0 0.0
  %2477 = vmatpush.msra.mxu0 0.0
  %2478 = vmatpush.msra.mxu0 0.0
  %2479 = vmatpush.msra.mxu0 0.0
  %2480 = vmatpush.msra.mxu0 0.0
  %2481 = vmatpush.msra.mxu0 0.0
  %v2482 = vand.u32 %v2173, 4294901760
  %v2483 = vsub.f32 %v2173, %v2482
  %v2484 = vand.u32 %v2483, 4294901760
  %2485 = vmatpush.msra.mxu0 %v2484
  %v2486 = vand.u32 %v2172, 4294901760
  %v2487 = vsub.f32 %v2172, %v2486
  %v2488 = vand.u32 %v2487, 4294901760
  %2489 = vmatpush.msra.mxu0 %v2488
  %v2490 = vand.u32 %v2175, 4294901760
  %2491 = vmatmul.f32.gmra.mxu0 %v2490
  %v2492 = vpop.f32.mrf.mxu0
  %v2493 = vadd.f32 %v2424, %v2492
  %v2494 = vand.u32 %v2178, 4294901760
  %2495 = vmatmul.f32.gmra.mxu0 %v2494
  %v2496 = vpop.f32.mrf.mxu0
  %v2497 = vadd.f32 %v2430, %v2496
  %v2498 = vand.u32 %v2181, 4294901760
  %2499 = vmatmul.f32.gmra.mxu0 %v2498
  %v2500 = vpop.f32.mrf.mxu0
  %v2501 = vadd.f32 %v2436, %v2500
  %v2502 = vand.u32 %v2184, 4294901760
  %2503 = vmatmul.f32.gmra.mxu0 %v2502
  %v2504 = vpop.f32.mrf.mxu0
  %v2505 = vadd.f32 %v2442, %v2504
  %v2506 = vand.u32 %v2187, 4294901760
  %2507 = vmatmul.f32.gmra.mxu0 %v2506
  %v2508 = vpop.f32.mrf.mxu0
  %v2509 = vadd.f32 %v2448, %v2508
  %v2510 = vand.u32 %v2190, 4294901760
  %2511 = vmatmul.f32.gmra.mxu0 %v2510
  %v2512 = vpop.f32.mrf.mxu0
  %v2513 = vadd.f32 %v2454, %v2512
  %v2514 = vand.u32 %v2193, 4294901760
  %2515 = vmatmul.f32.gmra.mxu0 %v2514
  %v2516 = vpop.f32.mrf.mxu0
  %v2517 = vadd.f32 %v2460, %v2516
  %v2518 = vand.u32 %v2196, 4294901760
  %2519 = vmatmul.f32.gmra.mxu0 %v2518
  %v2520 = vpop.f32.mrf.mxu0
  %v2521 = vadd.f32 %v2466, %v2520
  %2522 = vdwg.mxu0
  %2523 = vmatpush.msra.mxu0 0.0
  %2524 = vmatpush.msra.mxu0 0.0
  %2525 = vmatpush.msra.mxu0 0.0
  %2526 = vmatpush.msra.mxu0 0.0
  %2527 = vmatpush.msra.mxu0 0.0
  %2528 = vmatpush.msra.mxu0 0.0
  %2529 = vmatpush.msra.mxu0 0.0
  %2530 = vmatpush.msra.mxu0 0.0
  %2531 = vmatpush.msra.mxu0 0.0
  %2532 = vmatpush.msra.mxu0 0.0
  %2533 = vmatpush.msra.mxu0 0.0
  %2534 = vmatpush.msra.mxu0 0.0
  %2535 = vmatpush.msra.mxu0 0.0
  %2536 = vmatpush.msra.mxu0 0.0
  %v2537 = vand.u32 %v2173, 4294901760
  %2538 = vmatpush.msra.mxu0 %v2537
  %v2539 = vand.u32 %v2172, 4294901760
  %2540 = vmatpush.msra.mxu0 %v2539
  %v2541 = vand.u32 %v2175, 4294901760
  %2542 = vmatmul.f32.gmra.mxu0 %v2541
  %v2543 = vpop.f32.mrf.mxu0
  %v2544 = vadd.f32 %v2493, %v2543
  %v2545 = vand.u32 %v2178, 4294901760
  %2546 = vmatmul.f32.gmra.mxu0 %v2545
  %v2547 = vpop.f32.mrf.mxu0
  %v2548 = vadd.f32 %v2497, %v2547
  %v2549 = vand.u32 %v2181, 4294901760
  %2550 = vmatmul.f32.gmra.mxu0 %v2549
  %v2551 = vpop.f32.mrf.mxu0
  %v2552 = vadd.f32 %v2501, %v2551
  %v2553 = vand.u32 %v2184, 4294901760
  %2554 = vmatmul.f32.gmra.mxu0 %v2553
  %v2555 = vpop.f32.mrf.mxu0
  %v2556 = vadd.f32 %v2505, %v2555
  %v2557 = vand.u32 %v2187, 4294901760
  %2558 = vmatmul.f32.gmra.mxu0 %v2557
  %v2559 = vpop.f32.mrf.mxu0
  %v2560 = vadd.f32 %v2509, %v2559
  %v2561 = vand.u32 %v2190, 4294901760
  %2562 = vmatmul.f32.gmra.mxu0 %v2561
  %v2563 = vpop.f32.mrf.mxu0
  %v2564 = vadd.f32 %v2513, %v2563
  %v2565 = vand.u32 %v2193, 4294901760
  %2566 = vmatmul.f32.gmra.mxu0 %v2565
  %v2567 = vpop.f32.mrf.mxu0
  %v2568 = vadd.f32 %v2517, %v2567
  %v2569 = vand.u32 %v2196, 4294901760
  %2570 = vmatmul.f32.gmra.mxu0 %v2569
  %v2571 = vpop.f32.mrf.mxu0
  %v2572 = vadd.f32 %v2521, %v2571
  %2573 = vdwg.mxu0
  %v2574 = vld [vmem:[%s12] sm:$0xff]
  %v2575 = vld [vmem:[%s12 + $0x8] sm:$0xff]
  %v2576 = vld [vmem:[%s12 + $0x10] sm:$0xff]
  %v2577 = vld [vmem:[%s12 + $0x18] sm:$0xff]
  %v2578 = vld [vmem:[%s13] sm:$0xff]
  %v2580 = vsel %vm870, %v2544, 0
  %v2583 = vsel %vm870, %v2548, 0
  %v2586 = vsel %vm870, %v2552, 0
  %v2589 = vsel %vm870, %v2556, 0
  %v2592 = vsel %vm870, %v2560, 0
  %v2595 = vsel %vm870, %v2564, 0
  %v2598 = vsel %vm870, %v2568, 0
  %v2601 = vsel %vm870, %v2572, 0
  %2603 = vmatpush.msra.mxu0 0.0
  %2604 = vmatpush.msra.mxu0 0.0
  %2605 = vmatpush.msra.mxu0 0.0
  %2606 = vmatpush.msra.mxu0 0.0
  %2607 = vmatpush.msra.mxu0 0.0
  %2608 = vmatpush.msra.mxu0 0.0
  %2609 = vmatpush.msra.mxu0 0.0
  %2610 = vmatpush.msra.mxu0 0.0
  %2611 = vmatpush.msra.mxu0 0.0
  %2612 = vmatpush.msra.mxu0 0.0
  %2613 = vmatpush.msra.mxu0 0.0
  %2614 = vmatpush.msra.mxu0 0.0
  %2615 = vmatpush.msra.mxu0 0.0
  %2616 = vmatpush.msra.mxu0 0.0
  %2617 = vmatpush.msra.mxu0 0.0
  %v2618 = vand.u32 %v2578, 4294901760
  %2619 = vmatpush.msra.mxu0 %v2618
  %v2620 = vand.u32 %v2580, 4294901760
  %v2621 = vsub.f32 %v2580, %v2620
  %v2622 = vand.u32 %v2621, 4294901760
  %v2623 = vsub.f32 %v2621, %v2622
  %v2624 = vand.u32 %v2623, 4294901760
  %2625 = vmatmul.f32.gmra.mxu0 %v2624
  %v2626 = vpop.f32.mrf.mxu0
  %v2627 = vadd.f32 0.0, %v2626
  %v2628 = vand.u32 %v2583, 4294901760
  %v2629 = vsub.f32 %v2583, %v2628
  %v2630 = vand.u32 %v2629, 4294901760
  %v2631 = vsub.f32 %v2629, %v2630
  %v2632 = vand.u32 %v2631, 4294901760
  %2633 = vmatmul.f32.gmra.mxu0 %v2632
  %v2634 = vpop.f32.mrf.mxu0
  %v2635 = vadd.f32 0.0, %v2634
  %v2636 = vand.u32 %v2586, 4294901760
  %v2637 = vsub.f32 %v2586, %v2636
  %v2638 = vand.u32 %v2637, 4294901760
  %v2639 = vsub.f32 %v2637, %v2638
  %v2640 = vand.u32 %v2639, 4294901760
  %2641 = vmatmul.f32.gmra.mxu0 %v2640
  %v2642 = vpop.f32.mrf.mxu0
  %v2643 = vadd.f32 0.0, %v2642
  %v2644 = vand.u32 %v2589, 4294901760
  %v2645 = vsub.f32 %v2589, %v2644
  %v2646 = vand.u32 %v2645, 4294901760
  %v2647 = vsub.f32 %v2645, %v2646
  %v2648 = vand.u32 %v2647, 4294901760
  %2649 = vmatmul.f32.gmra.mxu0 %v2648
  %v2650 = vpop.f32.mrf.mxu0
  %v2651 = vadd.f32 0.0, %v2650
  %v2652 = vand.u32 %v2592, 4294901760
  %v2653 = vsub.f32 %v2592, %v2652
  %v2654 = vand.u32 %v2653, 4294901760
  %v2655 = vsub.f32 %v2653, %v2654
  %v2656 = vand.u32 %v2655, 4294901760
  %2657 = vmatmul.f32.gmra.mxu0 %v2656
  %v2658 = vpop.f32.mrf.mxu0
  %v2659 = vadd.f32 0.0, %v2658
  %v2660 = vand.u32 %v2595, 4294901760
  %v2661 = vsub.f32 %v2595, %v2660
  %v2662 = vand.u32 %v2661, 4294901760
  %v2663 = vsub.f32 %v2661, %v2662
  %v2664 = vand.u32 %v2663, 4294901760
  %2665 = vmatmul.f32.gmra.mxu0 %v2664
  %v2666 = vpop.f32.mrf.mxu0
  %v2667 = vadd.f32 0.0, %v2666
  %v2668 = vand.u32 %v2598, 4294901760
  %v2669 = vsub.f32 %v2598, %v2668
  %v2670 = vand.u32 %v2669, 4294901760
  %v2671 = vsub.f32 %v2669, %v2670
  %v2672 = vand.u32 %v2671, 4294901760
  %2673 = vmatmul.f32.gmra.mxu0 %v2672
  %v2674 = vpop.f32.mrf.mxu0
  %v2675 = vadd.f32 0.0, %v2674
  %v2676 = vand.u32 %v2601, 4294901760
  %v2677 = vsub.f32 %v2601, %v2676
  %v2678 = vand.u32 %v2677, 4294901760
  %v2679 = vsub.f32 %v2677, %v2678
  %v2680 = vand.u32 %v2679, 4294901760
  %2681 = vmatmul.f32.gmra.mxu0 %v2680
  %v2682 = vpop.f32.mrf.mxu0
  %v2683 = vadd.f32 0.0, %v2682
  %2684 = vdwg.mxu0
  %2685 = vmatpush.msra.mxu0 0.0
  %2686 = vmatpush.msra.mxu0 0.0
  %2687 = vmatpush.msra.mxu0 0.0
  %2688 = vmatpush.msra.mxu0 0.0
  %2689 = vmatpush.msra.mxu0 0.0
  %2690 = vmatpush.msra.mxu0 0.0
  %2691 = vmatpush.msra.mxu0 0.0
  %2692 = vmatpush.msra.mxu0 0.0
  %2693 = vmatpush.msra.mxu0 0.0
  %2694 = vmatpush.msra.mxu0 0.0
  %2695 = vmatpush.msra.mxu0 0.0
  %2696 = vmatpush.msra.mxu0 0.0
  %2697 = vmatpush.msra.mxu0 0.0
  %2698 = vmatpush.msra.mxu0 0.0
  %2699 = vmatpush.msra.mxu0 0.0
  %v2700 = vand.u32 %v2578, 4294901760
  %v2701 = vsub.f32 %v2578, %v2700
  %v2702 = vand.u32 %v2701, 4294901760
  %v2703 = vsub.f32 %v2701, %v2702
  %v2704 = vand.u32 %v2703, 4294901760
  %2705 = vmatpush.msra.mxu0 %v2704
  %v2706 = vand.u32 %v2580, 4294901760
  %2707 = vmatmul.f32.gmra.mxu0 %v2706
  %v2708 = vpop.f32.mrf.mxu0
  %v2709 = vadd.f32 %v2627, %v2708
  %v2710 = vand.u32 %v2583, 4294901760
  %2711 = vmatmul.f32.gmra.mxu0 %v2710
  %v2712 = vpop.f32.mrf.mxu0
  %v2713 = vadd.f32 %v2635, %v2712
  %v2714 = vand.u32 %v2586, 4294901760
  %2715 = vmatmul.f32.gmra.mxu0 %v2714
  %v2716 = vpop.f32.mrf.mxu0
  %v2717 = vadd.f32 %v2643, %v2716
  %v2718 = vand.u32 %v2589, 4294901760
  %2719 = vmatmul.f32.gmra.mxu0 %v2718
  %v2720 = vpop.f32.mrf.mxu0
  %v2721 = vadd.f32 %v2651, %v2720
  %v2722 = vand.u32 %v2592, 4294901760
  %2723 = vmatmul.f32.gmra.mxu0 %v2722
  %v2724 = vpop.f32.mrf.mxu0
  %v2725 = vadd.f32 %v2659, %v2724
  %v2726 = vand.u32 %v2595, 4294901760
  %2727 = vmatmul.f32.gmra.mxu0 %v2726
  %v2728 = vpop.f32.mrf.mxu0
  %v2729 = vadd.f32 %v2667, %v2728
  %v2730 = vand.u32 %v2598, 4294901760
  %2731 = vmatmul.f32.gmra.mxu0 %v2730
  %v2732 = vpop.f32.mrf.mxu0
  %v2733 = vadd.f32 %v2675, %v2732
  %v2734 = vand.u32 %v2601, 4294901760
  %2735 = vmatmul.f32.gmra.mxu0 %v2734
  %v2736 = vpop.f32.mrf.mxu0
  %v2737 = vadd.f32 %v2683, %v2736
  %2738 = vdwg.mxu0
  %2739 = vmatpush.msra.mxu0 0.0
  %2740 = vmatpush.msra.mxu0 0.0
  %2741 = vmatpush.msra.mxu0 0.0
  %2742 = vmatpush.msra.mxu0 0.0
  %2743 = vmatpush.msra.mxu0 0.0
  %2744 = vmatpush.msra.mxu0 0.0
  %2745 = vmatpush.msra.mxu0 0.0
  %2746 = vmatpush.msra.mxu0 0.0
  %2747 = vmatpush.msra.mxu0 0.0
  %2748 = vmatpush.msra.mxu0 0.0
  %2749 = vmatpush.msra.mxu0 0.0
  %2750 = vmatpush.msra.mxu0 0.0
  %2751 = vmatpush.msra.mxu0 0.0
  %2752 = vmatpush.msra.mxu0 0.0
  %2753 = vmatpush.msra.mxu0 0.0
  %v2754 = vand.u32 %v2578, 4294901760
  %v2755 = vsub.f32 %v2578, %v2754
  %2756 = vmatpush.msra.mxu0 %v2755
  %v2757 = vand.u32 %v2580, 4294901760
  %v2758 = vsub.f32 %v2580, %v2757
  %2759 = vmatmul.f32.gmra.mxu0 %v2758
  %v2760 = vpop.f32.mrf.mxu0
  %v2761 = vadd.f32 %v2709, %v2760
  %v2762 = vand.u32 %v2583, 4294901760
  %v2763 = vsub.f32 %v2583, %v2762
  %2764 = vmatmul.f32.gmra.mxu0 %v2763
  %v2765 = vpop.f32.mrf.mxu0
  %v2766 = vadd.f32 %v2713, %v2765
  %v2767 = vand.u32 %v2586, 4294901760
  %v2768 = vsub.f32 %v2586, %v2767
  %2769 = vmatmul.f32.gmra.mxu0 %v2768
  %v2770 = vpop.f32.mrf.mxu0
  %v2771 = vadd.f32 %v2717, %v2770
  %v2772 = vand.u32 %v2589, 4294901760
  %v2773 = vsub.f32 %v2589, %v2772
  %2774 = vmatmul.f32.gmra.mxu0 %v2773
  %v2775 = vpop.f32.mrf.mxu0
  %v2776 = vadd.f32 %v2721, %v2775
  %v2777 = vand.u32 %v2592, 4294901760
  %v2778 = vsub.f32 %v2592, %v2777
  %2779 = vmatmul.f32.gmra.mxu0 %v2778
  %v2780 = vpop.f32.mrf.mxu0
  %v2781 = vadd.f32 %v2725, %v2780
  %v2782 = vand.u32 %v2595, 4294901760
  %v2783 = vsub.f32 %v2595, %v2782
  %2784 = vmatmul.f32.gmra.mxu0 %v2783
  %v2785 = vpop.f32.mrf.mxu0
  %v2786 = vadd.f32 %v2729, %v2785
  %v2787 = vand.u32 %v2598, 4294901760
  %v2788 = vsub.f32 %v2598, %v2787
  %2789 = vmatmul.f32.gmra.mxu0 %v2788
  %v2790 = vpop.f32.mrf.mxu0
  %v2791 = vadd.f32 %v2733, %v2790
  %v2792 = vand.u32 %v2601, 4294901760
  %v2793 = vsub.f32 %v2601, %v2792
  %2794 = vmatmul.f32.gmra.mxu0 %v2793
  %v2795 = vpop.f32.mrf.mxu0
  %v2796 = vadd.f32 %v2737, %v2795
  %2797 = vdwg.mxu0
  %2798 = vmatpush.msra.mxu0 0.0
  %2799 = vmatpush.msra.mxu0 0.0
  %2800 = vmatpush.msra.mxu0 0.0
  %2801 = vmatpush.msra.mxu0 0.0
  %2802 = vmatpush.msra.mxu0 0.0
  %2803 = vmatpush.msra.mxu0 0.0
  %2804 = vmatpush.msra.mxu0 0.0
  %2805 = vmatpush.msra.mxu0 0.0
  %2806 = vmatpush.msra.mxu0 0.0
  %2807 = vmatpush.msra.mxu0 0.0
  %2808 = vmatpush.msra.mxu0 0.0
  %2809 = vmatpush.msra.mxu0 0.0
  %2810 = vmatpush.msra.mxu0 0.0
  %2811 = vmatpush.msra.mxu0 0.0
  %2812 = vmatpush.msra.mxu0 0.0
  %v2813 = vand.u32 %v2578, 4294901760
  %2814 = vmatpush.msra.mxu0 %v2813
  %v2815 = vand.u32 %v2580, 4294901760
  %v2816 = vsub.f32 %v2580, %v2815
  %v2817 = vand.u32 %v2816, 4294901760
  %2818 = vmatmul.f32.gmra.mxu0 %v2817
  %v2819 = vpop.f32.mrf.mxu0
  %v2820 = vadd.f32 %v2761, %v2819
  %v2821 = vand.u32 %v2583, 4294901760
  %v2822 = vsub.f32 %v2583, %v2821
  %v2823 = vand.u32 %v2822, 4294901760
  %2824 = vmatmul.f32.gmra.mxu0 %v2823
  %v2825 = vpop.f32.mrf.mxu0
  %v2826 = vadd.f32 %v2766, %v2825
  %v2827 = vand.u32 %v2586, 4294901760
  %v2828 = vsub.f32 %v2586, %v2827
  %v2829 = vand.u32 %v2828, 4294901760
  %2830 = vmatmul.f32.gmra.mxu0 %v2829
  %v2831 = vpop.f32.mrf.mxu0
  %v2832 = vadd.f32 %v2771, %v2831
  %v2833 = vand.u32 %v2589, 4294901760
  %v2834 = vsub.f32 %v2589, %v2833
  %v2835 = vand.u32 %v2834, 4294901760
  %2836 = vmatmul.f32.gmra.mxu0 %v2835
  %v2837 = vpop.f32.mrf.mxu0
  %v2838 = vadd.f32 %v2776, %v2837
  %v2839 = vand.u32 %v2592, 4294901760
  %v2840 = vsub.f32 %v2592, %v2839
  %v2841 = vand.u32 %v2840, 4294901760
  %2842 = vmatmul.f32.gmra.mxu0 %v2841
  %v2843 = vpop.f32.mrf.mxu0
  %v2844 = vadd.f32 %v2781, %v2843
  %v2845 = vand.u32 %v2595, 4294901760
  %v2846 = vsub.f32 %v2595, %v2845
  %v2847 = vand.u32 %v2846, 4294901760
  %2848 = vmatmul.f32.gmra.mxu0 %v2847
  %v2849 = vpop.f32.mrf.mxu0
  %v2850 = vadd.f32 %v2786, %v2849
  %v2851 = vand.u32 %v2598, 4294901760
  %v2852 = vsub.f32 %v2598, %v2851
  %v2853 = vand.u32 %v2852, 4294901760
  %2854 = vmatmul.f32.gmra.mxu0 %v2853
  %v2855 = vpop.f32.mrf.mxu0
  %v2856 = vadd.f32 %v2791, %v2855
  %v2857 = vand.u32 %v2601, 4294901760
  %v2858 = vsub.f32 %v2601, %v2857
  %v2859 = vand.u32 %v2858, 4294901760
  %2860 = vmatmul.f32.gmra.mxu0 %v2859
  %v2861 = vpop.f32.mrf.mxu0
  %v2862 = vadd.f32 %v2796, %v2861
  %2863 = vdwg.mxu0
  %2864 = vmatpush.msra.mxu0 0.0
  %2865 = vmatpush.msra.mxu0 0.0
  %2866 = vmatpush.msra.mxu0 0.0
  %2867 = vmatpush.msra.mxu0 0.0
  %2868 = vmatpush.msra.mxu0 0.0
  %2869 = vmatpush.msra.mxu0 0.0
  %2870 = vmatpush.msra.mxu0 0.0
  %2871 = vmatpush.msra.mxu0 0.0
  %2872 = vmatpush.msra.mxu0 0.0
  %2873 = vmatpush.msra.mxu0 0.0
  %2874 = vmatpush.msra.mxu0 0.0
  %2875 = vmatpush.msra.mxu0 0.0
  %2876 = vmatpush.msra.mxu0 0.0
  %2877 = vmatpush.msra.mxu0 0.0
  %2878 = vmatpush.msra.mxu0 0.0
  %v2879 = vand.u32 %v2578, 4294901760
  %v2880 = vsub.f32 %v2578, %v2879
  %v2881 = vand.u32 %v2880, 4294901760
  %2882 = vmatpush.msra.mxu0 %v2881
  %v2883 = vand.u32 %v2580, 4294901760
  %2884 = vmatmul.f32.gmra.mxu0 %v2883
  %v2885 = vpop.f32.mrf.mxu0
  %v2886 = vadd.f32 %v2820, %v2885
  %v2887 = vand.u32 %v2583, 4294901760
  %2888 = vmatmul.f32.gmra.mxu0 %v2887
  %v2889 = vpop.f32.mrf.mxu0
  %v2890 = vadd.f32 %v2826, %v2889
  %v2891 = vand.u32 %v2586, 4294901760
  %2892 = vmatmul.f32.gmra.mxu0 %v2891
  %v2893 = vpop.f32.mrf.mxu0
  %v2894 = vadd.f32 %v2832, %v2893
  %v2895 = vand.u32 %v2589, 4294901760
  %2896 = vmatmul.f32.gmra.mxu0 %v2895
  %v2897 = vpop.f32.mrf.mxu0
  %v2898 = vadd.f32 %v2838, %v2897
  %v2899 = vand.u32 %v2592, 4294901760
  %2900 = vmatmul.f32.gmra.mxu0 %v2899
  %v2901 = vpop.f32.mrf.mxu0
  %v2902 = vadd.f32 %v2844, %v2901
  %v2903 = vand.u32 %v2595, 4294901760
  %2904 = vmatmul.f32.gmra.mxu0 %v2903
  %v2905 = vpop.f32.mrf.mxu0
  %v2906 = vadd.f32 %v2850, %v2905
  %v2907 = vand.u32 %v2598, 4294901760
  %2908 = vmatmul.f32.gmra.mxu0 %v2907
  %v2909 = vpop.f32.mrf.mxu0
  %v2910 = vadd.f32 %v2856, %v2909
  %v2911 = vand.u32 %v2601, 4294901760
  %2912 = vmatmul.f32.gmra.mxu0 %v2911
  %v2913 = vpop.f32.mrf.mxu0
  %v2914 = vadd.f32 %v2862, %v2913
  %2915 = vdwg.mxu0
  %2916 = vmatpush.msra.mxu0 0.0
  %2917 = vmatpush.msra.mxu0 0.0
  %2918 = vmatpush.msra.mxu0 0.0
  %2919 = vmatpush.msra.mxu0 0.0
  %2920 = vmatpush.msra.mxu0 0.0
  %2921 = vmatpush.msra.mxu0 0.0
  %2922 = vmatpush.msra.mxu0 0.0
  %2923 = vmatpush.msra.mxu0 0.0
  %2924 = vmatpush.msra.mxu0 0.0
  %2925 = vmatpush.msra.mxu0 0.0
  %2926 = vmatpush.msra.mxu0 0.0
  %2927 = vmatpush.msra.mxu0 0.0
  %2928 = vmatpush.msra.mxu0 0.0
  %2929 = vmatpush.msra.mxu0 0.0
  %2930 = vmatpush.msra.mxu0 0.0
  %v2931 = vand.u32 %v2578, 4294901760
  %2932 = vmatpush.msra.mxu0 %v2931
  %v2933 = vand.u32 %v2580, 4294901760
  %2934 = vmatmul.f32.gmra.mxu0 %v2933
  %v2935 = vpop.f32.mrf.mxu0
  %v2936 = vadd.f32 %v2886, %v2935
  %v2937 = vand.u32 %v2583, 4294901760
  %2938 = vmatmul.f32.gmra.mxu0 %v2937
  %v2939 = vpop.f32.mrf.mxu0
  %v2940 = vadd.f32 %v2890, %v2939
  %v2941 = vand.u32 %v2586, 4294901760
  %2942 = vmatmul.f32.gmra.mxu0 %v2941
  %v2943 = vpop.f32.mrf.mxu0
  %v2944 = vadd.f32 %v2894, %v2943
  %v2945 = vand.u32 %v2589, 4294901760
  %2946 = vmatmul.f32.gmra.mxu0 %v2945
  %v2947 = vpop.f32.mrf.mxu0
  %v2948 = vadd.f32 %v2898, %v2947
  %v2949 = vand.u32 %v2592, 4294901760
  %2950 = vmatmul.f32.gmra.mxu0 %v2949
  %v2951 = vpop.f32.mrf.mxu0
  %v2952 = vadd.f32 %v2902, %v2951
  %v2953 = vand.u32 %v2595, 4294901760
  %2954 = vmatmul.f32.gmra.mxu0 %v2953
  %v2955 = vpop.f32.mrf.mxu0
  %v2956 = vadd.f32 %v2906, %v2955
  %v2957 = vand.u32 %v2598, 4294901760
  %2958 = vmatmul.f32.gmra.mxu0 %v2957
  %v2959 = vpop.f32.mrf.mxu0
  %v2960 = vadd.f32 %v2910, %v2959
  %v2961 = vand.u32 %v2601, 4294901760
  %2962 = vmatmul.f32.gmra.mxu0 %v2961
  %v2963 = vpop.f32.mrf.mxu0
  %v2964 = vadd.f32 %v2914, %v2963
  %2965 = vdwg.mxu0
  %v2967 = vsel %vm1175, %v2090, 0
  %v2970 = vsel %vm1175, %v2094, 0
  %v2973 = vsel %vm1175, %v2098, 0
  %v2976 = vsel %vm1175, %v2102, 0
  %v2979 = vsel %vm1175, %v2106, 0
  %v2982 = vsel %vm1175, %v2110, 0
  %v2985 = vsel %vm1175, %v2114, 0
  %v2988 = vsel %vm1175, %v2118, 0
  %2990 = vmatpush.msra.mxu0 0.0
  %2991 = vmatpush.msra.mxu0 0.0
  %2992 = vmatpush.msra.mxu0 0.0
  %2993 = vmatpush.msra.mxu0 0.0
  %2994 = vmatpush.msra.mxu0 0.0
  %2995 = vmatpush.msra.mxu0 0.0
  %2996 = vmatpush.msra.mxu0 0.0
  %2997 = vmatpush.msra.mxu0 0.0
  %2998 = vmatpush.msra.mxu0 0.0
  %2999 = vmatpush.msra.mxu0 0.0
  %3000 = vmatpush.msra.mxu0 0.0
  %3001 = vmatpush.msra.mxu0 0.0
  %v3002 = vand.u32 %v2577, 4294901760
  %3003 = vmatpush.msra.mxu0 %v3002
  %v3004 = vand.u32 %v2576, 4294901760
  %3005 = vmatpush.msra.mxu0 %v3004
  %v3006 = vand.u32 %v2575, 4294901760
  %3007 = vmatpush.msra.mxu0 %v3006
  %v3008 = vand.u32 %v2574, 4294901760
  %3009 = vmatpush.msra.mxu0 %v3008
  %v3010 = vand.u32 %v2967, 4294901760
  %v3011 = vsub.f32 %v2967, %v3010
  %v3012 = vand.u32 %v3011, 4294901760
  %v3013 = vsub.f32 %v3011, %v3012
  %v3014 = vand.u32 %v3013, 4294901760
  %3015 = vmatmul.f32.gmra.mxu0 %v3014
  %v3016 = vpop.f32.mrf.mxu0
  %v3017 = vadd.f32 %v2936, %v3016
  %v3018 = vand.u32 %v2970, 4294901760
  %v3019 = vsub.f32 %v2970, %v3018
  %v3020 = vand.u32 %v3019, 4294901760
  %v3021 = vsub.f32 %v3019, %v3020
  %v3022 = vand.u32 %v3021, 4294901760
  %3023 = vmatmul.f32.gmra.mxu0 %v3022
  %v3024 = vpop.f32.mrf.mxu0
  %v3025 = vadd.f32 %v2940, %v3024
  %v3026 = vand.u32 %v2973, 4294901760
  %v3027 = vsub.f32 %v2973, %v3026
  %v3028 = vand.u32 %v3027, 4294901760
  %v3029 = vsub.f32 %v3027, %v3028
  %v3030 = vand.u32 %v3029, 4294901760
  %3031 = vmatmul.f32.gmra.mxu0 %v3030
  %v3032 = vpop.f32.mrf.mxu0
  %v3033 = vadd.f32 %v2944, %v3032
  %v3034 = vand.u32 %v2976, 4294901760
  %v3035 = vsub.f32 %v2976, %v3034
  %v3036 = vand.u32 %v3035, 4294901760
  %v3037 = vsub.f32 %v3035, %v3036
  %v3038 = vand.u32 %v3037, 4294901760
  %3039 = vmatmul.f32.gmra.mxu0 %v3038
  %v3040 = vpop.f32.mrf.mxu0
  %v3041 = vadd.f32 %v2948, %v3040
  %v3042 = vand.u32 %v2979, 4294901760
  %v3043 = vsub.f32 %v2979, %v3042
  %v3044 = vand.u32 %v3043, 4294901760
  %v3045 = vsub.f32 %v3043, %v3044
  %v3046 = vand.u32 %v3045, 4294901760
  %3047 = vmatmul.f32.gmra.mxu0 %v3046
  %v3048 = vpop.f32.mrf.mxu0
  %v3049 = vadd.f32 %v2952, %v3048
  %v3050 = vand.u32 %v2982, 4294901760
  %v3051 = vsub.f32 %v2982, %v3050
  %v3052 = vand.u32 %v3051, 4294901760
  %v3053 = vsub.f32 %v3051, %v3052
  %v3054 = vand.u32 %v3053, 4294901760
  %3055 = vmatmul.f32.gmra.mxu0 %v3054
  %v3056 = vpop.f32.mrf.mxu0
  %v3057 = vadd.f32 %v2956, %v3056
  %v3058 = vand.u32 %v2985, 4294901760
  %v3059 = vsub.f32 %v2985, %v3058
  %v3060 = vand.u32 %v3059, 4294901760
  %v3061 = vsub.f32 %v3059, %v3060
  %v3062 = vand.u32 %v3061, 4294901760
  %3063 = vmatmul.f32.gmra.mxu0 %v3062
  %v3064 = vpop.f32.mrf.mxu0
  %v3065 = vadd.f32 %v2960, %v3064
  %v3066 = vand.u32 %v2988, 4294901760
  %v3067 = vsub.f32 %v2988, %v3066
  %v3068 = vand.u32 %v3067, 4294901760
  %v3069 = vsub.f32 %v3067, %v3068
  %v3070 = vand.u32 %v3069, 4294901760
  %3071 = vmatmul.f32.gmra.mxu0 %v3070
  %v3072 = vpop.f32.mrf.mxu0
  %v3073 = vadd.f32 %v2964, %v3072
  %3074 = vdwg.mxu0
  %3075 = vmatpush.msra.mxu0 0.0
  %3076 = vmatpush.msra.mxu0 0.0
  %3077 = vmatpush.msra.mxu0 0.0
  %3078 = vmatpush.msra.mxu0 0.0
  %3079 = vmatpush.msra.mxu0 0.0
  %3080 = vmatpush.msra.mxu0 0.0
  %3081 = vmatpush.msra.mxu0 0.0
  %3082 = vmatpush.msra.mxu0 0.0
  %3083 = vmatpush.msra.mxu0 0.0
  %3084 = vmatpush.msra.mxu0 0.0
  %3085 = vmatpush.msra.mxu0 0.0
  %3086 = vmatpush.msra.mxu0 0.0
  %v3087 = vand.u32 %v2577, 4294901760
  %v3088 = vsub.f32 %v2577, %v3087
  %v3089 = vand.u32 %v3088, 4294901760
  %v3090 = vsub.f32 %v3088, %v3089
  %v3091 = vand.u32 %v3090, 4294901760
  %3092 = vmatpush.msra.mxu0 %v3091
  %v3093 = vand.u32 %v2576, 4294901760
  %v3094 = vsub.f32 %v2576, %v3093
  %v3095 = vand.u32 %v3094, 4294901760
  %v3096 = vsub.f32 %v3094, %v3095
  %v3097 = vand.u32 %v3096, 4294901760
  %3098 = vmatpush.msra.mxu0 %v3097
  %v3099 = vand.u32 %v2575, 4294901760
  %v3100 = vsub.f32 %v2575, %v3099
  %v3101 = vand.u32 %v3100, 4294901760
  %v3102 = vsub.f32 %v3100, %v3101
  %v3103 = vand.u32 %v3102, 4294901760
  %3104 = vmatpush.msra.mxu0 %v3103
  %v3105 = vand.u32 %v2574, 4294901760
  %v3106 = vsub.f32 %v2574, %v3105
  %v3107 = vand.u32 %v3106, 4294901760
  %v3108 = vsub.f32 %v3106, %v3107
  %v3109 = vand.u32 %v3108, 4294901760
  %3110 = vmatpush.msra.mxu0 %v3109
  %v3111 = vand.u32 %v2967, 4294901760
  %3112 = vmatmul.f32.gmra.mxu0 %v3111
  %v3113 = vpop.f32.mrf.mxu0
  %v3114 = vadd.f32 %v3017, %v3113
  %v3115 = vand.u32 %v2970, 4294901760
  %3116 = vmatmul.f32.gmra.mxu0 %v3115
  %v3117 = vpop.f32.mrf.mxu0
  %v3118 = vadd.f32 %v3025, %v3117
  %v3119 = vand.u32 %v2973, 4294901760
  %3120 = vmatmul.f32.gmra.mxu0 %v3119
  %v3121 = vpop.f32.mrf.mxu0
  %v3122 = vadd.f32 %v3033, %v3121
  %v3123 = vand.u32 %v2976, 4294901760
  %3124 = vmatmul.f32.gmra.mxu0 %v3123
  %v3125 = vpop.f32.mrf.mxu0
  %v3126 = vadd.f32 %v3041, %v3125
  %v3127 = vand.u32 %v2979, 4294901760
  %3128 = vmatmul.f32.gmra.mxu0 %v3127
  %v3129 = vpop.f32.mrf.mxu0
  %v3130 = vadd.f32 %v3049, %v3129
  %v3131 = vand.u32 %v2982, 4294901760
  %3132 = vmatmul.f32.gmra.mxu0 %v3131
  %v3133 = vpop.f32.mrf.mxu0
  %v3134 = vadd.f32 %v3057, %v3133
  %v3135 = vand.u32 %v2985, 4294901760
  %3136 = vmatmul.f32.gmra.mxu0 %v3135
  %v3137 = vpop.f32.mrf.mxu0
  %v3138 = vadd.f32 %v3065, %v3137
  %v3139 = vand.u32 %v2988, 4294901760
  %3140 = vmatmul.f32.gmra.mxu0 %v3139
  %v3141 = vpop.f32.mrf.mxu0
  %v3142 = vadd.f32 %v3073, %v3141
  %3143 = vdwg.mxu0
  %3144 = vmatpush.msra.mxu0 0.0
  %3145 = vmatpush.msra.mxu0 0.0
  %3146 = vmatpush.msra.mxu0 0.0
  %3147 = vmatpush.msra.mxu0 0.0
  %3148 = vmatpush.msra.mxu0 0.0
  %3149 = vmatpush.msra.mxu0 0.0
  %3150 = vmatpush.msra.mxu0 0.0
  %3151 = vmatpush.msra.mxu0 0.0
  %3152 = vmatpush.msra.mxu0 0.0
  %3153 = vmatpush.msra.mxu0 0.0
  %3154 = vmatpush.msra.mxu0 0.0
  %3155 = vmatpush.msra.mxu0 0.0
  %v3156 = vand.u32 %v2577, 4294901760
  %v3157 = vsub.f32 %v2577, %v3156
  %3158 = vmatpush.msra.mxu0 %v3157
  %v3159 = vand.u32 %v2576, 4294901760
  %v3160 = vsub.f32 %v2576, %v3159
  %3161 = vmatpush.msra.mxu0 %v3160
  %v3162 = vand.u32 %v2575, 4294901760
  %v3163 = vsub.f32 %v2575, %v3162
  %3164 = vmatpush.msra.mxu0 %v3163
  %v3165 = vand.u32 %v2574, 4294901760
  %v3166 = vsub.f32 %v2574, %v3165
  %3167 = vmatpush.msra.mxu0 %v3166
  %v3168 = vand.u32 %v2967, 4294901760
  %v3169 = vsub.f32 %v2967, %v3168
  %3170 = vmatmul.f32.gmra.mxu0 %v3169
  %v3171 = vpop.f32.mrf.mxu0
  %v3172 = vadd.f32 %v3114, %v3171
  %v3173 = vand.u32 %v2970, 4294901760
  %v3174 = vsub.f32 %v2970, %v3173
  %3175 = vmatmul.f32.gmra.mxu0 %v3174
  %v3176 = vpop.f32.mrf.mxu0
  %v3177 = vadd.f32 %v3118, %v3176
  %v3178 = vand.u32 %v2973, 4294901760
  %v3179 = vsub.f32 %v2973, %v3178
  %3180 = vmatmul.f32.gmra.mxu0 %v3179
  %v3181 = vpop.f32.mrf.mxu0
  %v3182 = vadd.f32 %v3122, %v3181
  %v3183 = vand.u32 %v2976, 4294901760
  %v3184 = vsub.f32 %v2976, %v3183
  %3185 = vmatmul.f32.gmra.mxu0 %v3184
  %v3186 = vpop.f32.mrf.mxu0
  %v3187 = vadd.f32 %v3126, %v3186
  %v3188 = vand.u32 %v2979, 4294901760
  %v3189 = vsub.f32 %v2979, %v3188
  %3190 = vmatmul.f32.gmra.mxu0 %v3189
  %v3191 = vpop.f32.mrf.mxu0
  %v3192 = vadd.f32 %v3130, %v3191
  %v3193 = vand.u32 %v2982, 4294901760
  %v3194 = vsub.f32 %v2982, %v3193
  %3195 = vmatmul.f32.gmra.mxu0 %v3194
  %v3196 = vpop.f32.mrf.mxu0
  %v3197 = vadd.f32 %v3134, %v3196
  %v3198 = vand.u32 %v2985, 4294901760
  %v3199 = vsub.f32 %v2985, %v3198
  %3200 = vmatmul.f32.gmra.mxu0 %v3199
  %v3201 = vpop.f32.mrf.mxu0
  %v3202 = vadd.f32 %v3138, %v3201
  %v3203 = vand.u32 %v2988, 4294901760
  %v3204 = vsub.f32 %v2988, %v3203
  %3205 = vmatmul.f32.gmra.mxu0 %v3204
  %v3206 = vpop.f32.mrf.mxu0
  %v3207 = vadd.f32 %v3142, %v3206
  %3208 = vdwg.mxu0
  %3209 = vmatpush.msra.mxu0 0.0
  %3210 = vmatpush.msra.mxu0 0.0
  %3211 = vmatpush.msra.mxu0 0.0
  %3212 = vmatpush.msra.mxu0 0.0
  %3213 = vmatpush.msra.mxu0 0.0
  %3214 = vmatpush.msra.mxu0 0.0
  %3215 = vmatpush.msra.mxu0 0.0
  %3216 = vmatpush.msra.mxu0 0.0
  %3217 = vmatpush.msra.mxu0 0.0
  %3218 = vmatpush.msra.mxu0 0.0
  %3219 = vmatpush.msra.mxu0 0.0
  %3220 = vmatpush.msra.mxu0 0.0
  %v3221 = vand.u32 %v2577, 4294901760
  %3222 = vmatpush.msra.mxu0 %v3221
  %v3223 = vand.u32 %v2576, 4294901760
  %3224 = vmatpush.msra.mxu0 %v3223
  %v3225 = vand.u32 %v2575, 4294901760
  %3226 = vmatpush.msra.mxu0 %v3225
  %v3227 = vand.u32 %v2574, 4294901760
  %3228 = vmatpush.msra.mxu0 %v3227
  %v3229 = vand.u32 %v2967, 4294901760
  %v3230 = vsub.f32 %v2967, %v3229
  %v3231 = vand.u32 %v3230, 4294901760
  %3232 = vmatmul.f32.gmra.mxu0 %v3231
  %v3233 = vpop.f32.mrf.mxu0
  %v3234 = vadd.f32 %v3172, %v3233
  %v3235 = vand.u32 %v2970, 4294901760
  %v3236 = vsub.f32 %v2970, %v3235
  %v3237 = vand.u32 %v3236, 4294901760
  %3238 = vmatmul.f32.gmra.mxu0 %v3237
  %v3239 = vpop.f32.mrf.mxu0
  %v3240 = vadd.f32 %v3177, %v3239
  %v3241 = vand.u32 %v2973, 4294901760
  %v3242 = vsub.f32 %v2973, %v3241
  %v3243 = vand.u32 %v3242, 4294901760
  %3244 = vmatmul.f32.gmra.mxu0 %v3243
  %v3245 = vpop.f32.mrf.mxu0
  %v3246 = vadd.f32 %v3182, %v3245
  %v3247 = vand.u32 %v2976, 4294901760
  %v3248 = vsub.f32 %v2976, %v3247
  %v3249 = vand.u32 %v3248, 4294901760
  %3250 = vmatmul.f32.gmra.mxu0 %v3249
  %v3251 = vpop.f32.mrf.mxu0
  %v3252 = vadd.f32 %v3187, %v3251
  %v3253 = vand.u32 %v2979, 4294901760
  %v3254 = vsub.f32 %v2979, %v3253
  %v3255 = vand.u32 %v3254, 4294901760
  %3256 = vmatmul.f32.gmra.mxu0 %v3255
  %v3257 = vpop.f32.mrf.mxu0
  %v3258 = vadd.f32 %v3192, %v3257
  %v3259 = vand.u32 %v2982, 4294901760
  %v3260 = vsub.f32 %v2982, %v3259
  %v3261 = vand.u32 %v3260, 4294901760
  %3262 = vmatmul.f32.gmra.mxu0 %v3261
  %v3263 = vpop.f32.mrf.mxu0
  %v3264 = vadd.f32 %v3197, %v3263
  %v3265 = vand.u32 %v2985, 4294901760
  %v3266 = vsub.f32 %v2985, %v3265
  %v3267 = vand.u32 %v3266, 4294901760
  %3268 = vmatmul.f32.gmra.mxu0 %v3267
  %v3269 = vpop.f32.mrf.mxu0
  %v3270 = vadd.f32 %v3202, %v3269
  %v3271 = vand.u32 %v2988, 4294901760
  %v3272 = vsub.f32 %v2988, %v3271
  %v3273 = vand.u32 %v3272, 4294901760
  %3274 = vmatmul.f32.gmra.mxu0 %v3273
  %v3275 = vpop.f32.mrf.mxu0
  %v3276 = vadd.f32 %v3207, %v3275
  %3277 = vdwg.mxu0
  %3278 = vmatpush.msra.mxu0 0.0
  %3279 = vmatpush.msra.mxu0 0.0
  %3280 = vmatpush.msra.mxu0 0.0
  %3281 = vmatpush.msra.mxu0 0.0
  %3282 = vmatpush.msra.mxu0 0.0
  %3283 = vmatpush.msra.mxu0 0.0
  %3284 = vmatpush.msra.mxu0 0.0
  %3285 = vmatpush.msra.mxu0 0.0
  %3286 = vmatpush.msra.mxu0 0.0
  %3287 = vmatpush.msra.mxu0 0.0
  %3288 = vmatpush.msra.mxu0 0.0
  %3289 = vmatpush.msra.mxu0 0.0
  %v3290 = vand.u32 %v2577, 4294901760
  %v3291 = vsub.f32 %v2577, %v3290
  %v3292 = vand.u32 %v3291, 4294901760
  %3293 = vmatpush.msra.mxu0 %v3292
  %v3294 = vand.u32 %v2576, 4294901760
  %v3295 = vsub.f32 %v2576, %v3294
  %v3296 = vand.u32 %v3295, 4294901760
  %3297 = vmatpush.msra.mxu0 %v3296
  %v3298 = vand.u32 %v2575, 4294901760
  %v3299 = vsub.f32 %v2575, %v3298
  %v3300 = vand.u32 %v3299, 4294901760
  %3301 = vmatpush.msra.mxu0 %v3300
  %v3302 = vand.u32 %v2574, 4294901760
  %v3303 = vsub.f32 %v2574, %v3302
  %v3304 = vand.u32 %v3303, 4294901760
  %3305 = vmatpush.msra.mxu0 %v3304
  %v3306 = vand.u32 %v2967, 4294901760
  %3307 = vmatmul.f32.gmra.mxu0 %v3306
  %v3308 = vpop.f32.mrf.mxu0
  %v3309 = vadd.f32 %v3234, %v3308
  %v3310 = vand.u32 %v2970, 4294901760
  %3311 = vmatmul.f32.gmra.mxu0 %v3310
  %v3312 = vpop.f32.mrf.mxu0
  %v3313 = vadd.f32 %v3240, %v3312
  %v3314 = vand.u32 %v2973, 4294901760
  %3315 = vmatmul.f32.gmra.mxu0 %v3314
  %v3316 = vpop.f32.mrf.mxu0
  %v3317 = vadd.f32 %v3246, %v3316
  %v3318 = vand.u32 %v2976, 4294901760
  %3319 = vmatmul.f32.gmra.mxu0 %v3318
  %v3320 = vpop.f32.mrf.mxu0
  %v3321 = vadd.f32 %v3252, %v3320
  %v3322 = vand.u32 %v2979, 4294901760
  %3323 = vmatmul.f32.gmra.mxu0 %v3322
  %v3324 = vpop.f32.mrf.mxu0
  %v3325 = vadd.f32 %v3258, %v3324
  %v3326 = vand.u32 %v2982, 4294901760
  %3327 = vmatmul.f32.gmra.mxu0 %v3326
  %v3328 = vpop.f32.mrf.mxu0
  %v3329 = vadd.f32 %v3264, %v3328
  %v3330 = vand.u32 %v2985, 4294901760
  %3331 = vmatmul.f32.gmra.mxu0 %v3330
  %v3332 = vpop.f32.mrf.mxu0
  %v3333 = vadd.f32 %v3270, %v3332
  %v3334 = vand.u32 %v2988, 4294901760
  %3335 = vmatmul.f32.gmra.mxu0 %v3334
  %v3336 = vpop.f32.mrf.mxu0
  %v3337 = vadd.f32 %v3276, %v3336
  %3338 = vdwg.mxu0
  %3339 = vmatpush.msra.mxu0 0.0
  %3340 = vmatpush.msra.mxu0 0.0
  %3341 = vmatpush.msra.mxu0 0.0
  %3342 = vmatpush.msra.mxu0 0.0
  %3343 = vmatpush.msra.mxu0 0.0
  %3344 = vmatpush.msra.mxu0 0.0
  %3345 = vmatpush.msra.mxu0 0.0
  %3346 = vmatpush.msra.mxu0 0.0
  %3347 = vmatpush.msra.mxu0 0.0
  %3348 = vmatpush.msra.mxu0 0.0
  %3349 = vmatpush.msra.mxu0 0.0
  %3350 = vmatpush.msra.mxu0 0.0
  %v3351 = vand.u32 %v2577, 4294901760
  %3352 = vmatpush.msra.mxu0 %v3351
  %v3353 = vand.u32 %v2576, 4294901760
  %3354 = vmatpush.msra.mxu0 %v3353
  %v3355 = vand.u32 %v2575, 4294901760
  %3356 = vmatpush.msra.mxu0 %v3355
  %v3357 = vand.u32 %v2574, 4294901760
  %3358 = vmatpush.msra.mxu0 %v3357
  %v3359 = vand.u32 %v2967, 4294901760
  %3360 = vmatmul.f32.gmra.mxu0 %v3359
  %v3361 = vpop.f32.mrf.mxu0
  %v3362 = vadd.f32 %v3309, %v3361
  %v3363 = vand.u32 %v2970, 4294901760
  %3364 = vmatmul.f32.gmra.mxu0 %v3363
  %v3365 = vpop.f32.mrf.mxu0
  %v3366 = vadd.f32 %v3313, %v3365
  %v3367 = vand.u32 %v2973, 4294901760
  %3368 = vmatmul.f32.gmra.mxu0 %v3367
  %v3369 = vpop.f32.mrf.mxu0
  %v3370 = vadd.f32 %v3317, %v3369
  %v3371 = vand.u32 %v2976, 4294901760
  %3372 = vmatmul.f32.gmra.mxu0 %v3371
  %v3373 = vpop.f32.mrf.mxu0
  %v3374 = vadd.f32 %v3321, %v3373
  %v3375 = vand.u32 %v2979, 4294901760
  %3376 = vmatmul.f32.gmra.mxu0 %v3375
  %v3377 = vpop.f32.mrf.mxu0
  %v3378 = vadd.f32 %v3325, %v3377
  %v3379 = vand.u32 %v2982, 4294901760
  %3380 = vmatmul.f32.gmra.mxu0 %v3379
  %v3381 = vpop.f32.mrf.mxu0
  %v3382 = vadd.f32 %v3329, %v3381
  %v3383 = vand.u32 %v2985, 4294901760
  %3384 = vmatmul.f32.gmra.mxu0 %v3383
  %v3385 = vpop.f32.mrf.mxu0
  %v3386 = vadd.f32 %v3333, %v3385
  %v3387 = vand.u32 %v2988, 4294901760
  %3388 = vmatmul.f32.gmra.mxu0 %v3387
  %v3389 = vpop.f32.mrf.mxu0
  %v3390 = vadd.f32 %v3337, %v3389
  %3391 = vdwg.mxu0
  %v3392 = vld [vmem:[%s15] sm:$0x1]
  %v3394 = vperm.slane %v3392, 0
  %v3396 = vadd.f32 %v3362, %v3394
  %v3397 = vadd.f32 %v3366, %v3394
  %v3398 = vadd.f32 %v3370, %v3394
  %v3399 = vadd.f32 %v3374, %v3394
  %v3400 = vadd.f32 %v3378, %v3394
  %v3401 = vadd.f32 %v3382, %v3394
  %v3402 = vadd.f32 %v3386, %v3394
  %v3403 = vadd.f32 %v3390, %v3394
  %v3404 = vld [vmem:[%s14] sm:$0xff]
  %v3405 = vld [vmem:[%s14 + $0x8] sm:$0xff]
  %v3406 = vld [vmem:[%s14 + $0x10] sm:$0xff]
  %v3407 = vld [vmem:[%s14 + $0x18] sm:$0xff]
  %v3409 = vsel %vm1175, %v1520, 0
  %3411 = vmatpush.msra.mxu0 0.0
  %3412 = vmatpush.msra.mxu0 0.0
  %3413 = vmatpush.msra.mxu0 0.0
  %3414 = vmatpush.msra.mxu0 0.0
  %3415 = vmatpush.msra.mxu0 0.0
  %3416 = vmatpush.msra.mxu0 0.0
  %3417 = vmatpush.msra.mxu0 0.0
  %3418 = vmatpush.msra.mxu0 0.0
  %3419 = vmatpush.msra.mxu0 0.0
  %3420 = vmatpush.msra.mxu0 0.0
  %3421 = vmatpush.msra.mxu0 0.0
  %3422 = vmatpush.msra.mxu0 0.0
  %v3423 = vand.u32 %v3407, 4294901760
  %3424 = vmatpush.msra.mxu0 %v3423
  %v3425 = vand.u32 %v3406, 4294901760
  %3426 = vmatpush.msra.mxu0 %v3425
  %v3427 = vand.u32 %v3405, 4294901760
  %3428 = vmatpush.msra.mxu0 %v3427
  %v3429 = vand.u32 %v3404, 4294901760
  %3430 = vmatpush.msra.mxu0 %v3429
  %v3431 = vand.u32 %v3409, 4294901760
  %v3432 = vsub.f32 %v3409, %v3431
  %v3433 = vand.u32 %v3432, 4294901760
  %v3434 = vsub.f32 %v3432, %v3433
  %v3435 = vand.u32 %v3434, 4294901760
  %3436 = vmatmul.f32.gmra.mxu0 %v3435
  %v3437 = vpop.f32.mrf.mxu0
  %v3438 = vadd.f32 0.0, %v3437
  %3439 = vdwg.mxu0
  %3440 = vmatpush.msra.mxu0 0.0
  %3441 = vmatpush.msra.mxu0 0.0
  %3442 = vmatpush.msra.mxu0 0.0
  %3443 = vmatpush.msra.mxu0 0.0
  %3444 = vmatpush.msra.mxu0 0.0
  %3445 = vmatpush.msra.mxu0 0.0
  %3446 = vmatpush.msra.mxu0 0.0
  %3447 = vmatpush.msra.mxu0 0.0
  %3448 = vmatpush.msra.mxu0 0.0
  %3449 = vmatpush.msra.mxu0 0.0
  %3450 = vmatpush.msra.mxu0 0.0
  %3451 = vmatpush.msra.mxu0 0.0
  %v3452 = vand.u32 %v3407, 4294901760
  %v3453 = vsub.f32 %v3407, %v3452
  %v3454 = vand.u32 %v3453, 4294901760
  %v3455 = vsub.f32 %v3453, %v3454
  %v3456 = vand.u32 %v3455, 4294901760
  %3457 = vmatpush.msra.mxu0 %v3456
  %v3458 = vand.u32 %v3406, 4294901760
  %v3459 = vsub.f32 %v3406, %v3458
  %v3460 = vand.u32 %v3459, 4294901760
  %v3461 = vsub.f32 %v3459, %v3460
  %v3462 = vand.u32 %v3461, 4294901760
  %3463 = vmatpush.msra.mxu0 %v3462
  %v3464 = vand.u32 %v3405, 4294901760
  %v3465 = vsub.f32 %v3405, %v3464
  %v3466 = vand.u32 %v3465, 4294901760
  %v3467 = vsub.f32 %v3465, %v3466
  %v3468 = vand.u32 %v3467, 4294901760
  %3469 = vmatpush.msra.mxu0 %v3468
  %v3470 = vand.u32 %v3404, 4294901760
  %v3471 = vsub.f32 %v3404, %v3470
  %v3472 = vand.u32 %v3471, 4294901760
  %v3473 = vsub.f32 %v3471, %v3472
  %v3474 = vand.u32 %v3473, 4294901760
  %3475 = vmatpush.msra.mxu0 %v3474
  %v3476 = vand.u32 %v3409, 4294901760
  %3477 = vmatmul.f32.gmra.mxu0 %v3476
  %v3478 = vpop.f32.mrf.mxu0
  %v3479 = vadd.f32 %v3438, %v3478
  %3480 = vdwg.mxu0
  %3481 = vmatpush.msra.mxu0 0.0
  %3482 = vmatpush.msra.mxu0 0.0
  %3483 = vmatpush.msra.mxu0 0.0
  %3484 = vmatpush.msra.mxu0 0.0
  %3485 = vmatpush.msra.mxu0 0.0
  %3486 = vmatpush.msra.mxu0 0.0
  %3487 = vmatpush.msra.mxu0 0.0
  %3488 = vmatpush.msra.mxu0 0.0
  %3489 = vmatpush.msra.mxu0 0.0
  %3490 = vmatpush.msra.mxu0 0.0
  %3491 = vmatpush.msra.mxu0 0.0
  %3492 = vmatpush.msra.mxu0 0.0
  %v3493 = vand.u32 %v3407, 4294901760
  %v3494 = vsub.f32 %v3407, %v3493
  %3495 = vmatpush.msra.mxu0 %v3494
  %v3496 = vand.u32 %v3406, 4294901760
  %v3497 = vsub.f32 %v3406, %v3496
  %3498 = vmatpush.msra.mxu0 %v3497
  %v3499 = vand.u32 %v3405, 4294901760
  %v3500 = vsub.f32 %v3405, %v3499
  %3501 = vmatpush.msra.mxu0 %v3500
  %v3502 = vand.u32 %v3404, 4294901760
  %v3503 = vsub.f32 %v3404, %v3502
  %3504 = vmatpush.msra.mxu0 %v3503
  %v3505 = vand.u32 %v3409, 4294901760
  %v3506 = vsub.f32 %v3409, %v3505
  %3507 = vmatmul.f32.gmra.mxu0 %v3506
  %v3508 = vpop.f32.mrf.mxu0
  %v3509 = vadd.f32 %v3479, %v3508
  %3510 = vdwg.mxu0
  %3511 = vmatpush.msra.mxu0 0.0
  %3512 = vmatpush.msra.mxu0 0.0
  %3513 = vmatpush.msra.mxu0 0.0
  %3514 = vmatpush.msra.mxu0 0.0
  %3515 = vmatpush.msra.mxu0 0.0
  %3516 = vmatpush.msra.mxu0 0.0
  %3517 = vmatpush.msra.mxu0 0.0
  %3518 = vmatpush.msra.mxu0 0.0
  %3519 = vmatpush.msra.mxu0 0.0
  %3520 = vmatpush.msra.mxu0 0.0
  %3521 = vmatpush.msra.mxu0 0.0
  %3522 = vmatpush.msra.mxu0 0.0
  %v3523 = vand.u32 %v3407, 4294901760
  %3524 = vmatpush.msra.mxu0 %v3523
  %v3525 = vand.u32 %v3406, 4294901760
  %3526 = vmatpush.msra.mxu0 %v3525
  %v3527 = vand.u32 %v3405, 4294901760
  %3528 = vmatpush.msra.mxu0 %v3527
  %v3529 = vand.u32 %v3404, 4294901760
  %3530 = vmatpush.msra.mxu0 %v3529
  %v3531 = vand.u32 %v3409, 4294901760
  %v3532 = vsub.f32 %v3409, %v3531
  %v3533 = vand.u32 %v3532, 4294901760
  %3534 = vmatmul.f32.gmra.mxu0 %v3533
  %v3535 = vpop.f32.mrf.mxu0
  %v3536 = vadd.f32 %v3509, %v3535
  %3537 = vdwg.mxu0
  %3538 = vmatpush.msra.mxu0 0.0
  %3539 = vmatpush.msra.mxu0 0.0
  %3540 = vmatpush.msra.mxu0 0.0
  %3541 = vmatpush.msra.mxu0 0.0
  %3542 = vmatpush.msra.mxu0 0.0
  %3543 = vmatpush.msra.mxu0 0.0
  %3544 = vmatpush.msra.mxu0 0.0
  %3545 = vmatpush.msra.mxu0 0.0
  %3546 = vmatpush.msra.mxu0 0.0
  %3547 = vmatpush.msra.mxu0 0.0
  %3548 = vmatpush.msra.mxu0 0.0
  %3549 = vmatpush.msra.mxu0 0.0
  %v3550 = vand.u32 %v3407, 4294901760
  %v3551 = vsub.f32 %v3407, %v3550
  %v3552 = vand.u32 %v3551, 4294901760
  %3553 = vmatpush.msra.mxu0 %v3552
  %v3554 = vand.u32 %v3406, 4294901760
  %v3555 = vsub.f32 %v3406, %v3554
  %v3556 = vand.u32 %v3555, 4294901760
  %3557 = vmatpush.msra.mxu0 %v3556
  %v3558 = vand.u32 %v3405, 4294901760
  %v3559 = vsub.f32 %v3405, %v3558
  %v3560 = vand.u32 %v3559, 4294901760
  %3561 = vmatpush.msra.mxu0 %v3560
  %v3562 = vand.u32 %v3404, 4294901760
  %v3563 = vsub.f32 %v3404, %v3562
  %v3564 = vand.u32 %v3563, 4294901760
  %3565 = vmatpush.msra.mxu0 %v3564
  %v3566 = vand.u32 %v3409, 4294901760
  %3567 = vmatmul.f32.gmra.mxu0 %v3566
  %v3568 = vpop.f32.mrf.mxu0
  %v3569 = vadd.f32 %v3536, %v3568
  %3570 = vdwg.mxu0
  %3571 = vmatpush.msra.mxu0 0.0
  %3572 = vmatpush.msra.mxu0 0.0
  %3573 = vmatpush.msra.mxu0 0.0
  %3574 = vmatpush.msra.mxu0 0.0
  %3575 = vmatpush.msra.mxu0 0.0
  %3576 = vmatpush.msra.mxu0 0.0
  %3577 = vmatpush.msra.mxu0 0.0
  %3578 = vmatpush.msra.mxu0 0.0
  %3579 = vmatpush.msra.mxu0 0.0
  %3580 = vmatpush.msra.mxu0 0.0
  %3581 = vmatpush.msra.mxu0 0.0
  %3582 = vmatpush.msra.mxu0 0.0
  %v3583 = vand.u32 %v3407, 4294901760
  %3584 = vmatpush.msra.mxu0 %v3583
  %v3585 = vand.u32 %v3406, 4294901760
  %3586 = vmatpush.msra.mxu0 %v3585
  %v3587 = vand.u32 %v3405, 4294901760
  %3588 = vmatpush.msra.mxu0 %v3587
  %v3589 = vand.u32 %v3404, 4294901760
  %3590 = vmatpush.msra.mxu0 %v3589
  %v3591 = vand.u32 %v3409, 4294901760
  %3592 = vmatmul.f32.gmra.mxu0 %v3591
  %v3593 = vpop.f32.mrf.mxu0
  %v3594 = vadd.f32 %v3569, %v3593
  %3595 = vdwg.mxu0
  %v3596 = vadd.f32 %v3396, %v3594
  %v3597 = vtanh.pop %v3596
  %3598 = vst.msk [vmem:[#allocation2] sm:$0xff] %vm1175, %v3597
  %v3600 = vsel %vm1175, %v3597, 0
  %3602 = vmatpush.msra.mxu0 0.0
  %3603 = vmatpush.msra.mxu0 0.0
  %3604 = vmatpush.msra.mxu0 0.0
  %3605 = vmatpush.msra.mxu0 0.0
  %3606 = vmatpush.msra.mxu0 0.0
  %3607 = vmatpush.msra.mxu0 0.0
  %3608 = vmatpush.msra.mxu0 0.0
  %3609 = vmatpush.msra.mxu0 0.0
  %3610 = vmatpush.msra.mxu0 0.0
  %3611 = vmatpush.msra.mxu0 0.0
  %3612 = vmatpush.msra.mxu0 0.0
  %3613 = vmatpush.msra.mxu0 0.0
  %v3614 = vand.u32 %v3407, 4294901760
  %3615 = vmatpush.msra.mxu0 %v3614
  %v3616 = vand.u32 %v3406, 4294901760
  %3617 = vmatpush.msra.mxu0 %v3616
  %v3618 = vand.u32 %v3405, 4294901760
  %3619 = vmatpush.msra.mxu0 %v3618
  %v3620 = vand.u32 %v3404, 4294901760
  %3621 = vmatpush.msra.mxu0 %v3620
  %v3622 = vand.u32 %v3600, 4294901760
  %v3623 = vsub.f32 %v3600, %v3622
  %v3624 = vand.u32 %v3623, 4294901760
  %v3625 = vsub.f32 %v3623, %v3624
  %v3626 = vand.u32 %v3625, 4294901760
  %3627 = vmatmul.f32.gmra.mxu0 %v3626
  %v3628 = vpop.f32.mrf.mxu0
  %v3629 = vadd.f32 0.0, %v3628
  %3630 = vdwg.mxu0
  %3631 = vmatpush.msra.mxu0 0.0
  %3632 = vmatpush.msra.mxu0 0.0
  %3633 = vmatpush.msra.mxu0 0.0
  %3634 = vmatpush.msra.mxu0 0.0
  %3635 = vmatpush.msra.mxu0 0.0
  %3636 = vmatpush.msra.mxu0 0.0
  %3637 = vmatpush.msra.mxu0 0.0
  %3638 = vmatpush.msra.mxu0 0.0
  %3639 = vmatpush.msra.mxu0 0.0
  %3640 = vmatpush.msra.mxu0 0.0
  %3641 = vmatpush.msra.mxu0 0.0
  %3642 = vmatpush.msra.mxu0 0.0
  %v3643 = vand.u32 %v3407, 4294901760
  %v3644 = vsub.f32 %v3407, %v3643
  %v3645 = vand.u32 %v3644, 4294901760
  %v3646 = vsub.f32 %v3644, %v3645
  %v3647 = vand.u32 %v3646, 4294901760
  %3648 = vmatpush.msra.mxu0 %v3647
  %v3649 = vand.u32 %v3406, 4294901760
  %v3650 = vsub.f32 %v3406, %v3649
  %v3651 = vand.u32 %v3650, 4294901760
  %v3652 = vsub.f32 %v3650, %v3651
  %v3653 = vand.u32 %v3652, 4294901760
  %3654 = vmatpush.msra.mxu0 %v3653
  %v3655 = vand.u32 %v3405, 4294901760
  %v3656 = vsub.f32 %v3405, %v3655
  %v3657 = vand.u32 %v3656, 4294901760
  %v3658 = vsub.f32 %v3656, %v3657
  %v3659 = vand.u32 %v3658, 4294901760
  %3660 = vmatpush.msra.mxu0 %v3659
  %v3661 = vand.u32 %v3404, 4294901760
  %v3662 = vsub.f32 %v3404, %v3661
  %v3663 = vand.u32 %v3662, 4294901760
  %v3664 = vsub.f32 %v3662, %v3663
  %v3665 = vand.u32 %v3664, 4294901760
  %3666 = vmatpush.msra.mxu0 %v3665
  %v3667 = vand.u32 %v3600, 4294901760
  %3668 = vmatmul.f32.gmra.mxu0 %v3667
  %v3669 = vpop.f32.mrf.mxu0
  %v3670 = vadd.f32 %v3629, %v3669
  %3671 = vdwg.mxu0
  %3672 = vmatpush.msra.mxu0 0.0
  %3673 = vmatpush.msra.mxu0 0.0
  %3674 = vmatpush.msra.mxu0 0.0
  %3675 = vmatpush.msra.mxu0 0.0
  %3676 = vmatpush.msra.mxu0 0.0
  %3677 = vmatpush.msra.mxu0 0.0
  %3678 = vmatpush.msra.mxu0 0.0
  %3679 = vmatpush.msra.mxu0 0.0
  %3680 = vmatpush.msra.mxu0 0.0
  %3681 = vmatpush.msra.mxu0 0.0
  %3682 = vmatpush.msra.mxu0 0.0
  %3683 = vmatpush.msra.mxu0 0.0
  %v3684 = vand.u32 %v3407, 4294901760
  %v3685 = vsub.f32 %v3407, %v3684
  %3686 = vmatpush.msra.mxu0 %v3685
  %v3687 = vand.u32 %v3406, 4294901760
  %v3688 = vsub.f32 %v3406, %v3687
  %3689 = vmatpush.msra.mxu0 %v3688
  %v3690 = vand.u32 %v3405, 4294901760
  %v3691 = vsub.f32 %v3405, %v3690
  %3692 = vmatpush.msra.mxu0 %v3691
  %v3693 = vand.u32 %v3404, 4294901760
  %v3694 = vsub.f32 %v3404, %v3693
  %3695 = vmatpush.msra.mxu0 %v3694
  %v3696 = vand.u32 %v3600, 4294901760
  %v3697 = vsub.f32 %v3600, %v3696
  %3698 = vmatmul.f32.gmra.mxu0 %v3697
  %v3699 = vpop.f32.mrf.mxu0
  %v3700 = vadd.f32 %v3670, %v3699
  %3701 = vdwg.mxu0
  %3702 = vmatpush.msra.mxu0 0.0
  %3703 = vmatpush.msra.mxu0 0.0
  %3704 = vmatpush.msra.mxu0 0.0
  %3705 = vmatpush.msra.mxu0 0.0
  %3706 = vmatpush.msra.mxu0 0.0
  %3707 = vmatpush.msra.mxu0 0.0
  %3708 = vmatpush.msra.mxu0 0.0
  %3709 = vmatpush.msra.mxu0 0.0
  %3710 = vmatpush.msra.mxu0 0.0
  %3711 = vmatpush.msra.mxu0 0.0
  %3712 = vmatpush.msra.mxu0 0.0
  %3713 = vmatpush.msra.mxu0 0.0
  %v3714 = vand.u32 %v3407, 4294901760
  %3715 = vmatpush.msra.mxu0 %v3714
  %v3716 = vand.u32 %v3406, 4294901760
  %3717 = vmatpush.msra.mxu0 %v3716
  %v3718 = vand.u32 %v3405, 4294901760
  %3719 = vmatpush.msra.mxu0 %v3718
  %v3720 = vand.u32 %v3404, 4294901760
  %3721 = vmatpush.msra.mxu0 %v3720
  %v3722 = vand.u32 %v3600, 4294901760
  %v3723 = vsub.f32 %v3600, %v3722
  %v3724 = vand.u32 %v3723, 4294901760
  %3725 = vmatmul.f32.gmra.mxu0 %v3724
  %v3726 = vpop.f32.mrf.mxu0
  %v3727 = vadd.f32 %v3700, %v3726
  %3728 = vdwg.mxu0
  %3729 = vmatpush.msra.mxu0 0.0
  %3730 = vmatpush.msra.mxu0 0.0
  %3731 = vmatpush.msra.mxu0 0.0
  %3732 = vmatpush.msra.mxu0 0.0
  %3733 = vmatpush.msra.mxu0 0.0
  %3734 = vmatpush.msra.mxu0 0.0
  %3735 = vmatpush.msra.mxu0 0.0
  %3736 = vmatpush.msra.mxu0 0.0
  %3737 = vmatpush.msra.mxu0 0.0
  %3738 = vmatpush.msra.mxu0 0.0
  %3739 = vmatpush.msra.mxu0 0.0
  %3740 = vmatpush.msra.mxu0 0.0
  %v3741 = vand.u32 %v3407, 4294901760
  %v3742 = vsub.f32 %v3407, %v3741
  %v3743 = vand.u32 %v3742, 4294901760
  %3744 = vmatpush.msra.mxu0 %v3743
  %v3745 = vand.u32 %v3406, 4294901760
  %v3746 = vsub.f32 %v3406, %v3745
  %v3747 = vand.u32 %v3746, 4294901760
  %3748 = vmatpush.msra.mxu0 %v3747
  %v3749 = vand.u32 %v3405, 4294901760
  %v3750 = vsub.f32 %v3405, %v3749
  %v3751 = vand.u32 %v3750, 4294901760
  %3752 = vmatpush.msra.mxu0 %v3751
  %v3753 = vand.u32 %v3404, 4294901760
  %v3754 = vsub.f32 %v3404, %v3753
  %v3755 = vand.u32 %v3754, 4294901760
  %3756 = vmatpush.msra.mxu0 %v3755
  %v3757 = vand.u32 %v3600, 4294901760
  %3758 = vmatmul.f32.gmra.mxu0 %v3757
  %v3759 = vpop.f32.mrf.mxu0
  %v3760 = vadd.f32 %v3727, %v3759
  %3761 = vdwg.mxu0
  %3762 = vmatpush.msra.mxu0 0.0
  %3763 = vmatpush.msra.mxu0 0.0
  %3764 = vmatpush.msra.mxu0 0.0
  %3765 = vmatpush.msra.mxu0 0.0
  %3766 = vmatpush.msra.mxu0 0.0
  %3767 = vmatpush.msra.mxu0 0.0
  %3768 = vmatpush.msra.mxu0 0.0
  %3769 = vmatpush.msra.mxu0 0.0
  %3770 = vmatpush.msra.mxu0 0.0
  %3771 = vmatpush.msra.mxu0 0.0
  %3772 = vmatpush.msra.mxu0 0.0
  %3773 = vmatpush.msra.mxu0 0.0
  %v3774 = vand.u32 %v3407, 4294901760
  %3775 = vmatpush.msra.mxu0 %v3774
  %v3776 = vand.u32 %v3406, 4294901760
  %3777 = vmatpush.msra.mxu0 %v3776
  %v3778 = vand.u32 %v3405, 4294901760
  %3779 = vmatpush.msra.mxu0 %v3778
  %v3780 = vand.u32 %v3404, 4294901760
  %3781 = vmatpush.msra.mxu0 %v3780
  %v3782 = vand.u32 %v3600, 4294901760
  %3783 = vmatmul.f32.gmra.mxu0 %v3782
  %v3784 = vpop.f32.mrf.mxu0
  %v3785 = vadd.f32 %v3760, %v3784
  %3786 = vdwg.mxu0
  %v3787 = vadd.f32 %v3397, %v3785
  %v3788 = vtanh.pop %v3787
  %3789 = vst.msk [vmem:[#allocation2 + $0x8] sm:$0xff] %vm1175, %v3788
  %v3791 = vsel %vm1175, %v3788, 0
  %3793 = vmatpush.msra.mxu0 0.0
  %3794 = vmatpush.msra.mxu0 0.0
  %3795 = vmatpush.msra.mxu0 0.0
  %3796 = vmatpush.msra.mxu0 0.0
  %3797 = vmatpush.msra.mxu0 0.0
  %3798 = vmatpush.msra.mxu0 0.0
  %3799 = vmatpush.msra.mxu0 0.0
  %3800 = vmatpush.msra.mxu0 0.0
  %3801 = vmatpush.msra.mxu0 0.0
  %3802 = vmatpush.msra.mxu0 0.0
  %3803 = vmatpush.msra.mxu0 0.0
  %3804 = vmatpush.msra.mxu0 0.0
  %v3805 = vand.u32 %v3407, 4294901760
  %3806 = vmatpush.msra.mxu0 %v3805
  %v3807 = vand.u32 %v3406, 4294901760
  %3808 = vmatpush.msra.mxu0 %v3807
  %v3809 = vand.u32 %v3405, 4294901760
  %3810 = vmatpush.msra.mxu0 %v3809
  %v3811 = vand.u32 %v3404, 4294901760
  %3812 = vmatpush.msra.mxu0 %v3811
  %v3813 = vand.u32 %v3791, 4294901760
  %v3814 = vsub.f32 %v3791, %v3813
  %v3815 = vand.u32 %v3814, 4294901760
  %v3816 = vsub.f32 %v3814, %v3815
  %v3817 = vand.u32 %v3816, 4294901760
  %3818 = vmatmul.f32.gmra.mxu0 %v3817
  %v3819 = vpop.f32.mrf.mxu0
  %v3820 = vadd.f32 0.0, %v3819
  %3821 = vdwg.mxu0
  %3822 = vmatpush.msra.mxu0 0.0
  %3823 = vmatpush.msra.mxu0 0.0
  %3824 = vmatpush.msra.mxu0 0.0
  %3825 = vmatpush.msra.mxu0 0.0
  %3826 = vmatpush.msra.mxu0 0.0
  %3827 = vmatpush.msra.mxu0 0.0
  %3828 = vmatpush.msra.mxu0 0.0
  %3829 = vmatpush.msra.mxu0 0.0
  %3830 = vmatpush.msra.mxu0 0.0
  %3831 = vmatpush.msra.mxu0 0.0
  %3832 = vmatpush.msra.mxu0 0.0
  %3833 = vmatpush.msra.mxu0 0.0
  %v3834 = vand.u32 %v3407, 4294901760
  %v3835 = vsub.f32 %v3407, %v3834
  %v3836 = vand.u32 %v3835, 4294901760
  %v3837 = vsub.f32 %v3835, %v3836
  %v3838 = vand.u32 %v3837, 4294901760
  %3839 = vmatpush.msra.mxu0 %v3838
  %v3840 = vand.u32 %v3406, 4294901760
  %v3841 = vsub.f32 %v3406, %v3840
  %v3842 = vand.u32 %v3841, 4294901760
  %v3843 = vsub.f32 %v3841, %v3842
  %v3844 = vand.u32 %v3843, 4294901760
  %3845 = vmatpush.msra.mxu0 %v3844
  %v3846 = vand.u32 %v3405, 4294901760
  %v3847 = vsub.f32 %v3405, %v3846
  %v3848 = vand.u32 %v3847, 4294901760
  %v3849 = vsub.f32 %v3847, %v3848
  %v3850 = vand.u32 %v3849, 4294901760
  %3851 = vmatpush.msra.mxu0 %v3850
  %v3852 = vand.u32 %v3404, 4294901760
  %v3853 = vsub.f32 %v3404, %v3852
  %v3854 = vand.u32 %v3853, 4294901760
  %v3855 = vsub.f32 %v3853, %v3854
  %v3856 = vand.u32 %v3855, 4294901760
  %3857 = vmatpush.msra.mxu0 %v3856
  %v3858 = vand.u32 %v3791, 4294901760
  %3859 = vmatmul.f32.gmra.mxu0 %v3858
  %v3860 = vpop.f32.mrf.mxu0
  %v3861 = vadd.f32 %v3820, %v3860
  %3862 = vdwg.mxu0
  %3863 = vmatpush.msra.mxu0 0.0
  %3864 = vmatpush.msra.mxu0 0.0
  %3865 = vmatpush.msra.mxu0 0.0
  %3866 = vmatpush.msra.mxu0 0.0
  %3867 = vmatpush.msra.mxu0 0.0
  %3868 = vmatpush.msra.mxu0 0.0
  %3869 = vmatpush.msra.mxu0 0.0
  %3870 = vmatpush.msra.mxu0 0.0
  %3871 = vmatpush.msra.mxu0 0.0
  %3872 = vmatpush.msra.mxu0 0.0
  %3873 = vmatpush.msra.mxu0 0.0
  %3874 = vmatpush.msra.mxu0 0.0
  %v3875 = vand.u32 %v3407, 4294901760
  %v3876 = vsub.f32 %v3407, %v3875
  %3877 = vmatpush.msra.mxu0 %v3876
  %v3878 = vand.u32 %v3406, 4294901760
  %v3879 = vsub.f32 %v3406, %v3878
  %3880 = vmatpush.msra.mxu0 %v3879
  %v3881 = vand.u32 %v3405, 4294901760
  %v3882 = vsub.f32 %v3405, %v3881
  %3883 = vmatpush.msra.mxu0 %v3882
  %v3884 = vand.u32 %v3404, 4294901760
  %v3885 = vsub.f32 %v3404, %v3884
  %3886 = vmatpush.msra.mxu0 %v3885
  %v3887 = vand.u32 %v3791, 4294901760
  %v3888 = vsub.f32 %v3791, %v3887
  %3889 = vmatmul.f32.gmra.mxu0 %v3888
  %v3890 = vpop.f32.mrf.mxu0
  %v3891 = vadd.f32 %v3861, %v3890
  %3892 = vdwg.mxu0
  %3893 = vmatpush.msra.mxu0 0.0
  %3894 = vmatpush.msra.mxu0 0.0
  %3895 = vmatpush.msra.mxu0 0.0
  %3896 = vmatpush.msra.mxu0 0.0
  %3897 = vmatpush.msra.mxu0 0.0
  %3898 = vmatpush.msra.mxu0 0.0
  %3899 = vmatpush.msra.mxu0 0.0
  %3900 = vmatpush.msra.mxu0 0.0
  %3901 = vmatpush.msra.mxu0 0.0
  %3902 = vmatpush.msra.mxu0 0.0
  %3903 = vmatpush.msra.mxu0 0.0
  %3904 = vmatpush.msra.mxu0 0.0
  %v3905 = vand.u32 %v3407, 4294901760
  %3906 = vmatpush.msra.mxu0 %v3905
  %v3907 = vand.u32 %v3406, 4294901760
  %3908 = vmatpush.msra.mxu0 %v3907
  %v3909 = vand.u32 %v3405, 4294901760
  %3910 = vmatpush.msra.mxu0 %v3909
  %v3911 = vand.u32 %v3404, 4294901760
  %3912 = vmatpush.msra.mxu0 %v3911
  %v3913 = vand.u32 %v3791, 4294901760
  %v3914 = vsub.f32 %v3791, %v3913
  %v3915 = vand.u32 %v3914, 4294901760
  %3916 = vmatmul.f32.gmra.mxu0 %v3915
  %v3917 = vpop.f32.mrf.mxu0
  %v3918 = vadd.f32 %v3891, %v3917
  %3919 = vdwg.mxu0
  %3920 = vmatpush.msra.mxu0 0.0
  %3921 = vmatpush.msra.mxu0 0.0
  %3922 = vmatpush.msra.mxu0 0.0
  %3923 = vmatpush.msra.mxu0 0.0
  %3924 = vmatpush.msra.mxu0 0.0
  %3925 = vmatpush.msra.mxu0 0.0
  %3926 = vmatpush.msra.mxu0 0.0
  %3927 = vmatpush.msra.mxu0 0.0
  %3928 = vmatpush.msra.mxu0 0.0
  %3929 = vmatpush.msra.mxu0 0.0
  %3930 = vmatpush.msra.mxu0 0.0
  %3931 = vmatpush.msra.mxu0 0.0
  %v3932 = vand.u32 %v3407, 4294901760
  %v3933 = vsub.f32 %v3407, %v3932
  %v3934 = vand.u32 %v3933, 4294901760
  %3935 = vmatpush.msra.mxu0 %v3934
  %v3936 = vand.u32 %v3406, 4294901760
  %v3937 = vsub.f32 %v3406, %v3936
  %v3938 = vand.u32 %v3937, 4294901760
  %3939 = vmatpush.msra.mxu0 %v3938
  %v3940 = vand.u32 %v3405, 4294901760
  %v3941 = vsub.f32 %v3405, %v3940
  %v3942 = vand.u32 %v3941, 4294901760
  %3943 = vmatpush.msra.mxu0 %v3942
  %v3944 = vand.u32 %v3404, 4294901760
  %v3945 = vsub.f32 %v3404, %v3944
  %v3946 = vand.u32 %v3945, 4294901760
  %3947 = vmatpush.msra.mxu0 %v3946
  %v3948 = vand.u32 %v3791, 4294901760
  %3949 = vmatmul.f32.gmra.mxu0 %v3948
  %v3950 = vpop.f32.mrf.mxu0
  %v3951 = vadd.f32 %v3918, %v3950
  %3952 = vdwg.mxu0
  %3953 = vmatpush.msra.mxu0 0.0
  %3954 = vmatpush.msra.mxu0 0.0
  %3955 = vmatpush.msra.mxu0 0.0
  %3956 = vmatpush.msra.mxu0 0.0
  %3957 = vmatpush.msra.mxu0 0.0
  %3958 = vmatpush.msra.mxu0 0.0
  %3959 = vmatpush.msra.mxu0 0.0
  %3960 = vmatpush.msra.mxu0 0.0
  %3961 = vmatpush.msra.mxu0 0.0
  %3962 = vmatpush.msra.mxu0 0.0
  %3963 = vmatpush.msra.mxu0 0.0
  %3964 = vmatpush.msra.mxu0 0.0
  %v3965 = vand.u32 %v3407, 4294901760
  %3966 = vmatpush.msra.mxu0 %v3965
  %v3967 = vand.u32 %v3406, 4294901760
  %3968 = vmatpush.msra.mxu0 %v3967
  %v3969 = vand.u32 %v3405, 4294901760
  %3970 = vmatpush.msra.mxu0 %v3969
  %v3971 = vand.u32 %v3404, 4294901760
  %3972 = vmatpush.msra.mxu0 %v3971
  %v3973 = vand.u32 %v3791, 4294901760
  %3974 = vmatmul.f32.gmra.mxu0 %v3973
  %v3975 = vpop.f32.mrf.mxu0
  %v3976 = vadd.f32 %v3951, %v3975
  %3977 = vdwg.mxu0
  %v3978 = vadd.f32 %v3398, %v3976
  %v3979 = vtanh.pop %v3978
  %3980 = vst.msk [vmem:[#allocation2 + $0x10] sm:$0xff] %vm1175, %v3979
  %v3982 = vsel %vm1175, %v3979, 0
  %3984 = vmatpush.msra.mxu0 0.0
  %3985 = vmatpush.msra.mxu0 0.0
  %3986 = vmatpush.msra.mxu0 0.0
  %3987 = vmatpush.msra.mxu0 0.0
  %3988 = vmatpush.msra.mxu0 0.0
  %3989 = vmatpush.msra.mxu0 0.0
  %3990 = vmatpush.msra.mxu0 0.0
  %3991 = vmatpush.msra.mxu0 0.0
  %3992 = vmatpush.msra.mxu0 0.0
  %3993 = vmatpush.msra.mxu0 0.0
  %3994 = vmatpush.msra.mxu0 0.0
  %3995 = vmatpush.msra.mxu0 0.0
  %v3996 = vand.u32 %v3407, 4294901760
  %3997 = vmatpush.msra.mxu0 %v3996
  %v3998 = vand.u32 %v3406, 4294901760
  %3999 = vmatpush.msra.mxu0 %v3998
  %v4000 = vand.u32 %v3405, 4294901760
  %4001 = vmatpush.msra.mxu0 %v4000
  %v4002 = vand.u32 %v3404, 4294901760
  %4003 = vmatpush.msra.mxu0 %v4002
  %v4004 = vand.u32 %v3982, 4294901760
  %v4005 = vsub.f32 %v3982, %v4004
  %v4006 = vand.u32 %v4005, 4294901760
  %v4007 = vsub.f32 %v4005, %v4006
  %v4008 = vand.u32 %v4007, 4294901760
  %4009 = vmatmul.f32.gmra.mxu0 %v4008
  %v4010 = vpop.f32.mrf.mxu0
  %v4011 = vadd.f32 0.0, %v4010
  %4012 = vdwg.mxu0
  %4013 = vmatpush.msra.mxu0 0.0
  %4014 = vmatpush.msra.mxu0 0.0
  %4015 = vmatpush.msra.mxu0 0.0
  %4016 = vmatpush.msra.mxu0 0.0
  %4017 = vmatpush.msra.mxu0 0.0
  %4018 = vmatpush.msra.mxu0 0.0
  %4019 = vmatpush.msra.mxu0 0.0
  %4020 = vmatpush.msra.mxu0 0.0
  %4021 = vmatpush.msra.mxu0 0.0
  %4022 = vmatpush.msra.mxu0 0.0
  %4023 = vmatpush.msra.mxu0 0.0
  %4024 = vmatpush.msra.mxu0 0.0
  %v4025 = vand.u32 %v3407, 4294901760
  %v4026 = vsub.f32 %v3407, %v4025
  %v4027 = vand.u32 %v4026, 4294901760
  %v4028 = vsub.f32 %v4026, %v4027
  %v4029 = vand.u32 %v4028, 4294901760
  %4030 = vmatpush.msra.mxu0 %v4029
  %v4031 = vand.u32 %v3406, 4294901760
  %v4032 = vsub.f32 %v3406, %v4031
  %v4033 = vand.u32 %v4032, 4294901760
  %v4034 = vsub.f32 %v4032, %v4033
  %v4035 = vand.u32 %v4034, 4294901760
  %4036 = vmatpush.msra.mxu0 %v4035
  %v4037 = vand.u32 %v3405, 4294901760
  %v4038 = vsub.f32 %v3405, %v4037
  %v4039 = vand.u32 %v4038, 4294901760
  %v4040 = vsub.f32 %v4038, %v4039
  %v4041 = vand.u32 %v4040, 4294901760
  %4042 = vmatpush.msra.mxu0 %v4041
  %v4043 = vand.u32 %v3404, 4294901760
  %v4044 = vsub.f32 %v3404, %v4043
  %v4045 = vand.u32 %v4044, 4294901760
  %v4046 = vsub.f32 %v4044, %v4045
  %v4047 = vand.u32 %v4046, 4294901760
  %4048 = vmatpush.msra.mxu0 %v4047
  %v4049 = vand.u32 %v3982, 4294901760
  %4050 = vmatmul.f32.gmra.mxu0 %v4049
  %v4051 = vpop.f32.mrf.mxu0
  %v4052 = vadd.f32 %v4011, %v4051
  %4053 = vdwg.mxu0
  %4054 = vmatpush.msra.mxu0 0.0
  %4055 = vmatpush.msra.mxu0 0.0
  %4056 = vmatpush.msra.mxu0 0.0
  %4057 = vmatpush.msra.mxu0 0.0
  %4058 = vmatpush.msra.mxu0 0.0
  %4059 = vmatpush.msra.mxu0 0.0
  %4060 = vmatpush.msra.mxu0 0.0
  %4061 = vmatpush.msra.mxu0 0.0
  %4062 = vmatpush.msra.mxu0 0.0
  %4063 = vmatpush.msra.mxu0 0.0
  %4064 = vmatpush.msra.mxu0 0.0
  %4065 = vmatpush.msra.mxu0 0.0
  %v4066 = vand.u32 %v3407, 4294901760
  %v4067 = vsub.f32 %v3407, %v4066
  %4068 = vmatpush.msra.mxu0 %v4067
  %v4069 = vand.u32 %v3406, 4294901760
  %v4070 = vsub.f32 %v3406, %v4069
  %4071 = vmatpush.msra.mxu0 %v4070
  %v4072 = vand.u32 %v3405, 4294901760
  %v4073 = vsub.f32 %v3405, %v4072
  %4074 = vmatpush.msra.mxu0 %v4073
  %v4075 = vand.u32 %v3404, 4294901760
  %v4076 = vsub.f32 %v3404, %v4075
  %4077 = vmatpush.msra.mxu0 %v4076
  %v4078 = vand.u32 %v3982, 4294901760
  %v4079 = vsub.f32 %v3982, %v4078
  %4080 = vmatmul.f32.gmra.mxu0 %v4079
  %v4081 = vpop.f32.mrf.mxu0
  %v4082 = vadd.f32 %v4052, %v4081
  %4083 = vdwg.mxu0
  %4084 = vmatpush.msra.mxu0 0.0
  %4085 = vmatpush.msra.mxu0 0.0
  %4086 = vmatpush.msra.mxu0 0.0
  %4087 = vmatpush.msra.mxu0 0.0
  %4088 = vmatpush.msra.mxu0 0.0
  %4089 = vmatpush.msra.mxu0 0.0
  %4090 = vmatpush.msra.mxu0 0.0
  %4091 = vmatpush.msra.mxu0 0.0
  %4092 = vmatpush.msra.mxu0 0.0
  %4093 = vmatpush.msra.mxu0 0.0
  %4094 = vmatpush.msra.mxu0 0.0
  %4095 = vmatpush.msra.mxu0 0.0
  %v4096 = vand.u32 %v3407, 4294901760
  %4097 = vmatpush.msra.mxu0 %v4096
  %v4098 = vand.u32 %v3406, 4294901760
  %4099 = vmatpush.msra.mxu0 %v4098
  %v4100 = vand.u32 %v3405, 4294901760
  %4101 = vmatpush.msra.mxu0 %v4100
  %v4102 = vand.u32 %v3404, 4294901760
  %4103 = vmatpush.msra.mxu0 %v4102
  %v4104 = vand.u32 %v3982, 4294901760
  %v4105 = vsub.f32 %v3982, %v4104
  %v4106 = vand.u32 %v4105, 4294901760
  %4107 = vmatmul.f32.gmra.mxu0 %v4106
  %v4108 = vpop.f32.mrf.mxu0
  %v4109 = vadd.f32 %v4082, %v4108
  %4110 = vdwg.mxu0
  %4111 = vmatpush.msra.mxu0 0.0
  %4112 = vmatpush.msra.mxu0 0.0
  %4113 = vmatpush.msra.mxu0 0.0
  %4114 = vmatpush.msra.mxu0 0.0
  %4115 = vmatpush.msra.mxu0 0.0
  %4116 = vmatpush.msra.mxu0 0.0
  %4117 = vmatpush.msra.mxu0 0.0
  %4118 = vmatpush.msra.mxu0 0.0
  %4119 = vmatpush.msra.mxu0 0.0
  %4120 = vmatpush.msra.mxu0 0.0
  %4121 = vmatpush.msra.mxu0 0.0
  %4122 = vmatpush.msra.mxu0 0.0
  %v4123 = vand.u32 %v3407, 4294901760
  %v4124 = vsub.f32 %v3407, %v4123
  %v4125 = vand.u32 %v4124, 4294901760
  %4126 = vmatpush.msra.mxu0 %v4125
  %v4127 = vand.u32 %v3406, 4294901760
  %v4128 = vsub.f32 %v3406, %v4127
  %v4129 = vand.u32 %v4128, 4294901760
  %4130 = vmatpush.msra.mxu0 %v4129
  %v4131 = vand.u32 %v3405, 4294901760
  %v4132 = vsub.f32 %v3405, %v4131
  %v4133 = vand.u32 %v4132, 4294901760
  %4134 = vmatpush.msra.mxu0 %v4133
  %v4135 = vand.u32 %v3404, 4294901760
  %v4136 = vsub.f32 %v3404, %v4135
  %v4137 = vand.u32 %v4136, 4294901760
  %4138 = vmatpush.msra.mxu0 %v4137
  %v4139 = vand.u32 %v3982, 4294901760
  %4140 = vmatmul.f32.gmra.mxu0 %v4139
  %v4141 = vpop.f32.mrf.mxu0
  %v4142 = vadd.f32 %v4109, %v4141
  %4143 = vdwg.mxu0
  %4144 = vmatpush.msra.mxu0 0.0
  %4145 = vmatpush.msra.mxu0 0.0
  %4146 = vmatpush.msra.mxu0 0.0
  %4147 = vmatpush.msra.mxu0 0.0
  %4148 = vmatpush.msra.mxu0 0.0
  %4149 = vmatpush.msra.mxu0 0.0
  %4150 = vmatpush.msra.mxu0 0.0
  %4151 = vmatpush.msra.mxu0 0.0
  %4152 = vmatpush.msra.mxu0 0.0
  %4153 = vmatpush.msra.mxu0 0.0
  %4154 = vmatpush.msra.mxu0 0.0
  %4155 = vmatpush.msra.mxu0 0.0
  %v4156 = vand.u32 %v3407, 4294901760
  %4157 = vmatpush.msra.mxu0 %v4156
  %v4158 = vand.u32 %v3406, 4294901760
  %4159 = vmatpush.msra.mxu0 %v4158
  %v4160 = vand.u32 %v3405, 4294901760
  %4161 = vmatpush.msra.mxu0 %v4160
  %v4162 = vand.u32 %v3404, 4294901760
  %4163 = vmatpush.msra.mxu0 %v4162
  %v4164 = vand.u32 %v3982, 4294901760
  %4165 = vmatmul.f32.gmra.mxu0 %v4164
  %v4166 = vpop.f32.mrf.mxu0
  %v4167 = vadd.f32 %v4142, %v4166
  %4168 = vdwg.mxu0
  %v4169 = vadd.f32 %v3399, %v4167
  %v4170 = vtanh.pop %v4169
  %4171 = vst.msk [vmem:[#allocation2 + $0x18] sm:$0xff] %vm1175, %v4170
  %v4173 = vsel %vm1175, %v4170, 0
  %4175 = vmatpush.msra.mxu0 0.0
  %4176 = vmatpush.msra.mxu0 0.0
  %4177 = vmatpush.msra.mxu0 0.0
  %4178 = vmatpush.msra.mxu0 0.0
  %4179 = vmatpush.msra.mxu0 0.0
  %4180 = vmatpush.msra.mxu0 0.0
  %4181 = vmatpush.msra.mxu0 0.0
  %4182 = vmatpush.msra.mxu0 0.0
  %4183 = vmatpush.msra.mxu0 0.0
  %4184 = vmatpush.msra.mxu0 0.0
  %4185 = vmatpush.msra.mxu0 0.0
  %4186 = vmatpush.msra.mxu0 0.0
  %v4187 = vand.u32 %v3407, 4294901760
  %4188 = vmatpush.msra.mxu0 %v4187
  %v4189 = vand.u32 %v3406, 4294901760
  %4190 = vmatpush.msra.mxu0 %v4189
  %v4191 = vand.u32 %v3405, 4294901760
  %4192 = vmatpush.msra.mxu0 %v4191
  %v4193 = vand.u32 %v3404, 4294901760
  %4194 = vmatpush.msra.mxu0 %v4193
  %v4195 = vand.u32 %v4173, 4294901760
  %v4196 = vsub.f32 %v4173, %v4195
  %v4197 = vand.u32 %v4196, 4294901760
  %v4198 = vsub.f32 %v4196, %v4197
  %v4199 = vand.u32 %v4198, 4294901760
  %4200 = vmatmul.f32.gmra.mxu0 %v4199
  %v4201 = vpop.f32.mrf.mxu0
  %v4202 = vadd.f32 0.0, %v4201
  %4203 = vdwg.mxu0
  %4204 = vmatpush.msra.mxu0 0.0
  %4205 = vmatpush.msra.mxu0 0.0
  %4206 = vmatpush.msra.mxu0 0.0
  %4207 = vmatpush.msra.mxu0 0.0
  %4208 = vmatpush.msra.mxu0 0.0
  %4209 = vmatpush.msra.mxu0 0.0
  %4210 = vmatpush.msra.mxu0 0.0
  %4211 = vmatpush.msra.mxu0 0.0
  %4212 = vmatpush.msra.mxu0 0.0
  %4213 = vmatpush.msra.mxu0 0.0
  %4214 = vmatpush.msra.mxu0 0.0
  %4215 = vmatpush.msra.mxu0 0.0
  %v4216 = vand.u32 %v3407, 4294901760
  %v4217 = vsub.f32 %v3407, %v4216
  %v4218 = vand.u32 %v4217, 4294901760
  %v4219 = vsub.f32 %v4217, %v4218
  %v4220 = vand.u32 %v4219, 4294901760
  %4221 = vmatpush.msra.mxu0 %v4220
  %v4222 = vand.u32 %v3406, 4294901760
  %v4223 = vsub.f32 %v3406, %v4222
  %v4224 = vand.u32 %v4223, 4294901760
  %v4225 = vsub.f32 %v4223, %v4224
  %v4226 = vand.u32 %v4225, 4294901760
  %4227 = vmatpush.msra.mxu0 %v4226
  %v4228 = vand.u32 %v3405, 4294901760
  %v4229 = vsub.f32 %v3405, %v4228
  %v4230 = vand.u32 %v4229, 4294901760
  %v4231 = vsub.f32 %v4229, %v4230
  %v4232 = vand.u32 %v4231, 4294901760
  %4233 = vmatpush.msra.mxu0 %v4232
  %v4234 = vand.u32 %v3404, 4294901760
  %v4235 = vsub.f32 %v3404, %v4234
  %v4236 = vand.u32 %v4235, 4294901760
  %v4237 = vsub.f32 %v4235, %v4236
  %v4238 = vand.u32 %v4237, 4294901760
  %4239 = vmatpush.msra.mxu0 %v4238
  %v4240 = vand.u32 %v4173, 4294901760
  %4241 = vmatmul.f32.gmra.mxu0 %v4240
  %v4242 = vpop.f32.mrf.mxu0
  %v4243 = vadd.f32 %v4202, %v4242
  %4244 = vdwg.mxu0
  %4245 = vmatpush.msra.mxu0 0.0
  %4246 = vmatpush.msra.mxu0 0.0
  %4247 = vmatpush.msra.mxu0 0.0
  %4248 = vmatpush.msra.mxu0 0.0
  %4249 = vmatpush.msra.mxu0 0.0
  %4250 = vmatpush.msra.mxu0 0.0
  %4251 = vmatpush.msra.mxu0 0.0
  %4252 = vmatpush.msra.mxu0 0.0
  %4253 = vmatpush.msra.mxu0 0.0
  %4254 = vmatpush.msra.mxu0 0.0
  %4255 = vmatpush.msra.mxu0 0.0
  %4256 = vmatpush.msra.mxu0 0.0
  %v4257 = vand.u32 %v3407, 4294901760
  %v4258 = vsub.f32 %v3407, %v4257
  %4259 = vmatpush.msra.mxu0 %v4258
  %v4260 = vand.u32 %v3406, 4294901760
  %v4261 = vsub.f32 %v3406, %v4260
  %4262 = vmatpush.msra.mxu0 %v4261
  %v4263 = vand.u32 %v3405, 4294901760
  %v4264 = vsub.f32 %v3405, %v4263
  %4265 = vmatpush.msra.mxu0 %v4264
  %v4266 = vand.u32 %v3404, 4294901760
  %v4267 = vsub.f32 %v3404, %v4266
  %4268 = vmatpush.msra.mxu0 %v4267
  %v4269 = vand.u32 %v4173, 4294901760
  %v4270 = vsub.f32 %v4173, %v4269
  %4271 = vmatmul.f32.gmra.mxu0 %v4270
  %v4272 = vpop.f32.mrf.mxu0
  %v4273 = vadd.f32 %v4243, %v4272
  %4274 = vdwg.mxu0
  %4275 = vmatpush.msra.mxu0 0.0
  %4276 = vmatpush.msra.mxu0 0.0
  %4277 = vmatpush.msra.mxu0 0.0
  %4278 = vmatpush.msra.mxu0 0.0
  %4279 = vmatpush.msra.mxu0 0.0
  %4280 = vmatpush.msra.mxu0 0.0
  %4281 = vmatpush.msra.mxu0 0.0
  %4282 = vmatpush.msra.mxu0 0.0
  %4283 = vmatpush.msra.mxu0 0.0
  %4284 = vmatpush.msra.mxu0 0.0
  %4285 = vmatpush.msra.mxu0 0.0
  %4286 = vmatpush.msra.mxu0 0.0
  %v4287 = vand.u32 %v3407, 4294901760
  %4288 = vmatpush.msra.mxu0 %v4287
  %v4289 = vand.u32 %v3406, 4294901760
  %4290 = vmatpush.msra.mxu0 %v4289
  %v4291 = vand.u32 %v3405, 4294901760
  %4292 = vmatpush.msra.mxu0 %v4291
  %v4293 = vand.u32 %v3404, 4294901760
  %4294 = vmatpush.msra.mxu0 %v4293
  %v4295 = vand.u32 %v4173, 4294901760
  %v4296 = vsub.f32 %v4173, %v4295
  %v4297 = vand.u32 %v4296, 4294901760
  %4298 = vmatmul.f32.gmra.mxu0 %v4297
  %v4299 = vpop.f32.mrf.mxu0
  %v4300 = vadd.f32 %v4273, %v4299
  %4301 = vdwg.mxu0
  %4302 = vmatpush.msra.mxu0 0.0
  %4303 = vmatpush.msra.mxu0 0.0
  %4304 = vmatpush.msra.mxu0 0.0
  %4305 = vmatpush.msra.mxu0 0.0
  %4306 = vmatpush.msra.mxu0 0.0
  %4307 = vmatpush.msra.mxu0 0.0
  %4308 = vmatpush.msra.mxu0 0.0
  %4309 = vmatpush.msra.mxu0 0.0
  %4310 = vmatpush.msra.mxu0 0.0
  %4311 = vmatpush.msra.mxu0 0.0
  %4312 = vmatpush.msra.mxu0 0.0
  %4313 = vmatpush.msra.mxu0 0.0
  %v4314 = vand.u32 %v3407, 4294901760
  %v4315 = vsub.f32 %v3407, %v4314
  %v4316 = vand.u32 %v4315, 4294901760
  %4317 = vmatpush.msra.mxu0 %v4316
  %v4318 = vand.u32 %v3406, 4294901760
  %v4319 = vsub.f32 %v3406, %v4318
  %v4320 = vand.u32 %v4319, 4294901760
  %4321 = vmatpush.msra.mxu0 %v4320
  %v4322 = vand.u32 %v3405, 4294901760
  %v4323 = vsub.f32 %v3405, %v4322
  %v4324 = vand.u32 %v4323, 4294901760
  %4325 = vmatpush.msra.mxu0 %v4324
  %v4326 = vand.u32 %v3404, 4294901760
  %v4327 = vsub.f32 %v3404, %v4326
  %v4328 = vand.u32 %v4327, 4294901760
  %4329 = vmatpush.msra.mxu0 %v4328
  %v4330 = vand.u32 %v4173, 4294901760
  %4331 = vmatmul.f32.gmra.mxu0 %v4330
  %v4332 = vpop.f32.mrf.mxu0
  %v4333 = vadd.f32 %v4300, %v4332
  %4334 = vdwg.mxu0
  %4335 = vmatpush.msra.mxu0 0.0
  %4336 = vmatpush.msra.mxu0 0.0
  %4337 = vmatpush.msra.mxu0 0.0
  %4338 = vmatpush.msra.mxu0 0.0
  %4339 = vmatpush.msra.mxu0 0.0
  %4340 = vmatpush.msra.mxu0 0.0
  %4341 = vmatpush.msra.mxu0 0.0
  %4342 = vmatpush.msra.mxu0 0.0
  %4343 = vmatpush.msra.mxu0 0.0
  %4344 = vmatpush.msra.mxu0 0.0
  %4345 = vmatpush.msra.mxu0 0.0
  %4346 = vmatpush.msra.mxu0 0.0
  %v4347 = vand.u32 %v3407, 4294901760
  %4348 = vmatpush.msra.mxu0 %v4347
  %v4349 = vand.u32 %v3406, 4294901760
  %4350 = vmatpush.msra.mxu0 %v4349
  %v4351 = vand.u32 %v3405, 4294901760
  %4352 = vmatpush.msra.mxu0 %v4351
  %v4353 = vand.u32 %v3404, 4294901760
  %4354 = vmatpush.msra.mxu0 %v4353
  %v4355 = vand.u32 %v4173, 4294901760
  %4356 = vmatmul.f32.gmra.mxu0 %v4355
  %v4357 = vpop.f32.mrf.mxu0
  %v4358 = vadd.f32 %v4333, %v4357
  %4359 = vdwg.mxu0
  %v4360 = vadd.f32 %v3400, %v4358
  %v4361 = vtanh.pop %v4360
  %4362 = vst.msk [vmem:[#allocation2 + $0x20] sm:$0xff] %vm1175, %v4361
  %v4364 = vsel %vm1175, %v4361, 0
  %4366 = vmatpush.msra.mxu0 0.0
  %4367 = vmatpush.msra.mxu0 0.0
  %4368 = vmatpush.msra.mxu0 0.0
  %4369 = vmatpush.msra.mxu0 0.0
  %4370 = vmatpush.msra.mxu0 0.0
  %4371 = vmatpush.msra.mxu0 0.0
  %4372 = vmatpush.msra.mxu0 0.0
  %4373 = vmatpush.msra.mxu0 0.0
  %4374 = vmatpush.msra.mxu0 0.0
  %4375 = vmatpush.msra.mxu0 0.0
  %4376 = vmatpush.msra.mxu0 0.0
  %4377 = vmatpush.msra.mxu0 0.0
  %v4378 = vand.u32 %v3407, 4294901760
  %4379 = vmatpush.msra.mxu0 %v4378
  %v4380 = vand.u32 %v3406, 4294901760
  %4381 = vmatpush.msra.mxu0 %v4380
  %v4382 = vand.u32 %v3405, 4294901760
  %4383 = vmatpush.msra.mxu0 %v4382
  %v4384 = vand.u32 %v3404, 4294901760
  %4385 = vmatpush.msra.mxu0 %v4384
  %v4386 = vand.u32 %v4364, 4294901760
  %v4387 = vsub.f32 %v4364, %v4386
  %v4388 = vand.u32 %v4387, 4294901760
  %v4389 = vsub.f32 %v4387, %v4388
  %v4390 = vand.u32 %v4389, 4294901760
  %4391 = vmatmul.f32.gmra.mxu0 %v4390
  %v4392 = vpop.f32.mrf.mxu0
  %v4393 = vadd.f32 0.0, %v4392
  %4394 = vdwg.mxu0
  %4395 = vmatpush.msra.mxu0 0.0
  %4396 = vmatpush.msra.mxu0 0.0
  %4397 = vmatpush.msra.mxu0 0.0
  %4398 = vmatpush.msra.mxu0 0.0
  %4399 = vmatpush.msra.mxu0 0.0
  %4400 = vmatpush.msra.mxu0 0.0
  %4401 = vmatpush.msra.mxu0 0.0
  %4402 = vmatpush.msra.mxu0 0.0
  %4403 = vmatpush.msra.mxu0 0.0
  %4404 = vmatpush.msra.mxu0 0.0
  %4405 = vmatpush.msra.mxu0 0.0
  %4406 = vmatpush.msra.mxu0 0.0
  %v4407 = vand.u32 %v3407, 4294901760
  %v4408 = vsub.f32 %v3407, %v4407
  %v4409 = vand.u32 %v4408, 4294901760
  %v4410 = vsub.f32 %v4408, %v4409
  %v4411 = vand.u32 %v4410, 4294901760
  %4412 = vmatpush.msra.mxu0 %v4411
  %v4413 = vand.u32 %v3406, 4294901760
  %v4414 = vsub.f32 %v3406, %v4413
  %v4415 = vand.u32 %v4414, 4294901760
  %v4416 = vsub.f32 %v4414, %v4415
  %v4417 = vand.u32 %v4416, 4294901760
  %4418 = vmatpush.msra.mxu0 %v4417
  %v4419 = vand.u32 %v3405, 4294901760
  %v4420 = vsub.f32 %v3405, %v4419
  %v4421 = vand.u32 %v4420, 4294901760
  %v4422 = vsub.f32 %v4420, %v4421
  %v4423 = vand.u32 %v4422, 4294901760
  %4424 = vmatpush.msra.mxu0 %v4423
  %v4425 = vand.u32 %v3404, 4294901760
  %v4426 = vsub.f32 %v3404, %v4425
  %v4427 = vand.u32 %v4426, 4294901760
  %v4428 = vsub.f32 %v4426, %v4427
  %v4429 = vand.u32 %v4428, 4294901760
  %4430 = vmatpush.msra.mxu0 %v4429
  %v4431 = vand.u32 %v4364, 4294901760
  %4432 = vmatmul.f32.gmra.mxu0 %v4431
  %v4433 = vpop.f32.mrf.mxu0
  %v4434 = vadd.f32 %v4393, %v4433
  %4435 = vdwg.mxu0
  %4436 = vmatpush.msra.mxu0 0.0
  %4437 = vmatpush.msra.mxu0 0.0
  %4438 = vmatpush.msra.mxu0 0.0
  %4439 = vmatpush.msra.mxu0 0.0
  %4440 = vmatpush.msra.mxu0 0.0
  %4441 = vmatpush.msra.mxu0 0.0
  %4442 = vmatpush.msra.mxu0 0.0
  %4443 = vmatpush.msra.mxu0 0.0
  %4444 = vmatpush.msra.mxu0 0.0
  %4445 = vmatpush.msra.mxu0 0.0
  %4446 = vmatpush.msra.mxu0 0.0
  %4447 = vmatpush.msra.mxu0 0.0
  %v4448 = vand.u32 %v3407, 4294901760
  %v4449 = vsub.f32 %v3407, %v4448
  %4450 = vmatpush.msra.mxu0 %v4449
  %v4451 = vand.u32 %v3406, 4294901760
  %v4452 = vsub.f32 %v3406, %v4451
  %4453 = vmatpush.msra.mxu0 %v4452
  %v4454 = vand.u32 %v3405, 4294901760
  %v4455 = vsub.f32 %v3405, %v4454
  %4456 = vmatpush.msra.mxu0 %v4455
  %v4457 = vand.u32 %v3404, 4294901760
  %v4458 = vsub.f32 %v3404, %v4457
  %4459 = vmatpush.msra.mxu0 %v4458
  %v4460 = vand.u32 %v4364, 4294901760
  %v4461 = vsub.f32 %v4364, %v4460
  %4462 = vmatmul.f32.gmra.mxu0 %v4461
  %v4463 = vpop.f32.mrf.mxu0
  %v4464 = vadd.f32 %v4434, %v4463
  %4465 = vdwg.mxu0
  %4466 = vmatpush.msra.mxu0 0.0
  %4467 = vmatpush.msra.mxu0 0.0
  %4468 = vmatpush.msra.mxu0 0.0
  %4469 = vmatpush.msra.mxu0 0.0
  %4470 = vmatpush.msra.mxu0 0.0
  %4471 = vmatpush.msra.mxu0 0.0
  %4472 = vmatpush.msra.mxu0 0.0
  %4473 = vmatpush.msra.mxu0 0.0
  %4474 = vmatpush.msra.mxu0 0.0
  %4475 = vmatpush.msra.mxu0 0.0
  %4476 = vmatpush.msra.mxu0 0.0
  %4477 = vmatpush.msra.mxu0 0.0
  %v4478 = vand.u32 %v3407, 4294901760
  %4479 = vmatpush.msra.mxu0 %v4478
  %v4480 = vand.u32 %v3406, 4294901760
  %4481 = vmatpush.msra.mxu0 %v4480
  %v4482 = vand.u32 %v3405, 4294901760
  %4483 = vmatpush.msra.mxu0 %v4482
  %v4484 = vand.u32 %v3404, 4294901760
  %4485 = vmatpush.msra.mxu0 %v4484
  %v4486 = vand.u32 %v4364, 4294901760
  %v4487 = vsub.f32 %v4364, %v4486
  %v4488 = vand.u32 %v4487, 4294901760
  %4489 = vmatmul.f32.gmra.mxu0 %v4488
  %v4490 = vpop.f32.mrf.mxu0
  %v4491 = vadd.f32 %v4464, %v4490
  %4492 = vdwg.mxu0
  %4493 = vmatpush.msra.mxu0 0.0
  %4494 = vmatpush.msra.mxu0 0.0
  %4495 = vmatpush.msra.mxu0 0.0
  %4496 = vmatpush.msra.mxu0 0.0
  %4497 = vmatpush.msra.mxu0 0.0
  %4498 = vmatpush.msra.mxu0 0.0
  %4499 = vmatpush.msra.mxu0 0.0
  %4500 = vmatpush.msra.mxu0 0.0
  %4501 = vmatpush.msra.mxu0 0.0
  %4502 = vmatpush.msra.mxu0 0.0
  %4503 = vmatpush.msra.mxu0 0.0
  %4504 = vmatpush.msra.mxu0 0.0
  %v4505 = vand.u32 %v3407, 4294901760
  %v4506 = vsub.f32 %v3407, %v4505
  %v4507 = vand.u32 %v4506, 4294901760
  %4508 = vmatpush.msra.mxu0 %v4507
  %v4509 = vand.u32 %v3406, 4294901760
  %v4510 = vsub.f32 %v3406, %v4509
  %v4511 = vand.u32 %v4510, 4294901760
  %4512 = vmatpush.msra.mxu0 %v4511
  %v4513 = vand.u32 %v3405, 4294901760
  %v4514 = vsub.f32 %v3405, %v4513
  %v4515 = vand.u32 %v4514, 4294901760
  %4516 = vmatpush.msra.mxu0 %v4515
  %v4517 = vand.u32 %v3404, 4294901760
  %v4518 = vsub.f32 %v3404, %v4517
  %v4519 = vand.u32 %v4518, 4294901760
  %4520 = vmatpush.msra.mxu0 %v4519
  %v4521 = vand.u32 %v4364, 4294901760
  %4522 = vmatmul.f32.gmra.mxu0 %v4521
  %v4523 = vpop.f32.mrf.mxu0
  %v4524 = vadd.f32 %v4491, %v4523
  %4525 = vdwg.mxu0
  %4526 = vmatpush.msra.mxu0 0.0
  %4527 = vmatpush.msra.mxu0 0.0
  %4528 = vmatpush.msra.mxu0 0.0
  %4529 = vmatpush.msra.mxu0 0.0
  %4530 = vmatpush.msra.mxu0 0.0
  %4531 = vmatpush.msra.mxu0 0.0
  %4532 = vmatpush.msra.mxu0 0.0
  %4533 = vmatpush.msra.mxu0 0.0
  %4534 = vmatpush.msra.mxu0 0.0
  %4535 = vmatpush.msra.mxu0 0.0
  %4536 = vmatpush.msra.mxu0 0.0
  %4537 = vmatpush.msra.mxu0 0.0
  %v4538 = vand.u32 %v3407, 4294901760
  %4539 = vmatpush.msra.mxu0 %v4538
  %v4540 = vand.u32 %v3406, 4294901760
  %4541 = vmatpush.msra.mxu0 %v4540
  %v4542 = vand.u32 %v3405, 4294901760
  %4543 = vmatpush.msra.mxu0 %v4542
  %v4544 = vand.u32 %v3404, 4294901760
  %4545 = vmatpush.msra.mxu0 %v4544
  %v4546 = vand.u32 %v4364, 4294901760
  %4547 = vmatmul.f32.gmra.mxu0 %v4546
  %v4548 = vpop.f32.mrf.mxu0
  %v4549 = vadd.f32 %v4524, %v4548
  %4550 = vdwg.mxu0
  %v4551 = vadd.f32 %v3401, %v4549
  %v4552 = vtanh.pop %v4551
  %4553 = vst.msk [vmem:[#allocation2 + $0x28] sm:$0xff] %vm1175, %v4552
  %v4555 = vsel %vm1175, %v4552, 0
  %4557 = vmatpush.msra.mxu0 0.0
  %4558 = vmatpush.msra.mxu0 0.0
  %4559 = vmatpush.msra.mxu0 0.0
  %4560 = vmatpush.msra.mxu0 0.0
  %4561 = vmatpush.msra.mxu0 0.0
  %4562 = vmatpush.msra.mxu0 0.0
  %4563 = vmatpush.msra.mxu0 0.0
  %4564 = vmatpush.msra.mxu0 0.0
  %4565 = vmatpush.msra.mxu0 0.0
  %4566 = vmatpush.msra.mxu0 0.0
  %4567 = vmatpush.msra.mxu0 0.0
  %4568 = vmatpush.msra.mxu0 0.0
  %v4569 = vand.u32 %v3407, 4294901760
  %4570 = vmatpush.msra.mxu0 %v4569
  %v4571 = vand.u32 %v3406, 4294901760
  %4572 = vmatpush.msra.mxu0 %v4571
  %v4573 = vand.u32 %v3405, 4294901760
  %4574 = vmatpush.msra.mxu0 %v4573
  %v4575 = vand.u32 %v3404, 4294901760
  %4576 = vmatpush.msra.mxu0 %v4575
  %v4577 = vand.u32 %v4555, 4294901760
  %v4578 = vsub.f32 %v4555, %v4577
  %v4579 = vand.u32 %v4578, 4294901760
  %v4580 = vsub.f32 %v4578, %v4579
  %v4581 = vand.u32 %v4580, 4294901760
  %4582 = vmatmul.f32.gmra.mxu0 %v4581
  %v4583 = vpop.f32.mrf.mxu0
  %v4584 = vadd.f32 0.0, %v4583
  %4585 = vdwg.mxu0
  %4586 = vmatpush.msra.mxu0 0.0
  %4587 = vmatpush.msra.mxu0 0.0
  %4588 = vmatpush.msra.mxu0 0.0
  %4589 = vmatpush.msra.mxu0 0.0
  %4590 = vmatpush.msra.mxu0 0.0
  %4591 = vmatpush.msra.mxu0 0.0
  %4592 = vmatpush.msra.mxu0 0.0
  %4593 = vmatpush.msra.mxu0 0.0
  %4594 = vmatpush.msra.mxu0 0.0
  %4595 = vmatpush.msra.mxu0 0.0
  %4596 = vmatpush.msra.mxu0 0.0
  %4597 = vmatpush.msra.mxu0 0.0
  %v4598 = vand.u32 %v3407, 4294901760
  %v4599 = vsub.f32 %v3407, %v4598
  %v4600 = vand.u32 %v4599, 4294901760
  %v4601 = vsub.f32 %v4599, %v4600
  %v4602 = vand.u32 %v4601, 4294901760
  %4603 = vmatpush.msra.mxu0 %v4602
  %v4604 = vand.u32 %v3406, 4294901760
  %v4605 = vsub.f32 %v3406, %v4604
  %v4606 = vand.u32 %v4605, 4294901760
  %v4607 = vsub.f32 %v4605, %v4606
  %v4608 = vand.u32 %v4607, 4294901760
  %4609 = vmatpush.msra.mxu0 %v4608
  %v4610 = vand.u32 %v3405, 4294901760
  %v4611 = vsub.f32 %v3405, %v4610
  %v4612 = vand.u32 %v4611, 4294901760
  %v4613 = vsub.f32 %v4611, %v4612
  %v4614 = vand.u32 %v4613, 4294901760
  %4615 = vmatpush.msra.mxu0 %v4614
  %v4616 = vand.u32 %v3404, 4294901760
  %v4617 = vsub.f32 %v3404, %v4616
  %v4618 = vand.u32 %v4617, 4294901760
  %v4619 = vsub.f32 %v4617, %v4618
  %v4620 = vand.u32 %v4619, 4294901760
  %4621 = vmatpush.msra.mxu0 %v4620
  %v4622 = vand.u32 %v4555, 4294901760
  %4623 = vmatmul.f32.gmra.mxu0 %v4622
  %v4624 = vpop.f32.mrf.mxu0
  %v4625 = vadd.f32 %v4584, %v4624
  %4626 = vdwg.mxu0
  %4627 = vmatpush.msra.mxu0 0.0
  %4628 = vmatpush.msra.mxu0 0.0
  %4629 = vmatpush.msra.mxu0 0.0
  %4630 = vmatpush.msra.mxu0 0.0
  %4631 = vmatpush.msra.mxu0 0.0
  %4632 = vmatpush.msra.mxu0 0.0
  %4633 = vmatpush.msra.mxu0 0.0
  %4634 = vmatpush.msra.mxu0 0.0
  %4635 = vmatpush.msra.mxu0 0.0
  %4636 = vmatpush.msra.mxu0 0.0
  %4637 = vmatpush.msra.mxu0 0.0
  %4638 = vmatpush.msra.mxu0 0.0
  %v4639 = vand.u32 %v3407, 4294901760
  %v4640 = vsub.f32 %v3407, %v4639
  %4641 = vmatpush.msra.mxu0 %v4640
  %v4642 = vand.u32 %v3406, 4294901760
  %v4643 = vsub.f32 %v3406, %v4642
  %4644 = vmatpush.msra.mxu0 %v4643
  %v4645 = vand.u32 %v3405, 4294901760
  %v4646 = vsub.f32 %v3405, %v4645
  %4647 = vmatpush.msra.mxu0 %v4646
  %v4648 = vand.u32 %v3404, 4294901760
  %v4649 = vsub.f32 %v3404, %v4648
  %4650 = vmatpush.msra.mxu0 %v4649
  %v4651 = vand.u32 %v4555, 4294901760
  %v4652 = vsub.f32 %v4555, %v4651
  %4653 = vmatmul.f32.gmra.mxu0 %v4652
  %v4654 = vpop.f32.mrf.mxu0
  %v4655 = vadd.f32 %v4625, %v4654
  %4656 = vdwg.mxu0
  %4657 = vmatpush.msra.mxu0 0.0
  %4658 = vmatpush.msra.mxu0 0.0
  %4659 = vmatpush.msra.mxu0 0.0
  %4660 = vmatpush.msra.mxu0 0.0
  %4661 = vmatpush.msra.mxu0 0.0
  %4662 = vmatpush.msra.mxu0 0.0
  %4663 = vmatpush.msra.mxu0 0.0
  %4664 = vmatpush.msra.mxu0 0.0
  %4665 = vmatpush.msra.mxu0 0.0
  %4666 = vmatpush.msra.mxu0 0.0
  %4667 = vmatpush.msra.mxu0 0.0
  %4668 = vmatpush.msra.mxu0 0.0
  %v4669 = vand.u32 %v3407, 4294901760
  %4670 = vmatpush.msra.mxu0 %v4669
  %v4671 = vand.u32 %v3406, 4294901760
  %4672 = vmatpush.msra.mxu0 %v4671
  %v4673 = vand.u32 %v3405, 4294901760
  %4674 = vmatpush.msra.mxu0 %v4673
  %v4675 = vand.u32 %v3404, 4294901760
  %4676 = vmatpush.msra.mxu0 %v4675
  %v4677 = vand.u32 %v4555, 4294901760
  %v4678 = vsub.f32 %v4555, %v4677
  %v4679 = vand.u32 %v4678, 4294901760
  %4680 = vmatmul.f32.gmra.mxu0 %v4679
  %v4681 = vpop.f32.mrf.mxu0
  %v4682 = vadd.f32 %v4655, %v4681
  %4683 = vdwg.mxu0
  %4684 = vmatpush.msra.mxu0 0.0
  %4685 = vmatpush.msra.mxu0 0.0
  %4686 = vmatpush.msra.mxu0 0.0
  %4687 = vmatpush.msra.mxu0 0.0
  %4688 = vmatpush.msra.mxu0 0.0
  %4689 = vmatpush.msra.mxu0 0.0
  %4690 = vmatpush.msra.mxu0 0.0
  %4691 = vmatpush.msra.mxu0 0.0
  %4692 = vmatpush.msra.mxu0 0.0
  %4693 = vmatpush.msra.mxu0 0.0
  %4694 = vmatpush.msra.mxu0 0.0
  %4695 = vmatpush.msra.mxu0 0.0
  %v4696 = vand.u32 %v3407, 4294901760
  %v4697 = vsub.f32 %v3407, %v4696
  %v4698 = vand.u32 %v4697, 4294901760
  %4699 = vmatpush.msra.mxu0 %v4698
  %v4700 = vand.u32 %v3406, 4294901760
  %v4701 = vsub.f32 %v3406, %v4700
  %v4702 = vand.u32 %v4701, 4294901760
  %4703 = vmatpush.msra.mxu0 %v4702
  %v4704 = vand.u32 %v3405, 4294901760
  %v4705 = vsub.f32 %v3405, %v4704
  %v4706 = vand.u32 %v4705, 4294901760
  %4707 = vmatpush.msra.mxu0 %v4706
  %v4708 = vand.u32 %v3404, 4294901760
  %v4709 = vsub.f32 %v3404, %v4708
  %v4710 = vand.u32 %v4709, 4294901760
  %4711 = vmatpush.msra.mxu0 %v4710
  %v4712 = vand.u32 %v4555, 4294901760
  %4713 = vmatmul.f32.gmra.mxu0 %v4712
  %v4714 = vpop.f32.mrf.mxu0
  %v4715 = vadd.f32 %v4682, %v4714
  %4716 = vdwg.mxu0
  %4717 = vmatpush.msra.mxu0 0.0
  %4718 = vmatpush.msra.mxu0 0.0
  %4719 = vmatpush.msra.mxu0 0.0
  %4720 = vmatpush.msra.mxu0 0.0
  %4721 = vmatpush.msra.mxu0 0.0
  %4722 = vmatpush.msra.mxu0 0.0
  %4723 = vmatpush.msra.mxu0 0.0
  %4724 = vmatpush.msra.mxu0 0.0
  %4725 = vmatpush.msra.mxu0 0.0
  %4726 = vmatpush.msra.mxu0 0.0
  %4727 = vmatpush.msra.mxu0 0.0
  %4728 = vmatpush.msra.mxu0 0.0
  %v4729 = vand.u32 %v3407, 4294901760
  %4730 = vmatpush.msra.mxu0 %v4729
  %v4731 = vand.u32 %v3406, 4294901760
  %4732 = vmatpush.msra.mxu0 %v4731
  %v4733 = vand.u32 %v3405, 4294901760
  %4734 = vmatpush.msra.mxu0 %v4733
  %v4735 = vand.u32 %v3404, 4294901760
  %4736 = vmatpush.msra.mxu0 %v4735
  %v4737 = vand.u32 %v4555, 4294901760
  %4738 = vmatmul.f32.gmra.mxu0 %v4737
  %v4739 = vpop.f32.mrf.mxu0
  %v4740 = vadd.f32 %v4715, %v4739
  %4741 = vdwg.mxu0
  %v4742 = vadd.f32 %v3402, %v4740
  %v4743 = vtanh.pop %v4742
  %4744 = vst.msk [vmem:[#allocation2 + $0x30] sm:$0xff] %vm1175, %v4743
  %v4746 = vsel %vm1175, %v4743, 0
  %4748 = vmatpush.msra.mxu0 0.0
  %4749 = vmatpush.msra.mxu0 0.0
  %4750 = vmatpush.msra.mxu0 0.0
  %4751 = vmatpush.msra.mxu0 0.0
  %4752 = vmatpush.msra.mxu0 0.0
  %4753 = vmatpush.msra.mxu0 0.0
  %4754 = vmatpush.msra.mxu0 0.0
  %4755 = vmatpush.msra.mxu0 0.0
  %4756 = vmatpush.msra.mxu0 0.0
  %4757 = vmatpush.msra.mxu0 0.0
  %4758 = vmatpush.msra.mxu0 0.0
  %4759 = vmatpush.msra.mxu0 0.0
  %v4760 = vand.u32 %v3407, 4294901760
  %4761 = vmatpush.msra.mxu0 %v4760
  %v4762 = vand.u32 %v3406, 4294901760
  %4763 = vmatpush.msra.mxu0 %v4762
  %v4764 = vand.u32 %v3405, 4294901760
  %4765 = vmatpush.msra.mxu0 %v4764
  %v4766 = vand.u32 %v3404, 4294901760
  %4767 = vmatpush.msra.mxu0 %v4766
  %v4768 = vand.u32 %v4746, 4294901760
  %v4769 = vsub.f32 %v4746, %v4768
  %v4770 = vand.u32 %v4769, 4294901760
  %v4771 = vsub.f32 %v4769, %v4770
  %v4772 = vand.u32 %v4771, 4294901760
  %4773 = vmatmul.f32.gmra.mxu0 %v4772
  %v4774 = vpop.f32.mrf.mxu0
  %v4775 = vadd.f32 0.0, %v4774
  %4776 = vdwg.mxu0
  %4777 = vmatpush.msra.mxu0 0.0
  %4778 = vmatpush.msra.mxu0 0.0
  %4779 = vmatpush.msra.mxu0 0.0
  %4780 = vmatpush.msra.mxu0 0.0
  %4781 = vmatpush.msra.mxu0 0.0
  %4782 = vmatpush.msra.mxu0 0.0
  %4783 = vmatpush.msra.mxu0 0.0
  %4784 = vmatpush.msra.mxu0 0.0
  %4785 = vmatpush.msra.mxu0 0.0
  %4786 = vmatpush.msra.mxu0 0.0
  %4787 = vmatpush.msra.mxu0 0.0
  %4788 = vmatpush.msra.mxu0 0.0
  %v4789 = vand.u32 %v3407, 4294901760
  %v4790 = vsub.f32 %v3407, %v4789
  %v4791 = vand.u32 %v4790, 4294901760
  %v4792 = vsub.f32 %v4790, %v4791
  %v4793 = vand.u32 %v4792, 4294901760
  %4794 = vmatpush.msra.mxu0 %v4793
  %v4795 = vand.u32 %v3406, 4294901760
  %v4796 = vsub.f32 %v3406, %v4795
  %v4797 = vand.u32 %v4796, 4294901760
  %v4798 = vsub.f32 %v4796, %v4797
  %v4799 = vand.u32 %v4798, 4294901760
  %4800 = vmatpush.msra.mxu0 %v4799
  %v4801 = vand.u32 %v3405, 4294901760
  %v4802 = vsub.f32 %v3405, %v4801
  %v4803 = vand.u32 %v4802, 4294901760
  %v4804 = vsub.f32 %v4802, %v4803
  %v4805 = vand.u32 %v4804, 4294901760
  %4806 = vmatpush.msra.mxu0 %v4805
  %v4807 = vand.u32 %v3404, 4294901760
  %v4808 = vsub.f32 %v3404, %v4807
  %v4809 = vand.u32 %v4808, 4294901760
  %v4810 = vsub.f32 %v4808, %v4809
  %v4811 = vand.u32 %v4810, 4294901760
  %4812 = vmatpush.msra.mxu0 %v4811
  %v4813 = vand.u32 %v4746, 4294901760
  %4814 = vmatmul.f32.gmra.mxu0 %v4813
  %v4815 = vpop.f32.mrf.mxu0
  %v4816 = vadd.f32 %v4775, %v4815
  %4817 = vdwg.mxu0
  %4818 = vmatpush.msra.mxu0 0.0
  %4819 = vmatpush.msra.mxu0 0.0
  %4820 = vmatpush.msra.mxu0 0.0
  %4821 = vmatpush.msra.mxu0 0.0
  %4822 = vmatpush.msra.mxu0 0.0
  %4823 = vmatpush.msra.mxu0 0.0
  %4824 = vmatpush.msra.mxu0 0.0
  %4825 = vmatpush.msra.mxu0 0.0
  %4826 = vmatpush.msra.mxu0 0.0
  %4827 = vmatpush.msra.mxu0 0.0
  %4828 = vmatpush.msra.mxu0 0.0
  %4829 = vmatpush.msra.mxu0 0.0
  %v4830 = vand.u32 %v3407, 4294901760
  %v4831 = vsub.f32 %v3407, %v4830
  %4832 = vmatpush.msra.mxu0 %v4831
  %v4833 = vand.u32 %v3406, 4294901760
  %v4834 = vsub.f32 %v3406, %v4833
  %4835 = vmatpush.msra.mxu0 %v4834
  %v4836 = vand.u32 %v3405, 4294901760
  %v4837 = vsub.f32 %v3405, %v4836
  %4838 = vmatpush.msra.mxu0 %v4837
  %v4839 = vand.u32 %v3404, 4294901760
  %v4840 = vsub.f32 %v3404, %v4839
  %4841 = vmatpush.msra.mxu0 %v4840
  %v4842 = vand.u32 %v4746, 4294901760
  %v4843 = vsub.f32 %v4746, %v4842
  %4844 = vmatmul.f32.gmra.mxu0 %v4843
  %v4845 = vpop.f32.mrf.mxu0
  %v4846 = vadd.f32 %v4816, %v4845
  %4847 = vdwg.mxu0
  %4848 = vmatpush.msra.mxu0 0.0
  %4849 = vmatpush.msra.mxu0 0.0
  %4850 = vmatpush.msra.mxu0 0.0
  %4851 = vmatpush.msra.mxu0 0.0
  %4852 = vmatpush.msra.mxu0 0.0
  %4853 = vmatpush.msra.mxu0 0.0
  %4854 = vmatpush.msra.mxu0 0.0
  %4855 = vmatpush.msra.mxu0 0.0
  %4856 = vmatpush.msra.mxu0 0.0
  %4857 = vmatpush.msra.mxu0 0.0
  %4858 = vmatpush.msra.mxu0 0.0
  %4859 = vmatpush.msra.mxu0 0.0
  %v4860 = vand.u32 %v3407, 4294901760
  %4861 = vmatpush.msra.mxu0 %v4860
  %v4862 = vand.u32 %v3406, 4294901760
  %4863 = vmatpush.msra.mxu0 %v4862
  %v4864 = vand.u32 %v3405, 4294901760
  %4865 = vmatpush.msra.mxu0 %v4864
  %v4866 = vand.u32 %v3404, 4294901760
  %4867 = vmatpush.msra.mxu0 %v4866
  %v4868 = vand.u32 %v4746, 4294901760
  %v4869 = vsub.f32 %v4746, %v4868
  %v4870 = vand.u32 %v4869, 4294901760
  %4871 = vmatmul.f32.gmra.mxu0 %v4870
  %v4872 = vpop.f32.mrf.mxu0
  %v4873 = vadd.f32 %v4846, %v4872
  %4874 = vdwg.mxu0
  %4875 = vmatpush.msra.mxu0 0.0
  %4876 = vmatpush.msra.mxu0 0.0
  %4877 = vmatpush.msra.mxu0 0.0
  %4878 = vmatpush.msra.mxu0 0.0
  %4879 = vmatpush.msra.mxu0 0.0
  %4880 = vmatpush.msra.mxu0 0.0
  %4881 = vmatpush.msra.mxu0 0.0
  %4882 = vmatpush.msra.mxu0 0.0
  %4883 = vmatpush.msra.mxu0 0.0
  %4884 = vmatpush.msra.mxu0 0.0
  %4885 = vmatpush.msra.mxu0 0.0
  %4886 = vmatpush.msra.mxu0 0.0
  %v4887 = vand.u32 %v3407, 4294901760
  %v4888 = vsub.f32 %v3407, %v4887
  %v4889 = vand.u32 %v4888, 4294901760
  %4890 = vmatpush.msra.mxu0 %v4889
  %v4891 = vand.u32 %v3406, 4294901760
  %v4892 = vsub.f32 %v3406, %v4891
  %v4893 = vand.u32 %v4892, 4294901760
  %4894 = vmatpush.msra.mxu0 %v4893
  %v4895 = vand.u32 %v3405, 4294901760
  %v4896 = vsub.f32 %v3405, %v4895
  %v4897 = vand.u32 %v4896, 4294901760
  %4898 = vmatpush.msra.mxu0 %v4897
  %v4899 = vand.u32 %v3404, 4294901760
  %v4900 = vsub.f32 %v3404, %v4899
  %v4901 = vand.u32 %v4900, 4294901760
  %4902 = vmatpush.msra.mxu0 %v4901
  %v4903 = vand.u32 %v4746, 4294901760
  %4904 = vmatmul.f32.gmra.mxu0 %v4903
  %v4905 = vpop.f32.mrf.mxu0
  %v4906 = vadd.f32 %v4873, %v4905
  %4907 = vdwg.mxu0
  %4908 = vmatpush.msra.mxu0 0.0
  %4909 = vmatpush.msra.mxu0 0.0
  %4910 = vmatpush.msra.mxu0 0.0
  %4911 = vmatpush.msra.mxu0 0.0
  %4912 = vmatpush.msra.mxu0 0.0
  %4913 = vmatpush.msra.mxu0 0.0
  %4914 = vmatpush.msra.mxu0 0.0
  %4915 = vmatpush.msra.mxu0 0.0
  %4916 = vmatpush.msra.mxu0 0.0
  %4917 = vmatpush.msra.mxu0 0.0
  %4918 = vmatpush.msra.mxu0 0.0
  %4919 = vmatpush.msra.mxu0 0.0
  %v4920 = vand.u32 %v3407, 4294901760
  %4921 = vmatpush.msra.mxu0 %v4920
  %v4922 = vand.u32 %v3406, 4294901760
  %4923 = vmatpush.msra.mxu0 %v4922
  %v4924 = vand.u32 %v3405, 4294901760
  %4925 = vmatpush.msra.mxu0 %v4924
  %v4926 = vand.u32 %v3404, 4294901760
  %4927 = vmatpush.msra.mxu0 %v4926
  %v4928 = vand.u32 %v4746, 4294901760
  %4929 = vmatmul.f32.gmra.mxu0 %v4928
  %v4930 = vpop.f32.mrf.mxu0
  %v4931 = vadd.f32 %v4906, %v4930
  %4932 = vdwg.mxu0
  %v4933 = vadd.f32 %v3403, %v4931
  %v4934 = vtanh.pop %v4933
  %4935 = vst.msk [vmem:[#allocation2 + $0x38] sm:$0xff] %vm1175, %v4934
  %v4936 = vld [vmem:[#allocation2] sm:$0xff]
  %v4937 = vld [vmem:[#allocation2 + $0x8] sm:$0xff]
  %v4938 = vld [vmem:[#allocation2 + $0x10] sm:$0xff]
  %v4939 = vld [vmem:[#allocation2 + $0x18] sm:$0xff]
  %v4940 = vld [vmem:[#allocation2 + $0x20] sm:$0xff]
  %v4941 = vld [vmem:[#allocation2 + $0x28] sm:$0xff]
  %v4942 = vld [vmem:[#allocation2 + $0x30] sm:$0xff]
  %v4943 = vld [vmem:[#allocation2 + $0x38] sm:$0xff]
  %v4944 = vld [vmem:[%s16] sm:$0xff]
  %v4945 = vld [vmem:[%s16 + $0x8] sm:$0xff]
  %v4946 = vld [vmem:[%s16 + $0x10] sm:$0xff]
  %v4947 = vld [vmem:[%s16 + $0x18] sm:$0xff]
  %v4948 = vld [vmem:[%s17] sm:$0x1]
  %v4950 = vperm.slane %v4948, 0
  %v4953 = vsel %vm1175, %v4936, 0
  %v4956 = vsel %vm1175, %v4937, 0
  %v4959 = vsel %vm1175, %v4938, 0
  %v4962 = vsel %vm1175, %v4939, 0
  %v4965 = vsel %vm1175, %v4940, 0
  %v4968 = vsel %vm1175, %v4941, 0
  %v4971 = vsel %vm1175, %v4942, 0
  %v4974 = vsel %vm1175, %v4943, 0
  %4976 = vmatpush.msra.mxu0 0.0
  %4977 = vmatpush.msra.mxu0 0.0
  %4978 = vmatpush.msra.mxu0 0.0
  %4979 = vmatpush.msra.mxu0 0.0
  %4980 = vmatpush.msra.mxu0 0.0
  %4981 = vmatpush.msra.mxu0 0.0
  %4982 = vmatpush.msra.mxu0 0.0
  %4983 = vmatpush.msra.mxu0 0.0
  %4984 = vmatpush.msra.mxu0 0.0
  %4985 = vmatpush.msra.mxu0 0.0
  %4986 = vmatpush.msra.mxu0 0.0
  %4987 = vmatpush.msra.mxu0 0.0
  %v4988 = vand.u32 %v4947, 4294901760
  %4989 = vmatpush.msra.mxu0 %v4988
  %v4990 = vand.u32 %v4946, 4294901760
  %4991 = vmatpush.msra.mxu0 %v4990
  %v4992 = vand.u32 %v4945, 4294901760
  %4993 = vmatpush.msra.mxu0 %v4992
  %v4994 = vand.u32 %v4944, 4294901760
  %4995 = vmatpush.msra.mxu0 %v4994
  %v4996 = vand.u32 %v4953, 4294901760
  %v4997 = vsub.f32 %v4953, %v4996
  %v4998 = vand.u32 %v4997, 4294901760
  %v4999 = vsub.f32 %v4997, %v4998
  %v5000 = vand.u32 %v4999, 4294901760
  %5001 = vmatmul.f32.gmra.mxu0 %v5000
  %v5002 = vpop.f32.mrf.mxu0
  %v5003 = vadd.f32 %v4950, %v5002
  %v5004 = vand.u32 %v4956, 4294901760
  %v5005 = vsub.f32 %v4956, %v5004
  %v5006 = vand.u32 %v5005, 4294901760
  %v5007 = vsub.f32 %v5005, %v5006
  %v5008 = vand.u32 %v5007, 4294901760
  %5009 = vmatmul.f32.gmra.mxu0 %v5008
  %v5010 = vpop.f32.mrf.mxu0
  %v5011 = vadd.f32 %v4950, %v5010
  %v5012 = vand.u32 %v4959, 4294901760
  %v5013 = vsub.f32 %v4959, %v5012
  %v5014 = vand.u32 %v5013, 4294901760
  %v5015 = vsub.f32 %v5013, %v5014
  %v5016 = vand.u32 %v5015, 4294901760
  %5017 = vmatmul.f32.gmra.mxu0 %v5016
  %v5018 = vpop.f32.mrf.mxu0
  %v5019 = vadd.f32 %v4950, %v5018
  %v5020 = vand.u32 %v4962, 4294901760
  %v5021 = vsub.f32 %v4962, %v5020
  %v5022 = vand.u32 %v5021, 4294901760
  %v5023 = vsub.f32 %v5021, %v5022
  %v5024 = vand.u32 %v5023, 4294901760
  %5025 = vmatmul.f32.gmra.mxu0 %v5024
  %v5026 = vpop.f32.mrf.mxu0
  %v5027 = vadd.f32 %v4950, %v5026
  %v5028 = vand.u32 %v4965, 4294901760
  %v5029 = vsub.f32 %v4965, %v5028
  %v5030 = vand.u32 %v5029, 4294901760
  %v5031 = vsub.f32 %v5029, %v5030
  %v5032 = vand.u32 %v5031, 4294901760
  %5033 = vmatmul.f32.gmra.mxu0 %v5032
  %v5034 = vpop.f32.mrf.mxu0
  %v5035 = vadd.f32 %v4950, %v5034
  %v5036 = vand.u32 %v4968, 4294901760
  %v5037 = vsub.f32 %v4968, %v5036
  %v5038 = vand.u32 %v5037, 4294901760
  %v5039 = vsub.f32 %v5037, %v5038
  %v5040 = vand.u32 %v5039, 4294901760
  %5041 = vmatmul.f32.gmra.mxu0 %v5040
  %v5042 = vpop.f32.mrf.mxu0
  %v5043 = vadd.f32 %v4950, %v5042
  %v5044 = vand.u32 %v4971, 4294901760
  %v5045 = vsub.f32 %v4971, %v5044
  %v5046 = vand.u32 %v5045, 4294901760
  %v5047 = vsub.f32 %v5045, %v5046
  %v5048 = vand.u32 %v5047, 4294901760
  %5049 = vmatmul.f32.gmra.mxu0 %v5048
  %v5050 = vpop.f32.mrf.mxu0
  %v5051 = vadd.f32 %v4950, %v5050
  %v5052 = vand.u32 %v4974, 4294901760
  %v5053 = vsub.f32 %v4974, %v5052
  %v5054 = vand.u32 %v5053, 4294901760
  %v5055 = vsub.f32 %v5053, %v5054
  %v5056 = vand.u32 %v5055, 4294901760
  %5057 = vmatmul.f32.gmra.mxu0 %v5056
  %v5058 = vpop.f32.mrf.mxu0
  %v5059 = vadd.f32 %v4950, %v5058
  %5060 = vdwg.mxu0
  %5061 = vmatpush.msra.mxu0 0.0
  %5062 = vmatpush.msra.mxu0 0.0
  %5063 = vmatpush.msra.mxu0 0.0
  %5064 = vmatpush.msra.mxu0 0.0
  %5065 = vmatpush.msra.mxu0 0.0
  %5066 = vmatpush.msra.mxu0 0.0
  %5067 = vmatpush.msra.mxu0 0.0
  %5068 = vmatpush.msra.mxu0 0.0
  %5069 = vmatpush.msra.mxu0 0.0
  %5070 = vmatpush.msra.mxu0 0.0
  %5071 = vmatpush.msra.mxu0 0.0
  %5072 = vmatpush.msra.mxu0 0.0
  %v5073 = vand.u32 %v4947, 4294901760
  %v5074 = vsub.f32 %v4947, %v5073
  %v5075 = vand.u32 %v5074, 4294901760
  %v5076 = vsub.f32 %v5074, %v5075
  %v5077 = vand.u32 %v5076, 4294901760
  %5078 = vmatpush.msra.mxu0 %v5077
  %v5079 = vand.u32 %v4946, 4294901760
  %v5080 = vsub.f32 %v4946, %v5079
  %v5081 = vand.u32 %v5080, 4294901760
  %v5082 = vsub.f32 %v5080, %v5081
  %v5083 = vand.u32 %v5082, 4294901760
  %5084 = vmatpush.msra.mxu0 %v5083
  %v5085 = vand.u32 %v4945, 4294901760
  %v5086 = vsub.f32 %v4945, %v5085
  %v5087 = vand.u32 %v5086, 4294901760
  %v5088 = vsub.f32 %v5086, %v5087
  %v5089 = vand.u32 %v5088, 4294901760
  %5090 = vmatpush.msra.mxu0 %v5089
  %v5091 = vand.u32 %v4944, 4294901760
  %v5092 = vsub.f32 %v4944, %v5091
  %v5093 = vand.u32 %v5092, 4294901760
  %v5094 = vsub.f32 %v5092, %v5093
  %v5095 = vand.u32 %v5094, 4294901760
  %5096 = vmatpush.msra.mxu0 %v5095
  %v5097 = vand.u32 %v4953, 4294901760
  %5098 = vmatmul.f32.gmra.mxu0 %v5097
  %v5099 = vpop.f32.mrf.mxu0
  %v5100 = vadd.f32 %v5003, %v5099
  %v5101 = vand.u32 %v4956, 4294901760
  %5102 = vmatmul.f32.gmra.mxu0 %v5101
  %v5103 = vpop.f32.mrf.mxu0
  %v5104 = vadd.f32 %v5011, %v5103
  %v5105 = vand.u32 %v4959, 4294901760
  %5106 = vmatmul.f32.gmra.mxu0 %v5105
  %v5107 = vpop.f32.mrf.mxu0
  %v5108 = vadd.f32 %v5019, %v5107
  %v5109 = vand.u32 %v4962, 4294901760
  %5110 = vmatmul.f32.gmra.mxu0 %v5109
  %v5111 = vpop.f32.mrf.mxu0
  %v5112 = vadd.f32 %v5027, %v5111
  %v5113 = vand.u32 %v4965, 4294901760
  %5114 = vmatmul.f32.gmra.mxu0 %v5113
  %v5115 = vpop.f32.mrf.mxu0
  %v5116 = vadd.f32 %v5035, %v5115
  %v5117 = vand.u32 %v4968, 4294901760
  %5118 = vmatmul.f32.gmra.mxu0 %v5117
  %v5119 = vpop.f32.mrf.mxu0
  %v5120 = vadd.f32 %v5043, %v5119
  %v5121 = vand.u32 %v4971, 4294901760
  %5122 = vmatmul.f32.gmra.mxu0 %v5121
  %v5123 = vpop.f32.mrf.mxu0
  %v5124 = vadd.f32 %v5051, %v5123
  %v5125 = vand.u32 %v4974, 4294901760
  %5126 = vmatmul.f32.gmra.mxu0 %v5125
  %v5127 = vpop.f32.mrf.mxu0
  %v5128 = vadd.f32 %v5059, %v5127
  %5129 = vdwg.mxu0
  %5130 = vmatpush.msra.mxu0 0.0
  %5131 = vmatpush.msra.mxu0 0.0
  %5132 = vmatpush.msra.mxu0 0.0
  %5133 = vmatpush.msra.mxu0 0.0
  %5134 = vmatpush.msra.mxu0 0.0
  %5135 = vmatpush.msra.mxu0 0.0
  %5136 = vmatpush.msra.mxu0 0.0
  %5137 = vmatpush.msra.mxu0 0.0
  %5138 = vmatpush.msra.mxu0 0.0
  %5139 = vmatpush.msra.mxu0 0.0
  %5140 = vmatpush.msra.mxu0 0.0
  %5141 = vmatpush.msra.mxu0 0.0
  %v5142 = vand.u32 %v4947, 4294901760
  %v5143 = vsub.f32 %v4947, %v5142
  %5144 = vmatpush.msra.mxu0 %v5143
  %v5145 = vand.u32 %v4946, 4294901760
  %v5146 = vsub.f32 %v4946, %v5145
  %5147 = vmatpush.msra.mxu0 %v5146
  %v5148 = vand.u32 %v4945, 4294901760
  %v5149 = vsub.f32 %v4945, %v5148
  %5150 = vmatpush.msra.mxu0 %v5149
  %v5151 = vand.u32 %v4944, 4294901760
  %v5152 = vsub.f32 %v4944, %v5151
  %5153 = vmatpush.msra.mxu0 %v5152
  %v5154 = vand.u32 %v4953, 4294901760
  %v5155 = vsub.f32 %v4953, %v5154
  %5156 = vmatmul.f32.gmra.mxu0 %v5155
  %v5157 = vpop.f32.mrf.mxu0
  %v5158 = vadd.f32 %v5100, %v5157
  %v5159 = vand.u32 %v4956, 4294901760
  %v5160 = vsub.f32 %v4956, %v5159
  %5161 = vmatmul.f32.gmra.mxu0 %v5160
  %v5162 = vpop.f32.mrf.mxu0
  %v5163 = vadd.f32 %v5104, %v5162
  %v5164 = vand.u32 %v4959, 4294901760
  %v5165 = vsub.f32 %v4959, %v5164
  %5166 = vmatmul.f32.gmra.mxu0 %v5165
  %v5167 = vpop.f32.mrf.mxu0
  %v5168 = vadd.f32 %v5108, %v5167
  %v5169 = vand.u32 %v4962, 4294901760
  %v5170 = vsub.f32 %v4962, %v5169
  %5171 = vmatmul.f32.gmra.mxu0 %v5170
  %v5172 = vpop.f32.mrf.mxu0
  %v5173 = vadd.f32 %v5112, %v5172
  %v5174 = vand.u32 %v4965, 4294901760
  %v5175 = vsub.f32 %v4965, %v5174
  %5176 = vmatmul.f32.gmra.mxu0 %v5175
  %v5177 = vpop.f32.mrf.mxu0
  %v5178 = vadd.f32 %v5116, %v5177
  %v5179 = vand.u32 %v4968, 4294901760
  %v5180 = vsub.f32 %v4968, %v5179
  %5181 = vmatmul.f32.gmra.mxu0 %v5180
  %v5182 = vpop.f32.mrf.mxu0
  %v5183 = vadd.f32 %v5120, %v5182
  %v5184 = vand.u32 %v4971, 4294901760
  %v5185 = vsub.f32 %v4971, %v5184
  %5186 = vmatmul.f32.gmra.mxu0 %v5185
  %v5187 = vpop.f32.mrf.mxu0
  %v5188 = vadd.f32 %v5124, %v5187
  %v5189 = vand.u32 %v4974, 4294901760
  %v5190 = vsub.f32 %v4974, %v5189
  %5191 = vmatmul.f32.gmra.mxu0 %v5190
  %v5192 = vpop.f32.mrf.mxu0
  %v5193 = vadd.f32 %v5128, %v5192
  %5194 = vdwg.mxu0
  %5195 = vmatpush.msra.mxu0 0.0
  %5196 = vmatpush.msra.mxu0 0.0
  %5197 = vmatpush.msra.mxu0 0.0
  %5198 = vmatpush.msra.mxu0 0.0
  %5199 = vmatpush.msra.mxu0 0.0
  %5200 = vmatpush.msra.mxu0 0.0
  %5201 = vmatpush.msra.mxu0 0.0
  %5202 = vmatpush.msra.mxu0 0.0
  %5203 = vmatpush.msra.mxu0 0.0
  %5204 = vmatpush.msra.mxu0 0.0
  %5205 = vmatpush.msra.mxu0 0.0
  %5206 = vmatpush.msra.mxu0 0.0
  %v5207 = vand.u32 %v4947, 4294901760
  %5208 = vmatpush.msra.mxu0 %v5207
  %v5209 = vand.u32 %v4946, 4294901760
  %5210 = vmatpush.msra.mxu0 %v5209
  %v5211 = vand.u32 %v4945, 4294901760
  %5212 = vmatpush.msra.mxu0 %v5211
  %v5213 = vand.u32 %v4944, 4294901760
  %5214 = vmatpush.msra.mxu0 %v5213
  %v5215 = vand.u32 %v4953, 4294901760
  %v5216 = vsub.f32 %v4953, %v5215
  %v5217 = vand.u32 %v5216, 4294901760
  %5218 = vmatmul.f32.gmra.mxu0 %v5217
  %v5219 = vpop.f32.mrf.mxu0
  %v5220 = vadd.f32 %v5158, %v5219
  %v5221 = vand.u32 %v4956, 4294901760
  %v5222 = vsub.f32 %v4956, %v5221
  %v5223 = vand.u32 %v5222, 4294901760
  %5224 = vmatmul.f32.gmra.mxu0 %v5223
  %v5225 = vpop.f32.mrf.mxu0
  %v5226 = vadd.f32 %v5163, %v5225
  %v5227 = vand.u32 %v4959, 4294901760
  %v5228 = vsub.f32 %v4959, %v5227
  %v5229 = vand.u32 %v5228, 4294901760
  %5230 = vmatmul.f32.gmra.mxu0 %v5229
  %v5231 = vpop.f32.mrf.mxu0
  %v5232 = vadd.f32 %v5168, %v5231
  %v5233 = vand.u32 %v4962, 4294901760
  %v5234 = vsub.f32 %v4962, %v5233
  %v5235 = vand.u32 %v5234, 4294901760
  %5236 = vmatmul.f32.gmra.mxu0 %v5235
  %v5237 = vpop.f32.mrf.mxu0
  %v5238 = vadd.f32 %v5173, %v5237
  %v5239 = vand.u32 %v4965, 4294901760
  %v5240 = vsub.f32 %v4965, %v5239
  %v5241 = vand.u32 %v5240, 4294901760
  %5242 = vmatmul.f32.gmra.mxu0 %v5241
  %v5243 = vpop.f32.mrf.mxu0
  %v5244 = vadd.f32 %v5178, %v5243
  %v5245 = vand.u32 %v4968, 4294901760
  %v5246 = vsub.f32 %v4968, %v5245
  %v5247 = vand.u32 %v5246, 4294901760
  %5248 = vmatmul.f32.gmra.mxu0 %v5247
  %v5249 = vpop.f32.mrf.mxu0
  %v5250 = vadd.f32 %v5183, %v5249
  %v5251 = vand.u32 %v4971, 4294901760
  %v5252 = vsub.f32 %v4971, %v5251
  %v5253 = vand.u32 %v5252, 4294901760
  %5254 = vmatmul.f32.gmra.mxu0 %v5253
  %v5255 = vpop.f32.mrf.mxu0
  %v5256 = vadd.f32 %v5188, %v5255
  %v5257 = vand.u32 %v4974, 4294901760
  %v5258 = vsub.f32 %v4974, %v5257
  %v5259 = vand.u32 %v5258, 4294901760
  %5260 = vmatmul.f32.gmra.mxu0 %v5259
  %v5261 = vpop.f32.mrf.mxu0
  %v5262 = vadd.f32 %v5193, %v5261
  %5263 = vdwg.mxu0
  %5264 = vmatpush.msra.mxu0 0.0
  %5265 = vmatpush.msra.mxu0 0.0
  %5266 = vmatpush.msra.mxu0 0.0
  %5267 = vmatpush.msra.mxu0 0.0
  %5268 = vmatpush.msra.mxu0 0.0
  %5269 = vmatpush.msra.mxu0 0.0
  %5270 = vmatpush.msra.mxu0 0.0
  %5271 = vmatpush.msra.mxu0 0.0
  %5272 = vmatpush.msra.mxu0 0.0
  %5273 = vmatpush.msra.mxu0 0.0
  %5274 = vmatpush.msra.mxu0 0.0
  %5275 = vmatpush.msra.mxu0 0.0
  %v5276 = vand.u32 %v4947, 4294901760
  %v5277 = vsub.f32 %v4947, %v5276
  %v5278 = vand.u32 %v5277, 4294901760
  %5279 = vmatpush.msra.mxu0 %v5278
  %v5280 = vand.u32 %v4946, 4294901760
  %v5281 = vsub.f32 %v4946, %v5280
  %v5282 = vand.u32 %v5281, 4294901760
  %5283 = vmatpush.msra.mxu0 %v5282
  %v5284 = vand.u32 %v4945, 4294901760
  %v5285 = vsub.f32 %v4945, %v5284
  %v5286 = vand.u32 %v5285, 4294901760
  %5287 = vmatpush.msra.mxu0 %v5286
  %v5288 = vand.u32 %v4944, 4294901760
  %v5289 = vsub.f32 %v4944, %v5288
  %v5290 = vand.u32 %v5289, 4294901760
  %5291 = vmatpush.msra.mxu0 %v5290
  %v5292 = vand.u32 %v4953, 4294901760
  %5293 = vmatmul.f32.gmra.mxu0 %v5292
  %v5294 = vpop.f32.mrf.mxu0
  %v5295 = vadd.f32 %v5220, %v5294
  %v5296 = vand.u32 %v4956, 4294901760
  %5297 = vmatmul.f32.gmra.mxu0 %v5296
  %v5298 = vpop.f32.mrf.mxu0
  %v5299 = vadd.f32 %v5226, %v5298
  %v5300 = vand.u32 %v4959, 4294901760
  %5301 = vmatmul.f32.gmra.mxu0 %v5300
  %v5302 = vpop.f32.mrf.mxu0
  %v5303 = vadd.f32 %v5232, %v5302
  %v5304 = vand.u32 %v4962, 4294901760
  %5305 = vmatmul.f32.gmra.mxu0 %v5304
  %v5306 = vpop.f32.mrf.mxu0
  %v5307 = vadd.f32 %v5238, %v5306
  %v5308 = vand.u32 %v4965, 4294901760
  %5309 = vmatmul.f32.gmra.mxu0 %v5308
  %v5310 = vpop.f32.mrf.mxu0
  %v5311 = vadd.f32 %v5244, %v5310
  %v5312 = vand.u32 %v4968, 4294901760
  %5313 = vmatmul.f32.gmra.mxu0 %v5312
  %v5314 = vpop.f32.mrf.mxu0
  %v5315 = vadd.f32 %v5250, %v5314
  %v5316 = vand.u32 %v4971, 4294901760
  %5317 = vmatmul.f32.gmra.mxu0 %v5316
  %v5318 = vpop.f32.mrf.mxu0
  %v5319 = vadd.f32 %v5256, %v5318
  %v5320 = vand.u32 %v4974, 4294901760
  %5321 = vmatmul.f32.gmra.mxu0 %v5320
  %v5322 = vpop.f32.mrf.mxu0
  %v5323 = vadd.f32 %v5262, %v5322
  %5324 = vdwg.mxu0
  %5325 = vmatpush.msra.mxu0 0.0
  %5326 = vmatpush.msra.mxu0 0.0
  %5327 = vmatpush.msra.mxu0 0.0
  %5328 = vmatpush.msra.mxu0 0.0
  %5329 = vmatpush.msra.mxu0 0.0
  %5330 = vmatpush.msra.mxu0 0.0
  %5331 = vmatpush.msra.mxu0 0.0
  %5332 = vmatpush.msra.mxu0 0.0
  %5333 = vmatpush.msra.mxu0 0.0
  %5334 = vmatpush.msra.mxu0 0.0
  %5335 = vmatpush.msra.mxu0 0.0
  %5336 = vmatpush.msra.mxu0 0.0
  %v5337 = vand.u32 %v4947, 4294901760
  %5338 = vmatpush.msra.mxu0 %v5337
  %v5339 = vand.u32 %v4946, 4294901760
  %5340 = vmatpush.msra.mxu0 %v5339
  %v5341 = vand.u32 %v4945, 4294901760
  %5342 = vmatpush.msra.mxu0 %v5341
  %v5343 = vand.u32 %v4944, 4294901760
  %5344 = vmatpush.msra.mxu0 %v5343
  %v5345 = vand.u32 %v4953, 4294901760
  %5346 = vmatmul.f32.gmra.mxu0 %v5345
  %v5347 = vpop.f32.mrf.mxu0
  %v5348 = vadd.f32 %v5295, %v5347
  %v5349 = vand.u32 %v4956, 4294901760
  %5350 = vmatmul.f32.gmra.mxu0 %v5349
  %v5351 = vpop.f32.mrf.mxu0
  %v5352 = vadd.f32 %v5299, %v5351
  %v5353 = vand.u32 %v4959, 4294901760
  %5354 = vmatmul.f32.gmra.mxu0 %v5353
  %v5355 = vpop.f32.mrf.mxu0
  %v5356 = vadd.f32 %v5303, %v5355
  %v5357 = vand.u32 %v4962, 4294901760
  %5358 = vmatmul.f32.gmra.mxu0 %v5357
  %v5359 = vpop.f32.mrf.mxu0
  %v5360 = vadd.f32 %v5307, %v5359
  %v5361 = vand.u32 %v4965, 4294901760
  %5362 = vmatmul.f32.gmra.mxu0 %v5361
  %v5363 = vpop.f32.mrf.mxu0
  %v5364 = vadd.f32 %v5311, %v5363
  %v5365 = vand.u32 %v4968, 4294901760
  %5366 = vmatmul.f32.gmra.mxu0 %v5365
  %v5367 = vpop.f32.mrf.mxu0
  %v5368 = vadd.f32 %v5315, %v5367
  %v5369 = vand.u32 %v4971, 4294901760
  %5370 = vmatmul.f32.gmra.mxu0 %v5369
  %v5371 = vpop.f32.mrf.mxu0
  %v5372 = vadd.f32 %v5319, %v5371
  %v5373 = vand.u32 %v4974, 4294901760
  %5374 = vmatmul.f32.gmra.mxu0 %v5373
  %v5375 = vpop.f32.mrf.mxu0
  %v5376 = vadd.f32 %v5323, %v5375
  %5377 = vdwg.mxu0
  %vm5378 = vcmask 523264
  %5379 = vst.msk [vmem:[%s18] sm:$0xff] %vm5378, %v5348
  %5380 = vst.msk [vmem:[%s18 + $0x8] sm:$0xff] %vm5378, %v5352
  %5381 = vst.msk [vmem:[%s18 + $0x10] sm:$0xff] %vm5378, %v5356
  %5382 = vst.msk [vmem:[%s18 + $0x18] sm:$0xff] %vm5378, %v5360
  %5383 = vst.msk [vmem:[%s18 + $0x20] sm:$0xff] %vm5378, %v5364
  %5384 = vst.msk [vmem:[%s18 + $0x28] sm:$0xff] %vm5378, %v5368
  %5385 = vst.msk [vmem:[%s18 + $0x30] sm:$0xff] %vm5378, %v5372
  %5386 = vst.msk [vmem:[%s18 + $0x38] sm:$0xff] %vm5378, %v5376
  // Predicated region
  $region74: #{lemon_forward.1} parent=0 // pred_check
    _
  $region75: #{lemon_forward.1} parent=0 // pred_check_branch
    %5388 = sbr.rel (0) target = $region77
  $region76: #{lemon_forward.1} parent=0 // pred_region
    _
  $region77: #{lemon_forward.1} parent=0 // pred_fallthru
    _
  // Predicated region
  $region78: #{lemon_forward.1} parent=0 // pred_check
    _
  $region79: #{lemon_forward.1} parent=0 // pred_check_branch
    %5390 = sbr.rel (0) target = $region81
  $region80: #{lemon_forward.1} parent=0 // pred_region
    _
  $region81: #{lemon_forward.1} parent=0 // pred_fallthru
    _

</llo_original>
